<compile_context>
chip_gen: v6e
topology: v6e:2x2x1
jax: 0.10.0
libtpu: 0.0.40
codegen_flags: <defaults>
</compile_context>

<pallas_src>
import jax
import jax.numpy as jnp
from jax.experimental import pallas as pl
from jax.experimental.pallas import tpu as pltpu

_BN_EPS = 1e-5


# ---------------------------------------------------------------------------
# Fused Conv2d(3x3, stride=2, pad=1) + folded BatchNorm + ReLU
# ---------------------------------------------------------------------------
def _conv3x3_s2_bn_relu_kernel(x_ref, w_ref, b_ref, o_ref):
    """One image per grid step.

    x_ref: (1, 4, Ho+1, Wo+1, Ci)  padded input split into its 4 stride-2
           parity planes: plane[2*p + q][i, j, c] = x_padded[2*i + p, 2*j + q, c]
    w_ref: (3, 3, Ci, Co)          conv weights (BN scale already folded in)
    b_ref: (1, Co)                 folded bias (conv bias + BN shift)
    o_ref: (1, Ho, Wo, Co)
    """
    Ho, Wo, Co = o_ref.shape[1], o_ref.shape[2], o_ref.shape[3]
    Ci = x_ref.shape[-1]
    bias = b_ref[...].astype(jnp.float32)                       # (1, Co), hoisted

    @pl.loop(0, Ho)
    def _row(ho):
        acc = jnp.zeros((Wo, Co), jnp.float32)
        # 9 static taps; each is a contiguous slice of one parity plane.
        for kh in range(3):
            p, dh = kh & 1, kh >> 1
            for kw in range(3):
                q, dw = kw & 1, kw >> 1
                x_tap = x_ref[0, p * 2 + q, pl.ds(ho + dh, 1), pl.ds(dw, Wo), :]
                x_tap = x_tap.reshape(Wo, Ci)                   # (Wo, Ci)
                acc = acc + jnp.dot(x_tap, w_ref[kh, kw],
                                    preferred_element_type=jnp.float32)
        y = jnp.maximum(acc + bias, 0.0)                        # bias+BN+ReLU (folded)
        o_ref[0, pl.ds(ho, 1), :, :] = y.reshape(1, Wo, Co).astype(o_ref.dtype)


def _conv_bn_relu_layer(x_nhwc, w_hwio, bias_folded):
    """x_nhwc: (N, Hi, Wi, Ci) -> (N, Ho, Wo, Co), Ho = ceil(Hi/2)."""
    N, Hi, Wi, Ci = x_nhwc.shape
    Co = w_hwio.shape[-1]
    Ho, Wo = -(-Hi // 2), -(-Wi // 2)

    # Zero-pad to (2*Ho+2, 2*Wo+2): one row/col of 'same' padding on top/left,
    # 1 or 2 on bottom/right depending on the parity of Hi/Wi.
    xp = jnp.pad(x_nhwc,
                 ((0, 0), (1, 2 * Ho + 1 - Hi), (1, 2 * Wo + 1 - Wi), (0, 0)))
    # Space-to-depth into the 4 stride-2 parity planes: (N, 4, Ho+1, Wo+1, Ci).
    xs = xp.reshape(N, Ho + 1, 2, Wo + 1, 2, Ci)
    xs = xs.transpose(0, 2, 4, 1, 3, 5).reshape(N, 4, Ho + 1, Wo + 1, Ci)

    return pl.pallas_call(
        _conv3x3_s2_bn_relu_kernel,
        out_shape=jax.ShapeDtypeStruct((N, Ho, Wo, Co), x_nhwc.dtype),
        grid_spec=pltpu.PrefetchScalarGridSpec(
            num_scalar_prefetch=0,
            grid=(N,),
            in_specs=[
                pl.BlockSpec((1, 4, Ho + 1, Wo + 1, Ci),
                             lambda n: (n, 0, 0, 0, 0)),
                pl.BlockSpec((3, 3, Ci, Co), lambda n: (0, 0, 0, 0)),
                pl.BlockSpec((1, Co), lambda n: (0, 0)),
            ],
            out_specs=pl.BlockSpec((1, Ho, Wo, Co), lambda n: (n, 0, 0, 0)),
        ),
        compiler_params=pltpu.CompilerParams(
            dimension_semantics=("parallel",),
        ),
    )(xs, w_hwio, bias_folded.reshape(1, Co))


# ---------------------------------------------------------------------------
# AdaptiveAvgPool2d((2,2)) + tokenization: (N, S, S, C) -> (N, 4, C)
# ---------------------------------------------------------------------------
def _avgpool_2x2_tokens_kernel(x_ref, o_ref):
    S, C = x_ref.shape[1], x_ref.shape[3]
    hh = S // 2
    inv = 1.0 / float(hh * hh)
    for th in range(2):
        for tw in range(2):
            blk = x_ref[0, pl.ds(th * hh, hh), pl.ds(tw * hh, hh), :]
            blk = blk.astype(jnp.float32)                       # (hh, hh, C)
            s = jnp.sum(jnp.sum(blk, axis=0), axis=0, keepdims=True)  # (1, C)
            o_ref[0, pl.ds(th * 2 + tw, 1), :] = (s * inv).astype(o_ref.dtype)


def _avgpool_2x2_tokens(x_nhwc):
    N, S, S2, C = x_nhwc.shape
    assert S == S2 and S % 2 == 0, (S, S2)
    return pl.pallas_call(
        _avgpool_2x2_tokens_kernel,
        out_shape=jax.ShapeDtypeStruct((N, 4, C), x_nhwc.dtype),
        grid_spec=pltpu.PrefetchScalarGridSpec(
            num_scalar_prefetch=0,
            grid=(N,),
            in_specs=[pl.BlockSpec((1, S, S, C), lambda n: (n, 0, 0, 0))],
            out_specs=pl.BlockSpec((1, 4, C), lambda n: (n, 0, 0)),
        ),
        compiler_params=pltpu.CompilerParams(
            dimension_semantics=("parallel",),
        ),
    )(x_nhwc)


# ---------------------------------------------------------------------------
# Full forward
# ---------------------------------------------------------------------------
def _fold_bn(w_hwio, b_conv, gamma, beta, mean, var, eps=_BN_EPS):
    """Fold inference-mode BatchNorm into the conv weights / bias."""
    s = gamma * jax.lax.rsqrt(var + eps)                        # (Co,)
    return w_hwio * s, (b_conv - mean) * s + beta


@jax.jit
def simple_view_encoder(x, layer_params):
    """x: (B, K, 3, H, W); layer_params: 4 tuples of
    (w_hwio, conv_bias, bn_gamma, bn_beta, bn_mean, bn_var) -> (B, K, 4, C)."""
    B, K, Cin, H, W = x.shape
    # NCHW -> NHWC once, on the tiny 3-channel network input.
    h = x.reshape(B * K, Cin, H, W).transpose(0, 2, 3, 1)
    for (w, b, gamma, beta, mean, var) in layer_params:
        wf, bf = _fold_bn(w, b, gamma, beta, mean, var)
        h = _conv_bn_relu_layer(h, wf, bf)
    tokens = _avgpool_2x2_tokens(h)                             # (B*K, 4, C)
    C = tokens.shape[-1]
    return tokens.reshape(B, K, 4, C)


# ---------------------------------------------------------------------------
# Pure-JAX reference mirroring the PyTorch semantics (inference-mode BN)
# ---------------------------------------------------------------------------
def _reference(x, layer_params, eps=_BN_EPS):
    B, K, Cin, H, W = x.shape
    h = x.reshape(B * K, Cin, H, W).transpose(0, 2, 3, 1)
    for (w, b, gamma, beta, mean, var) in layer_params:
        h = jax.lax.conv_general_dilated(
            h, w, window_strides=(2, 2), padding=((1, 1), (1, 1)),
            dimension_numbers=("NHWC", "HWIO", "NHWC"),
            precision=jax.lax.Precision.HIGHEST)
        h = (h + b - mean) * (gamma / jnp.sqrt(var + eps)) + beta
        h = jnp.maximum(h, 0.0)
    N, S, _, C = h.shape
    hh = S // 2
    pooled = h.reshape(N, 2, hh, 2, hh, C).mean(axis=(2, 4))    # (N, 2, 2, C)
    return pooled.reshape(B, K, 4, C)


if __name__ == "__main__":
    # Small shapes consistent with the module: B=2, K=8 views, 3 input
    # channels, 64x64 spatial (instead of 124), dim=256 output channels.
    B, K, Cin, H, W = 2, 8, 3, 64, 64
    dim = 256
    chans = [Cin, 32, 64, 128, dim]

    key = jax.random.PRNGKey(0)
    keys = jax.random.split(key, 1 + 6 * 4)
    x = jax.random.normal(keys[0], (B, K, Cin, H, W), dtype=jnp.float32)

    layer_params = []
    ki = 1
    for li in range(4):
        ci, co = chans[li], chans[li + 1]
        fan_in = 9 * ci
        w = jax.random.normal(keys[ki], (3, 3, ci, co), jnp.float32) / jnp.sqrt(fan_in); ki += 1
        b = 0.1 * jax.random.normal(keys[ki], (co,), jnp.float32); ki += 1
        gamma = 1.0 + 0.1 * jax.random.normal(keys[ki], (co,), jnp.float32); ki += 1
        beta = 0.1 * jax.random.normal(keys[ki], (co,), jnp.float32); ki += 1
        mean = 0.1 * jax.random.normal(keys[ki], (co,), jnp.float32); ki += 1
        var = jax.random.uniform(keys[ki], (co,), jnp.float32, 0.5, 1.5); ki += 1
        layer_params.append((w, b, gamma, beta, mean, var))
    layer_params = tuple(layer_params)

    tokens = simple_view_encoder(x, layer_params)
    tokens = jax.block_until_ready(tokens)

    ref = _reference(x, layer_params)
    assert tokens.shape == (B, K, 4, dim), tokens.shape
    max_err = float(jnp.max(jnp.abs(tokens - ref)))
    assert jnp.allclose(tokens, ref, atol=5e-3, rtol=5e-3), max_err

    print("KERNEL_OK")
</pallas_src>

<mosaic_0001>
module attributes {stable_mosaic.version = 11 : i64} {
  func.func @_conv3x3_s2_bn_relu_kernel(%arg0: i32, %arg1: memref<1x4x33x33x3xf32, #tpu.memory_space<vmem>>, %arg2: memref<3x3x3x32xf32, #tpu.memory_space<vmem>>, %arg3: memref<1x32xf32, #tpu.memory_space<vmem>>, %arg4: memref<1x32x32x32xf32, #tpu.memory_space<vmem>>) attributes {dimension_semantics = [#tpu.dimension_semantics<parallel>], iteration_bounds = array<i64: 16>, scalar_prefetch = 0 : i64, scratch_operands = 0 : i64, tpu.core_type = #tpu.core_type<tc>, window_params = [{transform_indices = @transform_0, window_bounds = array<i64: 1, 4, 33, 33, 3>}, {pipeline_mode = #tpu.pipeline_mode<synchronous>, transform_indices = @transform_1, window_bounds = array<i64: 3, 3, 3, 32>}, {pipeline_mode = #tpu.pipeline_mode<synchronous>, transform_indices = @transform_2, window_bounds = array<i64: 1, 32>}, {transform_indices = @transform_3, window_bounds = array<i64: 1, 32, 32, 32>}]} {
    %c0 = arith.constant 0 : index
    %c0_0 = arith.constant 0 : index
    %0 = vector.load %arg3[%c0, %c0_0] : memref<1x32xf32, #tpu.memory_space<vmem>>, vector<1x32xf32>
    %c0_i32 = arith.constant 0 : i32
    %c32_i32 = arith.constant 32 : i32
    %1 = arith.addi %c0_i32, %c32_i32 : i32
    %c1_i32 = arith.constant 1 : i32
    scf.for %arg5 = %c0_i32 to %1 step %c1_i32  : i32 {
      %c1_i32_2 = arith.constant 1 : i32
      %2 = arith.muli %arg5, %c1_i32_2 : i32
      %c0_i32_3 = arith.constant 0 : i32
      %3 = arith.addi %c0_i32_3, %2 : i32
      %cst = arith.constant 0.000000e+00 : f32
      %4 = vector.broadcast %cst : f32 to vector<32x32xf32>
      %c0_i32_4 = arith.constant 0 : i32
      %5 = arith.addi %3, %c0_i32_4 : i32
      %c0_5 = arith.constant 0 : index
      %c0_6 = arith.constant 0 : index
      %6 = arith.index_cast %5 : i32 to index
      %c0_7 = arith.constant 0 : index
      %c0_8 = arith.constant 0 : index
      %7 = vector.load %arg1[%c0_5, %c0_6, %6, %c0_7, %c0_8] : memref<1x4x33x33x3xf32, #tpu.memory_space<vmem>>, vector<1x1x1x32x3xf32>
      %8 = vector.shape_cast %7 : vector<1x1x1x32x3xf32> to vector<1x32x3xf32>
      %9 = vector.shape_cast %8 : vector<1x32x3xf32> to vector<32x3xf32>
      %c0_9 = arith.constant 0 : index
      %c0_10 = arith.constant 0 : index
      %c0_11 = arith.constant 0 : index
      %c0_12 = arith.constant 0 : index
      %10 = vector.load %arg2[%c0_9, %c0_10, %c0_11, %c0_12] : memref<3x3x3x32xf32, #tpu.memory_space<vmem>>, vector<1x1x3x32xf32>
      %11 = vector.shape_cast %10 : vector<1x1x3x32xf32> to vector<3x32xf32>
      %cst_13 = arith.constant dense<0.000000e+00> : vector<32x32xf32>
      %12 = tpu.matmul %9, %11, %cst_13 {dimension_numbers = #tpu.dot_dimension_numbers<[1], [0], [0], [1], [0, 0, 1, 1], [], []>} : vector<32x3xf32>, vector<3x32xf32>, vector<32x32xf32> -> vector<32x32xf32>
      %13 = arith.addf %4, %12 : vector<32x32xf32>
      %c0_i32_14 = arith.constant 0 : i32
      %14 = arith.addi %3, %c0_i32_14 : i32
      %c0_15 = arith.constant 0 : index
      %c1 = arith.constant 1 : index
      %15 = arith.index_cast %14 : i32 to index
      %c0_16 = arith.constant 0 : index
      %c0_17 = arith.constant 0 : index
      %16 = vector.load %arg1[%c0_15, %c1, %15, %c0_16, %c0_17] : memref<1x4x33x33x3xf32, #tpu.memory_space<vmem>>, vector<1x1x1x32x3xf32>
      %17 = vector.shape_cast %16 : vector<1x1x1x32x3xf32> to vector<1x32x3xf32>
      %18 = vector.shape_cast %17 : vector<1x32x3xf32> to vector<32x3xf32>
      %c0_18 = arith.constant 0 : index
      %c1_19 = arith.constant 1 : index
      %c0_20 = arith.constant 0 : index
      %c0_21 = arith.constant 0 : index
      %19 = vector.load %arg2[%c0_18, %c1_19, %c0_20, %c0_21] : memref<3x3x3x32xf32, #tpu.memory_space<vmem>>, vector<1x1x3x32xf32>
      %20 = vector.shape_cast %19 : vector<1x1x3x32xf32> to vector<3x32xf32>
      %cst_22 = arith.constant dense<0.000000e+00> : vector<32x32xf32>
      %21 = tpu.matmul %18, %20, %cst_22 {dimension_numbers = #tpu.dot_dimension_numbers<[1], [0], [0], [1], [0, 0, 1, 1], [], []>} : vector<32x3xf32>, vector<3x32xf32>, vector<32x32xf32> -> vector<32x32xf32>
      %22 = arith.addf %13, %21 : vector<32x32xf32>
      %c0_i32_23 = arith.constant 0 : i32
      %23 = arith.addi %3, %c0_i32_23 : i32
      %c0_24 = arith.constant 0 : index
      %c0_25 = arith.constant 0 : index
      %24 = arith.index_cast %23 : i32 to index
      %c1_26 = arith.constant 1 : index
      %c0_27 = arith.constant 0 : index
      %25 = vector.load %arg1[%c0_24, %c0_25, %24, %c1_26, %c0_27] : memref<1x4x33x33x3xf32, #tpu.memory_space<vmem>>, vector<1x1x1x32x3xf32>
      %26 = vector.shape_cast %25 : vector<1x1x1x32x3xf32> to vector<1x32x3xf32>
      %27 = vector.shape_cast %26 : vector<1x32x3xf32> to vector<32x3xf32>
      %c0_28 = arith.constant 0 : index
      %c2 = arith.constant 2 : index
      %c0_29 = arith.constant 0 : index
      %c0_30 = arith.constant 0 : index
      %28 = vector.load %arg2[%c0_28, %c2, %c0_29, %c0_30] : memref<3x3x3x32xf32, #tpu.memory_space<vmem>>, vector<1x1x3x32xf32>
      %29 = vector.shape_cast %28 : vector<1x1x3x32xf32> to vector<3x32xf32>
      %cst_31 = arith.constant dense<0.000000e+00> : vector<32x32xf32>
      %30 = tpu.matmul %27, %29, %cst_31 {dimension_numbers = #tpu.dot_dimension_numbers<[1], [0], [0], [1], [0, 0, 1, 1], [], []>} : vector<32x3xf32>, vector<3x32xf32>, vector<32x32xf32> -> vector<32x32xf32>
      %31 = arith.addf %22, %30 : vector<32x32xf32>
      %c0_i32_32 = arith.constant 0 : i32
      %32 = arith.addi %3, %c0_i32_32 : i32
      %c0_33 = arith.constant 0 : index
      %c2_34 = arith.constant 2 : index
      %33 = arith.index_cast %32 : i32 to index
      %c0_35 = arith.constant 0 : index
      %c0_36 = arith.constant 0 : index
      %34 = vector.load %arg1[%c0_33, %c2_34, %33, %c0_35, %c0_36] : memref<1x4x33x33x3xf32, #tpu.memory_space<vmem>>, vector<1x1x1x32x3xf32>
      %35 = vector.shape_cast %34 : vector<1x1x1x32x3xf32> to vector<1x32x3xf32>
      %36 = vector.shape_cast %35 : vector<1x32x3xf32> to vector<32x3xf32>
      %c1_37 = arith.constant 1 : index
      %c0_38 = arith.constant 0 : index
      %c0_39 = arith.constant 0 : index
      %c0_40 = arith.constant 0 : index
      %37 = vector.load %arg2[%c1_37, %c0_38, %c0_39, %c0_40] : memref<3x3x3x32xf32, #tpu.memory_space<vmem>>, vector<1x1x3x32xf32>
      %38 = vector.shape_cast %37 : vector<1x1x3x32xf32> to vector<3x32xf32>
      %cst_41 = arith.constant dense<0.000000e+00> : vector<32x32xf32>
      %39 = tpu.matmul %36, %38, %cst_41 {dimension_numbers = #tpu.dot_dimension_numbers<[1], [0], [0], [1], [0, 0, 1, 1], [], []>} : vector<32x3xf32>, vector<3x32xf32>, vector<32x32xf32> -> vector<32x32xf32>
      %40 = arith.addf %31, %39 : vector<32x32xf32>
      %c0_i32_42 = arith.constant 0 : i32
      %41 = arith.addi %3, %c0_i32_42 : i32
      %c0_43 = arith.constant 0 : index
      %c3 = arith.constant 3 : index
      %42 = arith.index_cast %41 : i32 to index
      %c0_44 = arith.constant 0 : index
      %c0_45 = arith.constant 0 : index
      %43 = vector.load %arg1[%c0_43, %c3, %42, %c0_44, %c0_45] : memref<1x4x33x33x3xf32, #tpu.memory_space<vmem>>, vector<1x1x1x32x3xf32>
      %44 = vector.shape_cast %43 : vector<1x1x1x32x3xf32> to vector<1x32x3xf32>
      %45 = vector.shape_cast %44 : vector<1x32x3xf32> to vector<32x3xf32>
      %c1_46 = arith.constant 1 : index
      %c1_47 = arith.constant 1 : index
      %c0_48 = arith.constant 0 : index
      %c0_49 = arith.constant 0 : index
      %46 = vector.load %arg2[%c1_46, %c1_47, %c0_48, %c0_49] : memref<3x3x3x32xf32, #tpu.memory_space<vmem>>, vector<1x1x3x32xf32>
      %47 = vector.shape_cast %46 : vector<1x1x3x32xf32> to vector<3x32xf32>
      %cst_50 = arith.constant dense<0.000000e+00> : vector<32x32xf32>
      %48 = tpu.matmul %45, %47, %cst_50 {dimension_numbers = #tpu.dot_dimension_numbers<[1], [0], [0], [1], [0, 0, 1, 1], [], []>} : vector<32x3xf32>, vector<3x32xf32>, vector<32x32xf32> -> vector<32x32xf32>
      %49 = arith.addf %40, %48 : vector<32x32xf32>
      %c0_i32_51 = arith.constant 0 : i32
      %50 = arith.addi %3, %c0_i32_51 : i32
      %c0_52 = arith.constant 0 : index
      %c2_53 = arith.constant 2 : index
      %51 = arith.index_cast %50 : i32 to index
      %c1_54 = arith.constant 1 : index
      %c0_55 = arith.constant 0 : index
      %52 = vector.load %arg1[%c0_52, %c2_53, %51, %c1_54, %c0_55] : memref<1x4x33x33x3xf32, #tpu.memory_space<vmem>>, vector<1x1x1x32x3xf32>
      %53 = vector.shape_cast %52 : vector<1x1x1x32x3xf32> to vector<1x32x3xf32>
      %54 = vector.shape_cast %53 : vector<1x32x3xf32> to vector<32x3xf32>
      %c1_56 = arith.constant 1 : index
      %c2_57 = arith.constant 2 : index
      %c0_58 = arith.constant 0 : index
      %c0_59 = arith.constant 0 : index
      %55 = vector.load %arg2[%c1_56, %c2_57, %c0_58, %c0_59] : memref<3x3x3x32xf32, #tpu.memory_space<vmem>>, vector<1x1x3x32xf32>
      %56 = vector.shape_cast %55 : vector<1x1x3x32xf32> to vector<3x32xf32>
      %cst_60 = arith.constant dense<0.000000e+00> : vector<32x32xf32>
      %57 = tpu.matmul %54, %56, %cst_60 {dimension_numbers = #tpu.dot_dimension_numbers<[1], [0], [0], [1], [0, 0, 1, 1], [], []>} : vector<32x3xf32>, vector<3x32xf32>, vector<32x32xf32> -> vector<32x32xf32>
      %58 = arith.addf %49, %57 : vector<32x32xf32>
      %c1_i32_61 = arith.constant 1 : i32
      %59 = arith.addi %3, %c1_i32_61 : i32
      %c0_62 = arith.constant 0 : index
      %c0_63 = arith.constant 0 : index
      %60 = arith.index_cast %59 : i32 to index
      %c0_64 = arith.constant 0 : index
      %c0_65 = arith.constant 0 : index
      %61 = vector.load %arg1[%c0_62, %c0_63, %60, %c0_64, %c0_65] : memref<1x4x33x33x3xf32, #tpu.memory_space<vmem>>, vector<1x1x1x32x3xf32>
      %62 = vector.shape_cast %61 : vector<1x1x1x32x3xf32> to vector<1x32x3xf32>
      %63 = vector.shape_cast %62 : vector<1x32x3xf32> to vector<32x3xf32>
      %c2_66 = arith.constant 2 : index
      %c0_67 = arith.constant 0 : index
      %c0_68 = arith.constant 0 : index
      %c0_69 = arith.constant 0 : index
      %64 = vector.load %arg2[%c2_66, %c0_67, %c0_68, %c0_69] : memref<3x3x3x32xf32, #tpu.memory_space<vmem>>, vector<1x1x3x32xf32>
      %65 = vector.shape_cast %64 : vector<1x1x3x32xf32> to vector<3x32xf32>
      %cst_70 = arith.constant dense<0.000000e+00> : vector<32x32xf32>
      %66 = tpu.matmul %63, %65, %cst_70 {dimension_numbers = #tpu.dot_dimension_numbers<[1], [0], [0], [1], [0, 0, 1, 1], [], []>} : vector<32x3xf32>, vector<3x32xf32>, vector<32x32xf32> -> vector<32x32xf32>
      %67 = arith.addf %58, %66 : vector<32x32xf32>
      %c1_i32_71 = arith.constant 1 : i32
      %68 = arith.addi %3, %c1_i32_71 : i32
      %c0_72 = arith.constant 0 : index
      %c1_73 = arith.constant 1 : index
      %69 = arith.index_cast %68 : i32 to index
      %c0_74 = arith.constant 0 : index
      %c0_75 = arith.constant 0 : index
      %70 = vector.load %arg1[%c0_72, %c1_73, %69, %c0_74, %c0_75] : memref<1x4x33x33x3xf32, #tpu.memory_space<vmem>>, vector<1x1x1x32x3xf32>
      %71 = vector.shape_cast %70 : vector<1x1x1x32x3xf32> to vector<1x32x3xf32>
      %72 = vector.shape_cast %71 : vector<1x32x3xf32> to vector<32x3xf32>
      %c2_76 = arith.constant 2 : index
      %c1_77 = arith.constant 1 : index
      %c0_78 = arith.constant 0 : index
      %c0_79 = arith.constant 0 : index
      %73 = vector.load %arg2[%c2_76, %c1_77, %c0_78, %c0_79] : memref<3x3x3x32xf32, #tpu.memory_space<vmem>>, vector<1x1x3x32xf32>
      %74 = vector.shape_cast %73 : vector<1x1x3x32xf32> to vector<3x32xf32>
      %cst_80 = arith.constant dense<0.000000e+00> : vector<32x32xf32>
      %75 = tpu.matmul %72, %74, %cst_80 {dimension_numbers = #tpu.dot_dimension_numbers<[1], [0], [0], [1], [0, 0, 1, 1], [], []>} : vector<32x3xf32>, vector<3x32xf32>, vector<32x32xf32> -> vector<32x32xf32>
      %76 = arith.addf %67, %75 : vector<32x32xf32>
      %c1_i32_81 = arith.constant 1 : i32
      %77 = arith.addi %3, %c1_i32_81 : i32
      %c0_82 = arith.constant 0 : index
      %c0_83 = arith.constant 0 : index
      %78 = arith.index_cast %77 : i32 to index
      %c1_84 = arith.constant 1 : index
      %c0_85 = arith.constant 0 : index
      %79 = vector.load %arg1[%c0_82, %c0_83, %78, %c1_84, %c0_85] : memref<1x4x33x33x3xf32, #tpu.memory_space<vmem>>, vector<1x1x1x32x3xf32>
      %80 = vector.shape_cast %79 : vector<1x1x1x32x3xf32> to vector<1x32x3xf32>
      %81 = vector.shape_cast %80 : vector<1x32x3xf32> to vector<32x3xf32>
      %c2_86 = arith.constant 2 : index
      %c2_87 = arith.constant 2 : index
      %c0_88 = arith.constant 0 : index
      %c0_89 = arith.constant 0 : index
      %82 = vector.load %arg2[%c2_86, %c2_87, %c0_88, %c0_89] : memref<3x3x3x32xf32, #tpu.memory_space<vmem>>, vector<1x1x3x32xf32>
      %83 = vector.shape_cast %82 : vector<1x1x3x32xf32> to vector<3x32xf32>
      %cst_90 = arith.constant dense<0.000000e+00> : vector<32x32xf32>
      %84 = tpu.matmul %81, %83, %cst_90 {dimension_numbers = #tpu.dot_dimension_numbers<[1], [0], [0], [1], [0, 0, 1, 1], [], []>} : vector<32x3xf32>, vector<3x32xf32>, vector<32x32xf32> -> vector<32x32xf32>
      %85 = arith.addf %76, %84 : vector<32x32xf32>
      %86 = vector.broadcast %0 : vector<1x32xf32> to vector<32x32xf32>
      %87 = arith.addf %85, %86 : vector<32x32xf32>
      %cst_91 = arith.constant 0.000000e+00 : f32
      %88 = vector.broadcast %cst_91 : f32 to vector<32x32xf32>
      %89 = arith.maximumf %87, %88 : vector<32x32xf32>
      %90 = vector.shape_cast %89 : vector<32x32xf32> to vector<1x32x32xf32>
      %c0_92 = arith.constant 0 : index
      %91 = arith.index_cast %3 : i32 to index
      %c0_93 = arith.constant 0 : index
      %c0_94 = arith.constant 0 : index
      %92 = vector.load %arg4[%c0_92, %91, %c0_93, %c0_94] : memref<1x32x32x32xf32, #tpu.memory_space<vmem>>, vector<1x1x32x32xf32>
      %93 = vector.shape_cast %92 : vector<1x1x32x32xf32> to vector<1x32x32xf32>
      %94 = vector.shape_cast %90 : vector<1x32x32xf32> to vector<1x1x32x32xf32>
      tpu.vector_store %arg4[%c0_92, %91, %c0_93, %c0_94], %94 {strides = array<i32>} : memref<1x32x32x32xf32, #tpu.memory_space<vmem>>, vector<1x1x32x32xf32>,
    }
    %c32_i32_1 = arith.constant 32 : i32
    return
  }
  func.func @transform_0(%arg0: i32) -> (i32, i32, i32, i32, i32) {
    %c0_i32 = arith.constant 0 : i32
    %c0_i32_0 = arith.constant 0 : i32
    %c0_i32_1 = arith.constant 0 : i32
    %c0_i32_2 = arith.constant 0 : i32
    %c0_i32_3 = arith.constant 0 : i32
    return %arg0, %c0_i32, %c0_i32_0, %c0_i32_1, %c0_i32_2 : i32, i32, i32, i32, i32
  }
  func.func @transform_1(%arg0: i32) -> (i32, i32, i32, i32) {
    %c0_i32 = arith.constant 0 : i32
    %c0_i32_0 = arith.constant 0 : i32
    %c0_i32_1 = arith.constant 0 : i32
    %c0_i32_2 = arith.constant 0 : i32
    %c0_i32_3 = arith.constant 0 : i32
    return %c0_i32, %c0_i32_0, %c0_i32_1, %c0_i32_2 : i32, i32, i32, i32
  }
  func.func @transform_2(%arg0: i32) -> (i32, i32) {
    %c0_i32 = arith.constant 0 : i32
    %c0_i32_0 = arith.constant 0 : i32
    %c0_i32_1 = arith.constant 0 : i32
    return %c0_i32, %c0_i32_0 : i32, i32
  }
  func.func @transform_3(%arg0: i32) -> (i32, i32, i32, i32) {
    %c0_i32 = arith.constant 0 : i32
    %c0_i32_0 = arith.constant 0 : i32
    %c0_i32_1 = arith.constant 0 : i32
    %c0_i32_2 = arith.constant 0 : i32
    return %arg0, %c0_i32, %c0_i32_0, %c0_i32_1 : i32, i32, i32, i32
  }
}

module attributes {stable_mosaic.version = 11 : i64} {
  func.func @_conv3x3_s2_bn_relu_kernel(%arg0: i32, %arg1: memref<1x4x17x17x32xf32, #tpu.memory_space<vmem>>, %arg2: memref<3x3x32x64xf32, #tpu.memory_space<vmem>>, %arg3: memref<1x64xf32, #tpu.memory_space<vmem>>, %arg4: memref<1x16x16x64xf32, #tpu.memory_space<vmem>>) attributes {dimension_semantics = [#tpu.dimension_semantics<parallel>], iteration_bounds = array<i64: 16>, scalar_prefetch = 0 : i64, scratch_operands = 0 : i64, tpu.core_type = #tpu.core_type<tc>, window_params = [{transform_indices = @transform_0, window_bounds = array<i64: 1, 4, 17, 17, 32>}, {pipeline_mode = #tpu.pipeline_mode<synchronous>, transform_indices = @transform_1, window_bounds = array<i64: 3, 3, 32, 64>}, {pipeline_mode = #tpu.pipeline_mode<synchronous>, transform_indices = @transform_2, window_bounds = array<i64: 1, 64>}, {transform_indices = @transform_3, window_bounds = array<i64: 1, 16, 16, 64>}]} {
    %c0 = arith.constant 0 : index
    %c0_0 = arith.constant 0 : index
    %0 = vector.load %arg3[%c0, %c0_0] : memref<1x64xf32, #tpu.memory_space<vmem>>, vector<1x64xf32>
    %c0_i32 = arith.constant 0 : i32
    %c16_i32 = arith.constant 16 : i32
    %1 = arith.addi %c0_i32, %c16_i32 : i32
    %c1_i32 = arith.constant 1 : i32
    scf.for %arg5 = %c0_i32 to %1 step %c1_i32  : i32 {
      %c1_i32_2 = arith.constant 1 : i32
      %2 = arith.muli %arg5, %c1_i32_2 : i32
      %c0_i32_3 = arith.constant 0 : i32
      %3 = arith.addi %c0_i32_3, %2 : i32
      %cst = arith.constant 0.000000e+00 : f32
      %4 = vector.broadcast %cst : f32 to vector<16x64xf32>
      %c0_i32_4 = arith.constant 0 : i32
      %5 = arith.addi %3, %c0_i32_4 : i32
      %c0_5 = arith.constant 0 : index
      %c0_6 = arith.constant 0 : index
      %6 = arith.index_cast %5 : i32 to index
      %c0_7 = arith.constant 0 : index
      %c0_8 = arith.constant 0 : index
      %7 = vector.load %arg1[%c0_5, %c0_6, %6, %c0_7, %c0_8] : memref<1x4x17x17x32xf32, #tpu.memory_space<vmem>>, vector<1x1x1x16x32xf32>
      %8 = vector.shape_cast %7 : vector<1x1x1x16x32xf32> to vector<1x16x32xf32>
      %9 = vector.shape_cast %8 : vector<1x16x32xf32> to vector<16x32xf32>
      %c0_9 = arith.constant 0 : index
      %c0_10 = arith.constant 0 : index
      %c0_11 = arith.constant 0 : index
      %c0_12 = arith.constant 0 : index
      %10 = vector.load %arg2[%c0_9, %c0_10, %c0_11, %c0_12] : memref<3x3x32x64xf32, #tpu.memory_space<vmem>>, vector<1x1x32x64xf32>
      %11 = vector.shape_cast %10 : vector<1x1x32x64xf32> to vector<32x64xf32>
      %cst_13 = arith.constant dense<0.000000e+00> : vector<16x64xf32>
      %12 = tpu.matmul %9, %11, %cst_13 {dimension_numbers = #tpu.dot_dimension_numbers<[1], [0], [0], [1], [0, 0, 1, 1], [], []>} : vector<16x32xf32>, vector<32x64xf32>, vector<16x64xf32> -> vector<16x64xf32>
      %13 = arith.addf %4, %12 : vector<16x64xf32>
      %c0_i32_14 = arith.constant 0 : i32
      %14 = arith.addi %3, %c0_i32_14 : i32
      %c0_15 = arith.constant 0 : index
      %c1 = arith.constant 1 : index
      %15 = arith.index_cast %14 : i32 to index
      %c0_16 = arith.constant 0 : index
      %c0_17 = arith.constant 0 : index
      %16 = vector.load %arg1[%c0_15, %c1, %15, %c0_16, %c0_17] : memref<1x4x17x17x32xf32, #tpu.memory_space<vmem>>, vector<1x1x1x16x32xf32>
      %17 = vector.shape_cast %16 : vector<1x1x1x16x32xf32> to vector<1x16x32xf32>
      %18 = vector.shape_cast %17 : vector<1x16x32xf32> to vector<16x32xf32>
      %c0_18 = arith.constant 0 : index
      %c1_19 = arith.constant 1 : index
      %c0_20 = arith.constant 0 : index
      %c0_21 = arith.constant 0 : index
      %19 = vector.load %arg2[%c0_18, %c1_19, %c0_20, %c0_21] : memref<3x3x32x64xf32, #tpu.memory_space<vmem>>, vector<1x1x32x64xf32>
      %20 = vector.shape_cast %19 : vector<1x1x32x64xf32> to vector<32x64xf32>
      %cst_22 = arith.constant dense<0.000000e+00> : vector<16x64xf32>
      %21 = tpu.matmul %18, %20, %cst_22 {dimension_numbers = #tpu.dot_dimension_numbers<[1], [0], [0], [1], [0, 0, 1, 1], [], []>} : vector<16x32xf32>, vector<32x64xf32>, vector<16x64xf32> -> vector<16x64xf32>
      %22 = arith.addf %13, %21 : vector<16x64xf32>
      %c0_i32_23 = arith.constant 0 : i32
      %23 = arith.addi %3, %c0_i32_23 : i32
      %c0_24 = arith.constant 0 : index
      %c0_25 = arith.constant 0 : index
      %24 = arith.index_cast %23 : i32 to index
      %c1_26 = arith.constant 1 : index
      %c0_27 = arith.constant 0 : index
      %25 = vector.load %arg1[%c0_24, %c0_25, %24, %c1_26, %c0_27] : memref<1x4x17x17x32xf32, #tpu.memory_space<vmem>>, vector<1x1x1x16x32xf32>
      %26 = vector.shape_cast %25 : vector<1x1x1x16x32xf32> to vector<1x16x32xf32>
      %27 = vector.shape_cast %26 : vector<1x16x32xf32> to vector<16x32xf32>
      %c0_28 = arith.constant 0 : index
      %c2 = arith.constant 2 : index
      %c0_29 = arith.constant 0 : index
      %c0_30 = arith.constant 0 : index
      %28 = vector.load %arg2[%c0_28, %c2, %c0_29, %c0_30] : memref<3x3x32x64xf32, #tpu.memory_space<vmem>>, vector<1x1x32x64xf32>
      %29 = vector.shape_cast %28 : vector<1x1x32x64xf32> to vector<32x64xf32>
      %cst_31 = arith.constant dense<0.000000e+00> : vector<16x64xf32>
      %30 = tpu.matmul %27, %29, %cst_31 {dimension_numbers = #tpu.dot_dimension_numbers<[1], [0], [0], [1], [0, 0, 1, 1], [], []>} : vector<16x32xf32>, vector<32x64xf32>, vector<16x64xf32> -> vector<16x64xf32>
      %31 = arith.addf %22, %30 : vector<16x64xf32>
      %c0_i32_32 = arith.constant 0 : i32
      %32 = arith.addi %3, %c0_i32_32 : i32
      %c0_33 = arith.constant 0 : index
      %c2_34 = arith.constant 2 : index
      %33 = arith.index_cast %32 : i32 to index
      %c0_35 = arith.constant 0 : index
      %c0_36 = arith.constant 0 : index
      %34 = vector.load %arg1[%c0_33, %c2_34, %33, %c0_35, %c0_36] : memref<1x4x17x17x32xf32, #tpu.memory_space<vmem>>, vector<1x1x1x16x32xf32>
      %35 = vector.shape_cast %34 : vector<1x1x1x16x32xf32> to vector<1x16x32xf32>
      %36 = vector.shape_cast %35 : vector<1x16x32xf32> to vector<16x32xf32>
      %c1_37 = arith.constant 1 : index
      %c0_38 = arith.constant 0 : index
      %c0_39 = arith.constant 0 : index
      %c0_40 = arith.constant 0 : index
      %37 = vector.load %arg2[%c1_37, %c0_38, %c0_39, %c0_40] : memref<3x3x32x64xf32, #tpu.memory_space<vmem>>, vector<1x1x32x64xf32>
      %38 = vector.shape_cast %37 : vector<1x1x32x64xf32> to vector<32x64xf32>
      %cst_41 = arith.constant dense<0.000000e+00> : vector<16x64xf32>
      %39 = tpu.matmul %36, %38, %cst_41 {dimension_numbers = #tpu.dot_dimension_numbers<[1], [0], [0], [1], [0, 0, 1, 1], [], []>} : vector<16x32xf32>, vector<32x64xf32>, vector<16x64xf32> -> vector<16x64xf32>
      %40 = arith.addf %31, %39 : vector<16x64xf32>
      %c0_i32_42 = arith.constant 0 : i32
      %41 = arith.addi %3, %c0_i32_42 : i32
      %c0_43 = arith.constant 0 : index
      %c3 = arith.constant 3 : index
      %42 = arith.index_cast %41 : i32 to index
      %c0_44 = arith.constant 0 : index
      %c0_45 = arith.constant 0 : index
      %43 = vector.load %arg1[%c0_43, %c3, %42, %c0_44, %c0_45] : memref<1x4x17x17x32xf32, #tpu.memory_space<vmem>>, vector<1x1x1x16x32xf32>
      %44 = vector.shape_cast %43 : vector<1x1x1x16x32xf32> to vector<1x16x32xf32>
      %45 = vector.shape_cast %44 : vector<1x16x32xf32> to vector<16x32xf32>
      %c1_46 = arith.constant 1 : index
      %c1_47 = arith.constant 1 : index
      %c0_48 = arith.constant 0 : index
      %c0_49 = arith.constant 0 : index
      %46 = vector.load %arg2[%c1_46, %c1_47, %c0_48, %c0_49] : memref<3x3x32x64xf32, #tpu.memory_space<vmem>>, vector<1x1x32x64xf32>
      %47 = vector.shape_cast %46 : vector<1x1x32x64xf32> to vector<32x64xf32>
      %cst_50 = arith.constant dense<0.000000e+00> : vector<16x64xf32>
      %48 = tpu.matmul %45, %47, %cst_50 {dimension_numbers = #tpu.dot_dimension_numbers<[1], [0], [0], [1], [0, 0, 1, 1], [], []>} : vector<16x32xf32>, vector<32x64xf32>, vector<16x64xf32> -> vector<16x64xf32>
      %49 = arith.addf %40, %48 : vector<16x64xf32>
      %c0_i32_51 = arith.constant 0 : i32
      %50 = arith.addi %3, %c0_i32_51 : i32
      %c0_52 = arith.constant 0 : index
      %c2_53 = arith.constant 2 : index
      %51 = arith.index_cast %50 : i32 to index
      %c1_54 = arith.constant 1 : index
      %c0_55 = arith.constant 0 : index
      %52 = vector.load %arg1[%c0_52, %c2_53, %51, %c1_54, %c0_55] : memref<1x4x17x17x32xf32, #tpu.memory_space<vmem>>, vector<1x1x1x16x32xf32>
      %53 = vector.shape_cast %52 : vector<1x1x1x16x32xf32> to vector<1x16x32xf32>
      %54 = vector.shape_cast %53 : vector<1x16x32xf32> to vector<16x32xf32>
      %c1_56 = arith.constant 1 : index
      %c2_57 = arith.constant 2 : index
      %c0_58 = arith.constant 0 : index
      %c0_59 = arith.constant 0 : index
      %55 = vector.load %arg2[%c1_56, %c2_57, %c0_58, %c0_59] : memref<3x3x32x64xf32, #tpu.memory_space<vmem>>, vector<1x1x32x64xf32>
      %56 = vector.shape_cast %55 : vector<1x1x32x64xf32> to vector<32x64xf32>
      %cst_60 = arith.constant dense<0.000000e+00> : vector<16x64xf32>
      %57 = tpu.matmul %54, %56, %cst_60 {dimension_numbers = #tpu.dot_dimension_numbers<[1], [0], [0], [1], [0, 0, 1, 1], [], []>} : vector<16x32xf32>, vector<32x64xf32>, vector<16x64xf32> -> vector<16x64xf32>
      %58 = arith.addf %49, %57 : vector<16x64xf32>
      %c1_i32_61 = arith.constant 1 : i32
      %59 = arith.addi %3, %c1_i32_61 : i32
      %c0_62 = arith.constant 0 : index
      %c0_63 = arith.constant 0 : index
      %60 = arith.index_cast %59 : i32 to index
      %c0_64 = arith.constant 0 : index
      %c0_65 = arith.constant 0 : index
      %61 = vector.load %arg1[%c0_62, %c0_63, %60, %c0_64, %c0_65] : memref<1x4x17x17x32xf32, #tpu.memory_space<vmem>>, vector<1x1x1x16x32xf32>
      %62 = vector.shape_cast %61 : vector<1x1x1x16x32xf32> to vector<1x16x32xf32>
      %63 = vector.shape_cast %62 : vector<1x16x32xf32> to vector<16x32xf32>
      %c2_66 = arith.constant 2 : index
      %c0_67 = arith.constant 0 : index
      %c0_68 = arith.constant 0 : index
      %c0_69 = arith.constant 0 : index
      %64 = vector.load %arg2[%c2_66, %c0_67, %c0_68, %c0_69] : memref<3x3x32x64xf32, #tpu.memory_space<vmem>>, vector<1x1x32x64xf32>
      %65 = vector.shape_cast %64 : vector<1x1x32x64xf32> to vector<32x64xf32>
      %cst_70 = arith.constant dense<0.000000e+00> : vector<16x64xf32>
      %66 = tpu.matmul %63, %65, %cst_70 {dimension_numbers = #tpu.dot_dimension_numbers<[1], [0], [0], [1], [0, 0, 1, 1], [], []>} : vector<16x32xf32>, vector<32x64xf32>, vector<16x64xf32> -> vector<16x64xf32>
      %67 = arith.addf %58, %66 : vector<16x64xf32>
      %c1_i32_71 = arith.constant 1 : i32
      %68 = arith.addi %3, %c1_i32_71 : i32
      %c0_72 = arith.constant 0 : index
      %c1_73 = arith.constant 1 : index
      %69 = arith.index_cast %68 : i32 to index
      %c0_74 = arith.constant 0 : index
      %c0_75 = arith.constant 0 : index
      %70 = vector.load %arg1[%c0_72, %c1_73, %69, %c0_74, %c0_75] : memref<1x4x17x17x32xf32, #tpu.memory_space<vmem>>, vector<1x1x1x16x32xf32>
      %71 = vector.shape_cast %70 : vector<1x1x1x16x32xf32> to vector<1x16x32xf32>
      %72 = vector.shape_cast %71 : vector<1x16x32xf32> to vector<16x32xf32>
      %c2_76 = arith.constant 2 : index
      %c1_77 = arith.constant 1 : index
      %c0_78 = arith.constant 0 : index
      %c0_79 = arith.constant 0 : index
      %73 = vector.load %arg2[%c2_76, %c1_77, %c0_78, %c0_79] : memref<3x3x32x64xf32, #tpu.memory_space<vmem>>, vector<1x1x32x64xf32>
      %74 = vector.shape_cast %73 : vector<1x1x32x64xf32> to vector<32x64xf32>
      %cst_80 = arith.constant dense<0.000000e+00> : vector<16x64xf32>
      %75 = tpu.matmul %72, %74, %cst_80 {dimension_numbers = #tpu.dot_dimension_numbers<[1], [0], [0], [1], [0, 0, 1, 1], [], []>} : vector<16x32xf32>, vector<32x64xf32>, vector<16x64xf32> -> vector<16x64xf32>
      %76 = arith.addf %67, %75 : vector<16x64xf32>
      %c1_i32_81 = arith.constant 1 : i32
      %77 = arith.addi %3, %c1_i32_81 : i32
      %c0_82 = arith.constant 0 : index
      %c0_83 = arith.constant 0 : index
      %78 = arith.index_cast %77 : i32 to index
      %c1_84 = arith.constant 1 : index
      %c0_85 = arith.constant 0 : index
      %79 = vector.load %arg1[%c0_82, %c0_83, %78, %c1_84, %c0_85] : memref<1x4x17x17x32xf32, #tpu.memory_space<vmem>>, vector<1x1x1x16x32xf32>
      %80 = vector.shape_cast %79 : vector<1x1x1x16x32xf32> to vector<1x16x32xf32>
      %81 = vector.shape_cast %80 : vector<1x16x32xf32> to vector<16x32xf32>
      %c2_86 = arith.constant 2 : index
      %c2_87 = arith.constant 2 : index
      %c0_88 = arith.constant 0 : index
      %c0_89 = arith.constant 0 : index
      %82 = vector.load %arg2[%c2_86, %c2_87, %c0_88, %c0_89] : memref<3x3x32x64xf32, #tpu.memory_space<vmem>>, vector<1x1x32x64xf32>
      %83 = vector.shape_cast %82 : vector<1x1x32x64xf32> to vector<32x64xf32>
      %cst_90 = arith.constant dense<0.000000e+00> : vector<16x64xf32>
      %84 = tpu.matmul %81, %83, %cst_90 {dimension_numbers = #tpu.dot_dimension_numbers<[1], [0], [0], [1], [0, 0, 1, 1], [], []>} : vector<16x32xf32>, vector<32x64xf32>, vector<16x64xf32> -> vector<16x64xf32>
      %85 = arith.addf %76, %84 : vector<16x64xf32>
      %86 = vector.broadcast %0 : vector<1x64xf32> to vector<16x64xf32>
      %87 = arith.addf %85, %86 : vector<16x64xf32>
      %cst_91 = arith.constant 0.000000e+00 : f32
      %88 = vector.broadcast %cst_91 : f32 to vector<16x64xf32>
      %89 = arith.maximumf %87, %88 : vector<16x64xf32>
      %90 = vector.shape_cast %89 : vector<16x64xf32> to vector<1x16x64xf32>
      %c0_92 = arith.constant 0 : index
      %91 = arith.index_cast %3 : i32 to index
      %c0_93 = arith.constant 0 : index
      %c0_94 = arith.constant 0 : index
      %92 = vector.load %arg4[%c0_92, %91, %c0_93, %c0_94] : memref<1x16x16x64xf32, #tpu.memory_space<vmem>>, vector<1x1x16x64xf32>
      %93 = vector.shape_cast %92 : vector<1x1x16x64xf32> to vector<1x16x64xf32>
      %94 = vector.shape_cast %90 : vector<1x16x64xf32> to vector<1x1x16x64xf32>
      tpu.vector_store %arg4[%c0_92, %91, %c0_93, %c0_94], %94 {strides = array<i32>} : memref<1x16x16x64xf32, #tpu.memory_space<vmem>>, vector<1x1x16x64xf32>,
    }
    %c16_i32_1 = arith.constant 16 : i32
    return
  }
  func.func @transform_0(%arg0: i32) -> (i32, i32, i32, i32, i32) {
    %c0_i32 = arith.constant 0 : i32
    %c0_i32_0 = arith.constant 0 : i32
    %c0_i32_1 = arith.constant 0 : i32
    %c0_i32_2 = arith.constant 0 : i32
    %c0_i32_3 = arith.constant 0 : i32
    return %arg0, %c0_i32, %c0_i32_0, %c0_i32_1, %c0_i32_2 : i32, i32, i32, i32, i32
  }
  func.func @transform_1(%arg0: i32) -> (i32, i32, i32, i32) {
    %c0_i32 = arith.constant 0 : i32
    %c0_i32_0 = arith.constant 0 : i32
    %c0_i32_1 = arith.constant 0 : i32
    %c0_i32_2 = arith.constant 0 : i32
    %c0_i32_3 = arith.constant 0 : i32
    return %c0_i32, %c0_i32_0, %c0_i32_1, %c0_i32_2 : i32, i32, i32, i32
  }
  func.func @transform_2(%arg0: i32) -> (i32, i32) {
    %c0_i32 = arith.constant 0 : i32
    %c0_i32_0 = arith.constant 0 : i32
    %c0_i32_1 = arith.constant 0 : i32
    return %c0_i32, %c0_i32_0 : i32, i32
  }
  func.func @transform_3(%arg0: i32) -> (i32, i32, i32, i32) {
    %c0_i32 = arith.constant 0 : i32
    %c0_i32_0 = arith.constant 0 : i32
    %c0_i32_1 = arith.constant 0 : i32
    %c0_i32_2 = arith.constant 0 : i32
    return %arg0, %c0_i32, %c0_i32_0, %c0_i32_1 : i32, i32, i32, i32
  }
}

module attributes {stable_mosaic.version = 11 : i64} {
  func.func @_conv3x3_s2_bn_relu_kernel(%arg0: i32, %arg1: memref<1x4x9x9x64xf32, #tpu.memory_space<vmem>>, %arg2: memref<3x3x64x128xf32, #tpu.memory_space<vmem>>, %arg3: memref<1x128xf32, #tpu.memory_space<vmem>>, %arg4: memref<1x8x8x128xf32, #tpu.memory_space<vmem>>) attributes {dimension_semantics = [#tpu.dimension_semantics<parallel>], iteration_bounds = array<i64: 16>, scalar_prefetch = 0 : i64, scratch_operands = 0 : i64, tpu.core_type = #tpu.core_type<tc>, window_params = [{transform_indices = @transform_0, window_bounds = array<i64: 1, 4, 9, 9, 64>}, {pipeline_mode = #tpu.pipeline_mode<synchronous>, transform_indices = @transform_1, window_bounds = array<i64: 3, 3, 64, 128>}, {pipeline_mode = #tpu.pipeline_mode<synchronous>, transform_indices = @transform_2, window_bounds = array<i64: 1, 128>}, {transform_indices = @transform_3, window_bounds = array<i64: 1, 8, 8, 128>}]} {
    %c0 = arith.constant 0 : index
    %c0_0 = arith.constant 0 : index
    %0 = vector.load %arg3[%c0, %c0_0] : memref<1x128xf32, #tpu.memory_space<vmem>>, vector<1x128xf32>
    %c0_i32 = arith.constant 0 : i32
    %c8_i32 = arith.constant 8 : i32
    %1 = arith.addi %c0_i32, %c8_i32 : i32
    %c1_i32 = arith.constant 1 : i32
    scf.for %arg5 = %c0_i32 to %1 step %c1_i32  : i32 {
      %c1_i32_2 = arith.constant 1 : i32
      %2 = arith.muli %arg5, %c1_i32_2 : i32
      %c0_i32_3 = arith.constant 0 : i32
      %3 = arith.addi %c0_i32_3, %2 : i32
      %cst = arith.constant 0.000000e+00 : f32
      %4 = vector.broadcast %cst : f32 to vector<8x128xf32>
      %c0_i32_4 = arith.constant 0 : i32
      %5 = arith.addi %3, %c0_i32_4 : i32
      %c0_5 = arith.constant 0 : index
      %c0_6 = arith.constant 0 : index
      %6 = arith.index_cast %5 : i32 to index
      %c0_7 = arith.constant 0 : index
      %c0_8 = arith.constant 0 : index
      %7 = vector.load %arg1[%c0_5, %c0_6, %6, %c0_7, %c0_8] : memref<1x4x9x9x64xf32, #tpu.memory_space<vmem>>, vector<1x1x1x8x64xf32>
      %8 = vector.shape_cast %7 : vector<1x1x1x8x64xf32> to vector<1x8x64xf32>
      %9 = vector.shape_cast %8 : vector<1x8x64xf32> to vector<8x64xf32>
      %c0_9 = arith.constant 0 : index
      %c0_10 = arith.constant 0 : index
      %c0_11 = arith.constant 0 : index
      %c0_12 = arith.constant 0 : index
      %10 = vector.load %arg2[%c0_9, %c0_10, %c0_11, %c0_12] : memref<3x3x64x128xf32, #tpu.memory_space<vmem>>, vector<1x1x64x128xf32>
      %11 = vector.shape_cast %10 : vector<1x1x64x128xf32> to vector<64x128xf32>
      %cst_13 = arith.constant dense<0.000000e+00> : vector<8x128xf32>
      %12 = tpu.matmul %9, %11, %cst_13 {dimension_numbers = #tpu.dot_dimension_numbers<[1], [0], [0], [1], [0, 0, 1, 1], [], []>} : vector<8x64xf32>, vector<64x128xf32>, vector<8x128xf32> -> vector<8x128xf32>
      %13 = arith.addf %4, %12 : vector<8x128xf32>
      %c0_i32_14 = arith.constant 0 : i32
      %14 = arith.addi %3, %c0_i32_14 : i32
      %c0_15 = arith.constant 0 : index
      %c1 = arith.constant 1 : index
      %15 = arith.index_cast %14 : i32 to index
      %c0_16 = arith.constant 0 : index
      %c0_17 = arith.constant 0 : index
      %16 = vector.load %arg1[%c0_15, %c1, %15, %c0_16, %c0_17] : memref<1x4x9x9x64xf32, #tpu.memory_space<vmem>>, vector<1x1x1x8x64xf32>
      %17 = vector.shape_cast %16 : vector<1x1x1x8x64xf32> to vector<1x8x64xf32>
      %18 = vector.shape_cast %17 : vector<1x8x64xf32> to vector<8x64xf32>
      %c0_18 = arith.constant 0 : index
      %c1_19 = arith.constant 1 : index
      %c0_20 = arith.constant 0 : index
      %c0_21 = arith.constant 0 : index
      %19 = vector.load %arg2[%c0_18, %c1_19, %c0_20, %c0_21] : memref<3x3x64x128xf32, #tpu.memory_space<vmem>>, vector<1x1x64x128xf32>
      %20 = vector.shape_cast %19 : vector<1x1x64x128xf32> to vector<64x128xf32>
      %cst_22 = arith.constant dense<0.000000e+00> : vector<8x128xf32>
      %21 = tpu.matmul %18, %20, %cst_22 {dimension_numbers = #tpu.dot_dimension_numbers<[1], [0], [0], [1], [0, 0, 1, 1], [], []>} : vector<8x64xf32>, vector<64x128xf32>, vector<8x128xf32> -> vector<8x128xf32>
      %22 = arith.addf %13, %21 : vector<8x128xf32>
      %c0_i32_23 = arith.constant 0 : i32
      %23 = arith.addi %3, %c0_i32_23 : i32
      %c0_24 = arith.constant 0 : index
      %c0_25 = arith.constant 0 : index
      %24 = arith.index_cast %23 : i32 to index
      %c1_26 = arith.constant 1 : index
      %c0_27 = arith.constant 0 : index
      %25 = vector.load %arg1[%c0_24, %c0_25, %24, %c1_26, %c0_27] : memref<1x4x9x9x64xf32, #tpu.memory_space<vmem>>, vector<1x1x1x8x64xf32>
      %26 = vector.shape_cast %25 : vector<1x1x1x8x64xf32> to vector<1x8x64xf32>
      %27 = vector.shape_cast %26 : vector<1x8x64xf32> to vector<8x64xf32>
      %c0_28 = arith.constant 0 : index
      %c2 = arith.constant 2 : index
      %c0_29 = arith.constant 0 : index
      %c0_30 = arith.constant 0 : index
      %28 = vector.load %arg2[%c0_28, %c2, %c0_29, %c0_30] : memref<3x3x64x128xf32, #tpu.memory_space<vmem>>, vector<1x1x64x128xf32>
      %29 = vector.shape_cast %28 : vector<1x1x64x128xf32> to vector<64x128xf32>
      %cst_31 = arith.constant dense<0.000000e+00> : vector<8x128xf32>
      %30 = tpu.matmul %27, %29, %cst_31 {dimension_numbers = #tpu.dot_dimension_numbers<[1], [0], [0], [1], [0, 0, 1, 1], [], []>} : vector<8x64xf32>, vector<64x128xf32>, vector<8x128xf32> -> vector<8x128xf32>
      %31 = arith.addf %22, %30 : vector<8x128xf32>
      %c0_i32_32 = arith.constant 0 : i32
      %32 = arith.addi %3, %c0_i32_32 : i32
      %c0_33 = arith.constant 0 : index
      %c2_34 = arith.constant 2 : index
      %33 = arith.index_cast %32 : i32 to index
      %c0_35 = arith.constant 0 : index
      %c0_36 = arith.constant 0 : index
      %34 = vector.load %arg1[%c0_33, %c2_34, %33, %c0_35, %c0_36] : memref<1x4x9x9x64xf32, #tpu.memory_space<vmem>>, vector<1x1x1x8x64xf32>
      %35 = vector.shape_cast %34 : vector<1x1x1x8x64xf32> to vector<1x8x64xf32>
      %36 = vector.shape_cast %35 : vector<1x8x64xf32> to vector<8x64xf32>
      %c1_37 = arith.constant 1 : index
      %c0_38 = arith.constant 0 : index
      %c0_39 = arith.constant 0 : index
      %c0_40 = arith.constant 0 : index
      %37 = vector.load %arg2[%c1_37, %c0_38, %c0_39, %c0_40] : memref<3x3x64x128xf32, #tpu.memory_space<vmem>>, vector<1x1x64x128xf32>
      %38 = vector.shape_cast %37 : vector<1x1x64x128xf32> to vector<64x128xf32>
      %cst_41 = arith.constant dense<0.000000e+00> : vector<8x128xf32>
      %39 = tpu.matmul %36, %38, %cst_41 {dimension_numbers = #tpu.dot_dimension_numbers<[1], [0], [0], [1], [0, 0, 1, 1], [], []>} : vector<8x64xf32>, vector<64x128xf32>, vector<8x128xf32> -> vector<8x128xf32>
      %40 = arith.addf %31, %39 : vector<8x128xf32>
      %c0_i32_42 = arith.constant 0 : i32
      %41 = arith.addi %3, %c0_i32_42 : i32
      %c0_43 = arith.constant 0 : index
      %c3 = arith.constant 3 : index
      %42 = arith.index_cast %41 : i32 to index
      %c0_44 = arith.constant 0 : index
      %c0_45 = arith.constant 0 : index
      %43 = vector.load %arg1[%c0_43, %c3, %42, %c0_44, %c0_45] : memref<1x4x9x9x64xf32, #tpu.memory_space<vmem>>, vector<1x1x1x8x64xf32>
      %44 = vector.shape_cast %43 : vector<1x1x1x8x64xf32> to vector<1x8x64xf32>
      %45 = vector.shape_cast %44 : vector<1x8x64xf32> to vector<8x64xf32>
      %c1_46 = arith.constant 1 : index
      %c1_47 = arith.constant 1 : index
      %c0_48 = arith.constant 0 : index
      %c0_49 = arith.constant 0 : index
      %46 = vector.load %arg2[%c1_46, %c1_47, %c0_48, %c0_49] : memref<3x3x64x128xf32, #tpu.memory_space<vmem>>, vector<1x1x64x128xf32>
      %47 = vector.shape_cast %46 : vector<1x1x64x128xf32> to vector<64x128xf32>
      %cst_50 = arith.constant dense<0.000000e+00> : vector<8x128xf32>
      %48 = tpu.matmul %45, %47, %cst_50 {dimension_numbers = #tpu.dot_dimension_numbers<[1], [0], [0], [1], [0, 0, 1, 1], [], []>} : vector<8x64xf32>, vector<64x128xf32>, vector<8x128xf32> -> vector<8x128xf32>
      %49 = arith.addf %40, %48 : vector<8x128xf32>
      %c0_i32_51 = arith.constant 0 : i32
      %50 = arith.addi %3, %c0_i32_51 : i32
      %c0_52 = arith.constant 0 : index
      %c2_53 = arith.constant 2 : index
      %51 = arith.index_cast %50 : i32 to index
      %c1_54 = arith.constant 1 : index
      %c0_55 = arith.constant 0 : index
      %52 = vector.load %arg1[%c0_52, %c2_53, %51, %c1_54, %c0_55] : memref<1x4x9x9x64xf32, #tpu.memory_space<vmem>>, vector<1x1x1x8x64xf32>
      %53 = vector.shape_cast %52 : vector<1x1x1x8x64xf32> to vector<1x8x64xf32>
      %54 = vector.shape_cast %53 : vector<1x8x64xf32> to vector<8x64xf32>
      %c1_56 = arith.constant 1 : index
      %c2_57 = arith.constant 2 : index
      %c0_58 = arith.constant 0 : index
      %c0_59 = arith.constant 0 : index
      %55 = vector.load %arg2[%c1_56, %c2_57, %c0_58, %c0_59] : memref<3x3x64x128xf32, #tpu.memory_space<vmem>>, vector<1x1x64x128xf32>
      %56 = vector.shape_cast %55 : vector<1x1x64x128xf32> to vector<64x128xf32>
      %cst_60 = arith.constant dense<0.000000e+00> : vector<8x128xf32>
      %57 = tpu.matmul %54, %56, %cst_60 {dimension_numbers = #tpu.dot_dimension_numbers<[1], [0], [0], [1], [0, 0, 1, 1], [], []>} : vector<8x64xf32>, vector<64x128xf32>, vector<8x128xf32> -> vector<8x128xf32>
      %58 = arith.addf %49, %57 : vector<8x128xf32>
      %c1_i32_61 = arith.constant 1 : i32
      %59 = arith.addi %3, %c1_i32_61 : i32
      %c0_62 = arith.constant 0 : index
      %c0_63 = arith.constant 0 : index
      %60 = arith.index_cast %59 : i32 to index
      %c0_64 = arith.constant 0 : index
      %c0_65 = arith.constant 0 : index
      %61 = vector.load %arg1[%c0_62, %c0_63, %60, %c0_64, %c0_65] : memref<1x4x9x9x64xf32, #tpu.memory_space<vmem>>, vector<1x1x1x8x64xf32>
      %62 = vector.shape_cast %61 : vector<1x1x1x8x64xf32> to vector<1x8x64xf32>
      %63 = vector.shape_cast %62 : vector<1x8x64xf32> to vector<8x64xf32>
      %c2_66 = arith.constant 2 : index
      %c0_67 = arith.constant 0 : index
      %c0_68 = arith.constant 0 : index
      %c0_69 = arith.constant 0 : index
      %64 = vector.load %arg2[%c2_66, %c0_67, %c0_68, %c0_69] : memref<3x3x64x128xf32, #tpu.memory_space<vmem>>, vector<1x1x64x128xf32>
      %65 = vector.shape_cast %64 : vector<1x1x64x128xf32> to vector<64x128xf32>
      %cst_70 = arith.constant dense<0.000000e+00> : vector<8x128xf32>
      %66 = tpu.matmul %63, %65, %cst_70 {dimension_numbers = #tpu.dot_dimension_numbers<[1], [0], [0], [1], [0, 0, 1, 1], [], []>} : vector<8x64xf32>, vector<64x128xf32>, vector<8x128xf32> -> vector<8x128xf32>
      %67 = arith.addf %58, %66 : vector<8x128xf32>
      %c1_i32_71 = arith.constant 1 : i32
      %68 = arith.addi %3, %c1_i32_71 : i32
      %c0_72 = arith.constant 0 : index
      %c1_73 = arith.constant 1 : index
      %69 = arith.index_cast %68 : i32 to index
      %c0_74 = arith.constant 0 : index
      %c0_75 = arith.constant 0 : index
      %70 = vector.load %arg1[%c0_72, %c1_73, %69, %c0_74, %c0_75] : memref<1x4x9x9x64xf32, #tpu.memory_space<vmem>>, vector<1x1x1x8x64xf32>
      %71 = vector.shape_cast %70 : vector<1x1x1x8x64xf32> to vector<1x8x64xf32>
      %72 = vector.shape_cast %71 : vector<1x8x64xf32> to vector<8x64xf32>
      %c2_76 = arith.constant 2 : index
      %c1_77 = arith.constant 1 : index
      %c0_78 = arith.constant 0 : index
      %c0_79 = arith.constant 0 : index
      %73 = vector.load %arg2[%c2_76, %c1_77, %c0_78, %c0_79] : memref<3x3x64x128xf32, #tpu.memory_space<vmem>>, vector<1x1x64x128xf32>
      %74 = vector.shape_cast %73 : vector<1x1x64x128xf32> to vector<64x128xf32>
      %cst_80 = arith.constant dense<0.000000e+00> : vector<8x128xf32>
      %75 = tpu.matmul %72, %74, %cst_80 {dimension_numbers = #tpu.dot_dimension_numbers<[1], [0], [0], [1], [0, 0, 1, 1], [], []>} : vector<8x64xf32>, vector<64x128xf32>, vector<8x128xf32> -> vector<8x128xf32>
      %76 = arith.addf %67, %75 : vector<8x128xf32>
      %c1_i32_81 = arith.constant 1 : i32
      %77 = arith.addi %3, %c1_i32_81 : i32
      %c0_82 = arith.constant 0 : index
      %c0_83 = arith.constant 0 : index
      %78 = arith.index_cast %77 : i32 to index
      %c1_84 = arith.constant 1 : index
      %c0_85 = arith.constant 0 : index
      %79 = vector.load %arg1[%c0_82, %c0_83, %78, %c1_84, %c0_85] : memref<1x4x9x9x64xf32, #tpu.memory_space<vmem>>, vector<1x1x1x8x64xf32>
      %80 = vector.shape_cast %79 : vector<1x1x1x8x64xf32> to vector<1x8x64xf32>
      %81 = vector.shape_cast %80 : vector<1x8x64xf32> to vector<8x64xf32>
      %c2_86 = arith.constant 2 : index
      %c2_87 = arith.constant 2 : index
      %c0_88 = arith.constant 0 : index
      %c0_89 = arith.constant 0 : index
      %82 = vector.load %arg2[%c2_86, %c2_87, %c0_88, %c0_89] : memref<3x3x64x128xf32, #tpu.memory_space<vmem>>, vector<1x1x64x128xf32>
      %83 = vector.shape_cast %82 : vector<1x1x64x128xf32> to vector<64x128xf32>
      %cst_90 = arith.constant dense<0.000000e+00> : vector<8x128xf32>
      %84 = tpu.matmul %81, %83, %cst_90 {dimension_numbers = #tpu.dot_dimension_numbers<[1], [0], [0], [1], [0, 0, 1, 1], [], []>} : vector<8x64xf32>, vector<64x128xf32>, vector<8x128xf32> -> vector<8x128xf32>
      %85 = arith.addf %76, %84 : vector<8x128xf32>
      %86 = vector.broadcast %0 : vector<1x128xf32> to vector<8x128xf32>
      %87 = arith.addf %85, %86 : vector<8x128xf32>
      %cst_91 = arith.constant 0.000000e+00 : f32
      %88 = vector.broadcast %cst_91 : f32 to vector<8x128xf32>
      %89 = arith.maximumf %87, %88 : vector<8x128xf32>
      %90 = vector.shape_cast %89 : vector<8x128xf32> to vector<1x8x128xf32>
      %c0_92 = arith.constant 0 : index
      %91 = arith.index_cast %3 : i32 to index
      %c0_93 = arith.constant 0 : index
      %c0_94 = arith.constant 0 : index
      %92 = vector.load %arg4[%c0_92, %91, %c0_93, %c0_94] : memref<1x8x8x128xf32, #tpu.memory_space<vmem>>, vector<1x1x8x128xf32>
      %93 = vector.shape_cast %92 : vector<1x1x8x128xf32> to vector<1x8x128xf32>
      %94 = vector.shape_cast %90 : vector<1x8x128xf32> to vector<1x1x8x128xf32>
      tpu.vector_store %arg4[%c0_92, %91, %c0_93, %c0_94], %94 {strides = array<i32>} : memref<1x8x8x128xf32, #tpu.memory_space<vmem>>, vector<1x1x8x128xf32>,
    }
    %c8_i32_1 = arith.constant 8 : i32
    return
  }
  func.func @transform_0(%arg0: i32) -> (i32, i32, i32, i32, i32) {
    %c0_i32 = arith.constant 0 : i32
    %c0_i32_0 = arith.constant 0 : i32
    %c0_i32_1 = arith.constant 0 : i32
    %c0_i32_2 = arith.constant 0 : i32
    %c0_i32_3 = arith.constant 0 : i32
    return %arg0, %c0_i32, %c0_i32_0, %c0_i32_1, %c0_i32_2 : i32, i32, i32, i32, i32
  }
  func.func @transform_1(%arg0: i32) -> (i32, i32, i32, i32) {
    %c0_i32 = arith.constant 0 : i32
    %c0_i32_0 = arith.constant 0 : i32
    %c0_i32_1 = arith.constant 0 : i32
    %c0_i32_2 = arith.constant 0 : i32
    %c0_i32_3 = arith.constant 0 : i32
    return %c0_i32, %c0_i32_0, %c0_i32_1, %c0_i32_2 : i32, i32, i32, i32
  }
  func.func @transform_2(%arg0: i32) -> (i32, i32) {
    %c0_i32 = arith.constant 0 : i32
    %c0_i32_0 = arith.constant 0 : i32
    %c0_i32_1 = arith.constant 0 : i32
    return %c0_i32, %c0_i32_0 : i32, i32
  }
  func.func @transform_3(%arg0: i32) -> (i32, i32, i32, i32) {
    %c0_i32 = arith.constant 0 : i32
    %c0_i32_0 = arith.constant 0 : i32
    %c0_i32_1 = arith.constant 0 : i32
    %c0_i32_2 = arith.constant 0 : i32
    return %arg0, %c0_i32, %c0_i32_0, %c0_i32_1 : i32, i32, i32, i32
  }
}

module attributes {stable_mosaic.version = 11 : i64} {
  func.func @_conv3x3_s2_bn_relu_kernel(%arg0: i32, %arg1: memref<1x4x5x5x128xf32, #tpu.memory_space<vmem>>, %arg2: memref<3x3x128x256xf32, #tpu.memory_space<vmem>>, %arg3: memref<1x256xf32, #tpu.memory_space<vmem>>, %arg4: memref<1x4x4x256xf32, #tpu.memory_space<vmem>>) attributes {dimension_semantics = [#tpu.dimension_semantics<parallel>], iteration_bounds = array<i64: 16>, scalar_prefetch = 0 : i64, scratch_operands = 0 : i64, tpu.core_type = #tpu.core_type<tc>, window_params = [{transform_indices = @transform_0, window_bounds = array<i64: 1, 4, 5, 5, 128>}, {pipeline_mode = #tpu.pipeline_mode<synchronous>, transform_indices = @transform_1, window_bounds = array<i64: 3, 3, 128, 256>}, {pipeline_mode = #tpu.pipeline_mode<synchronous>, transform_indices = @transform_2, window_bounds = array<i64: 1, 256>}, {transform_indices = @transform_3, window_bounds = array<i64: 1, 4, 4, 256>}]} {
    %c0 = arith.constant 0 : index
    %c0_0 = arith.constant 0 : index
    %0 = vector.load %arg3[%c0, %c0_0] : memref<1x256xf32, #tpu.memory_space<vmem>>, vector<1x256xf32>
    %c0_i32 = arith.constant 0 : i32
    %c4_i32 = arith.constant 4 : i32
    %1 = arith.addi %c0_i32, %c4_i32 : i32
    %c1_i32 = arith.constant 1 : i32
    scf.for %arg5 = %c0_i32 to %1 step %c1_i32  : i32 {
      %c1_i32_2 = arith.constant 1 : i32
      %2 = arith.muli %arg5, %c1_i32_2 : i32
      %c0_i32_3 = arith.constant 0 : i32
      %3 = arith.addi %c0_i32_3, %2 : i32
      %cst = arith.constant 0.000000e+00 : f32
      %4 = vector.broadcast %cst : f32 to vector<4x256xf32>
      %c0_i32_4 = arith.constant 0 : i32
      %5 = arith.addi %3, %c0_i32_4 : i32
      %c0_5 = arith.constant 0 : index
      %c0_6 = arith.constant 0 : index
      %6 = arith.index_cast %5 : i32 to index
      %c0_7 = arith.constant 0 : index
      %c0_8 = arith.constant 0 : index
      %7 = vector.load %arg1[%c0_5, %c0_6, %6, %c0_7, %c0_8] : memref<1x4x5x5x128xf32, #tpu.memory_space<vmem>>, vector<1x1x1x4x128xf32>
      %8 = vector.shape_cast %7 : vector<1x1x1x4x128xf32> to vector<1x4x128xf32>
      %9 = vector.shape_cast %8 : vector<1x4x128xf32> to vector<4x128xf32>
      %c0_9 = arith.constant 0 : index
      %c0_10 = arith.constant 0 : index
      %c0_11 = arith.constant 0 : index
      %c0_12 = arith.constant 0 : index
      %10 = vector.load %arg2[%c0_9, %c0_10, %c0_11, %c0_12] : memref<3x3x128x256xf32, #tpu.memory_space<vmem>>, vector<1x1x128x256xf32>
      %11 = vector.shape_cast %10 : vector<1x1x128x256xf32> to vector<128x256xf32>
      %cst_13 = arith.constant dense<0.000000e+00> : vector<4x256xf32>
      %12 = tpu.matmul %9, %11, %cst_13 {dimension_numbers = #tpu.dot_dimension_numbers<[1], [0], [0], [1], [0, 0, 1, 1], [], []>} : vector<4x128xf32>, vector<128x256xf32>, vector<4x256xf32> -> vector<4x256xf32>
      %13 = arith.addf %4, %12 : vector<4x256xf32>
      %c0_i32_14 = arith.constant 0 : i32
      %14 = arith.addi %3, %c0_i32_14 : i32
      %c0_15 = arith.constant 0 : index
      %c1 = arith.constant 1 : index
      %15 = arith.index_cast %14 : i32 to index
      %c0_16 = arith.constant 0 : index
      %c0_17 = arith.constant 0 : index
      %16 = vector.load %arg1[%c0_15, %c1, %15, %c0_16, %c0_17] : memref<1x4x5x5x128xf32, #tpu.memory_space<vmem>>, vector<1x1x1x4x128xf32>
      %17 = vector.shape_cast %16 : vector<1x1x1x4x128xf32> to vector<1x4x128xf32>
      %18 = vector.shape_cast %17 : vector<1x4x128xf32> to vector<4x128xf32>
      %c0_18 = arith.constant 0 : index
      %c1_19 = arith.constant 1 : index
      %c0_20 = arith.constant 0 : index
      %c0_21 = arith.constant 0 : index
      %19 = vector.load %arg2[%c0_18, %c1_19, %c0_20, %c0_21] : memref<3x3x128x256xf32, #tpu.memory_space<vmem>>, vector<1x1x128x256xf32>
      %20 = vector.shape_cast %19 : vector<1x1x128x256xf32> to vector<128x256xf32>
      %cst_22 = arith.constant dense<0.000000e+00> : vector<4x256xf32>
      %21 = tpu.matmul %18, %20, %cst_22 {dimension_numbers = #tpu.dot_dimension_numbers<[1], [0], [0], [1], [0, 0, 1, 1], [], []>} : vector<4x128xf32>, vector<128x256xf32>, vector<4x256xf32> -> vector<4x256xf32>
      %22 = arith.addf %13, %21 : vector<4x256xf32>
      %c0_i32_23 = arith.constant 0 : i32
      %23 = arith.addi %3, %c0_i32_23 : i32
      %c0_24 = arith.constant 0 : index
      %c0_25 = arith.constant 0 : index
      %24 = arith.index_cast %23 : i32 to index
      %c1_26 = arith.constant 1 : index
      %c0_27 = arith.constant 0 : index
      %25 = vector.load %arg1[%c0_24, %c0_25, %24, %c1_26, %c0_27] : memref<1x4x5x5x128xf32, #tpu.memory_space<vmem>>, vector<1x1x1x4x128xf32>
      %26 = vector.shape_cast %25 : vector<1x1x1x4x128xf32> to vector<1x4x128xf32>
      %27 = vector.shape_cast %26 : vector<1x4x128xf32> to vector<4x128xf32>
      %c0_28 = arith.constant 0 : index
      %c2 = arith.constant 2 : index
      %c0_29 = arith.constant 0 : index
      %c0_30 = arith.constant 0 : index
      %28 = vector.load %arg2[%c0_28, %c2, %c0_29, %c0_30] : memref<3x3x128x256xf32, #tpu.memory_space<vmem>>, vector<1x1x128x256xf32>
      %29 = vector.shape_cast %28 : vector<1x1x128x256xf32> to vector<128x256xf32>
      %cst_31 = arith.constant dense<0.000000e+00> : vector<4x256xf32>
      %30 = tpu.matmul %27, %29, %cst_31 {dimension_numbers = #tpu.dot_dimension_numbers<[1], [0], [0], [1], [0, 0, 1, 1], [], []>} : vector<4x128xf32>, vector<128x256xf32>, vector<4x256xf32> -> vector<4x256xf32>
      %31 = arith.addf %22, %30 : vector<4x256xf32>
      %c0_i32_32 = arith.constant 0 : i32
      %32 = arith.addi %3, %c0_i32_32 : i32
      %c0_33 = arith.constant 0 : index
      %c2_34 = arith.constant 2 : index
      %33 = arith.index_cast %32 : i32 to index
      %c0_35 = arith.constant 0 : index
      %c0_36 = arith.constant 0 : index
      %34 = vector.load %arg1[%c0_33, %c2_34, %33, %c0_35, %c0_36] : memref<1x4x5x5x128xf32, #tpu.memory_space<vmem>>, vector<1x1x1x4x128xf32>
      %35 = vector.shape_cast %34 : vector<1x1x1x4x128xf32> to vector<1x4x128xf32>
      %36 = vector.shape_cast %35 : vector<1x4x128xf32> to vector<4x128xf32>
      %c1_37 = arith.constant 1 : index
      %c0_38 = arith.constant 0 : index
      %c0_39 = arith.constant 0 : index
      %c0_40 = arith.constant 0 : index
      %37 = vector.load %arg2[%c1_37, %c0_38, %c0_39, %c0_40] : memref<3x3x128x256xf32, #tpu.memory_space<vmem>>, vector<1x1x128x256xf32>
      %38 = vector.shape_cast %37 : vector<1x1x128x256xf32> to vector<128x256xf32>
      %cst_41 = arith.constant dense<0.000000e+00> : vector<4x256xf32>
      %39 = tpu.matmul %36, %38, %cst_41 {dimension_numbers = #tpu.dot_dimension_numbers<[1], [0], [0], [1], [0, 0, 1, 1], [], []>} : vector<4x128xf32>, vector<128x256xf32>, vector<4x256xf32> -> vector<4x256xf32>
      %40 = arith.addf %31, %39 : vector<4x256xf32>
      %c0_i32_42 = arith.constant 0 : i32
      %41 = arith.addi %3, %c0_i32_42 : i32
      %c0_43 = arith.constant 0 : index
      %c3 = arith.constant 3 : index
      %42 = arith.index_cast %41 : i32 to index
      %c0_44 = arith.constant 0 : index
      %c0_45 = arith.constant 0 : index
      %43 = vector.load %arg1[%c0_43, %c3, %42, %c0_44, %c0_45] : memref<1x4x5x5x128xf32, #tpu.memory_space<vmem>>, vector<1x1x1x4x128xf32>
      %44 = vector.shape_cast %43 : vector<1x1x1x4x128xf32> to vector<1x4x128xf32>
      %45 = vector.shape_cast %44 : vector<1x4x128xf32> to vector<4x128xf32>
      %c1_46 = arith.constant 1 : index
      %c1_47 = arith.constant 1 : index
      %c0_48 = arith.constant 0 : index
      %c0_49 = arith.constant 0 : index
      %46 = vector.load %arg2[%c1_46, %c1_47, %c0_48, %c0_49] : memref<3x3x128x256xf32, #tpu.memory_space<vmem>>, vector<1x1x128x256xf32>
      %47 = vector.shape_cast %46 : vector<1x1x128x256xf32> to vector<128x256xf32>
      %cst_50 = arith.constant dense<0.000000e+00> : vector<4x256xf32>
      %48 = tpu.matmul %45, %47, %cst_50 {dimension_numbers = #tpu.dot_dimension_numbers<[1], [0], [0], [1], [0, 0, 1, 1], [], []>} : vector<4x128xf32>, vector<128x256xf32>, vector<4x256xf32> -> vector<4x256xf32>
      %49 = arith.addf %40, %48 : vector<4x256xf32>
      %c0_i32_51 = arith.constant 0 : i32
      %50 = arith.addi %3, %c0_i32_51 : i32
      %c0_52 = arith.constant 0 : index
      %c2_53 = arith.constant 2 : index
      %51 = arith.index_cast %50 : i32 to index
      %c1_54 = arith.constant 1 : index
      %c0_55 = arith.constant 0 : index
      %52 = vector.load %arg1[%c0_52, %c2_53, %51, %c1_54, %c0_55] : memref<1x4x5x5x128xf32, #tpu.memory_space<vmem>>, vector<1x1x1x4x128xf32>
      %53 = vector.shape_cast %52 : vector<1x1x1x4x128xf32> to vector<1x4x128xf32>
      %54 = vector.shape_cast %53 : vector<1x4x128xf32> to vector<4x128xf32>
      %c1_56 = arith.constant 1 : index
      %c2_57 = arith.constant 2 : index
      %c0_58 = arith.constant 0 : index
      %c0_59 = arith.constant 0 : index
      %55 = vector.load %arg2[%c1_56, %c2_57, %c0_58, %c0_59] : memref<3x3x128x256xf32, #tpu.memory_space<vmem>>, vector<1x1x128x256xf32>
      %56 = vector.shape_cast %55 : vector<1x1x128x256xf32> to vector<128x256xf32>
      %cst_60 = arith.constant dense<0.000000e+00> : vector<4x256xf32>
      %57 = tpu.matmul %54, %56, %cst_60 {dimension_numbers = #tpu.dot_dimension_numbers<[1], [0], [0], [1], [0, 0, 1, 1], [], []>} : vector<4x128xf32>, vector<128x256xf32>, vector<4x256xf32> -> vector<4x256xf32>
      %58 = arith.addf %49, %57 : vector<4x256xf32>
      %c1_i32_61 = arith.constant 1 : i32
      %59 = arith.addi %3, %c1_i32_61 : i32
      %c0_62 = arith.constant 0 : index
      %c0_63 = arith.constant 0 : index
      %60 = arith.index_cast %59 : i32 to index
      %c0_64 = arith.constant 0 : index
      %c0_65 = arith.constant 0 : index
      %61 = vector.load %arg1[%c0_62, %c0_63, %60, %c0_64, %c0_65] : memref<1x4x5x5x128xf32, #tpu.memory_space<vmem>>, vector<1x1x1x4x128xf32>
      %62 = vector.shape_cast %61 : vector<1x1x1x4x128xf32> to vector<1x4x128xf32>
      %63 = vector.shape_cast %62 : vector<1x4x128xf32> to vector<4x128xf32>
      %c2_66 = arith.constant 2 : index
      %c0_67 = arith.constant 0 : index
      %c0_68 = arith.constant 0 : index
      %c0_69 = arith.constant 0 : index
      %64 = vector.load %arg2[%c2_66, %c0_67, %c0_68, %c0_69] : memref<3x3x128x256xf32, #tpu.memory_space<vmem>>, vector<1x1x128x256xf32>
      %65 = vector.shape_cast %64 : vector<1x1x128x256xf32> to vector<128x256xf32>
      %cst_70 = arith.constant dense<0.000000e+00> : vector<4x256xf32>
      %66 = tpu.matmul %63, %65, %cst_70 {dimension_numbers = #tpu.dot_dimension_numbers<[1], [0], [0], [1], [0, 0, 1, 1], [], []>} : vector<4x128xf32>, vector<128x256xf32>, vector<4x256xf32> -> vector<4x256xf32>
      %67 = arith.addf %58, %66 : vector<4x256xf32>
      %c1_i32_71 = arith.constant 1 : i32
      %68 = arith.addi %3, %c1_i32_71 : i32
      %c0_72 = arith.constant 0 : index
      %c1_73 = arith.constant 1 : index
      %69 = arith.index_cast %68 : i32 to index
      %c0_74 = arith.constant 0 : index
      %c0_75 = arith.constant 0 : index
      %70 = vector.load %arg1[%c0_72, %c1_73, %69, %c0_74, %c0_75] : memref<1x4x5x5x128xf32, #tpu.memory_space<vmem>>, vector<1x1x1x4x128xf32>
      %71 = vector.shape_cast %70 : vector<1x1x1x4x128xf32> to vector<1x4x128xf32>
      %72 = vector.shape_cast %71 : vector<1x4x128xf32> to vector<4x128xf32>
      %c2_76 = arith.constant 2 : index
      %c1_77 = arith.constant 1 : index
      %c0_78 = arith.constant 0 : index
      %c0_79 = arith.constant 0 : index
      %73 = vector.load %arg2[%c2_76, %c1_77, %c0_78, %c0_79] : memref<3x3x128x256xf32, #tpu.memory_space<vmem>>, vector<1x1x128x256xf32>
      %74 = vector.shape_cast %73 : vector<1x1x128x256xf32> to vector<128x256xf32>
      %cst_80 = arith.constant dense<0.000000e+00> : vector<4x256xf32>
      %75 = tpu.matmul %72, %74, %cst_80 {dimension_numbers = #tpu.dot_dimension_numbers<[1], [0], [0], [1], [0, 0, 1, 1], [], []>} : vector<4x128xf32>, vector<128x256xf32>, vector<4x256xf32> -> vector<4x256xf32>
      %76 = arith.addf %67, %75 : vector<4x256xf32>
      %c1_i32_81 = arith.constant 1 : i32
      %77 = arith.addi %3, %c1_i32_81 : i32
      %c0_82 = arith.constant 0 : index
      %c0_83 = arith.constant 0 : index
      %78 = arith.index_cast %77 : i32 to index
      %c1_84 = arith.constant 1 : index
      %c0_85 = arith.constant 0 : index
      %79 = vector.load %arg1[%c0_82, %c0_83, %78, %c1_84, %c0_85] : memref<1x4x5x5x128xf32, #tpu.memory_space<vmem>>, vector<1x1x1x4x128xf32>
      %80 = vector.shape_cast %79 : vector<1x1x1x4x128xf32> to vector<1x4x128xf32>
      %81 = vector.shape_cast %80 : vector<1x4x128xf32> to vector<4x128xf32>
      %c2_86 = arith.constant 2 : index
      %c2_87 = arith.constant 2 : index
      %c0_88 = arith.constant 0 : index
      %c0_89 = arith.constant 0 : index
      %82 = vector.load %arg2[%c2_86, %c2_87, %c0_88, %c0_89] : memref<3x3x128x256xf32, #tpu.memory_space<vmem>>, vector<1x1x128x256xf32>
      %83 = vector.shape_cast %82 : vector<1x1x128x256xf32> to vector<128x256xf32>
      %cst_90 = arith.constant dense<0.000000e+00> : vector<4x256xf32>
      %84 = tpu.matmul %81, %83, %cst_90 {dimension_numbers = #tpu.dot_dimension_numbers<[1], [0], [0], [1], [0, 0, 1, 1], [], []>} : vector<4x128xf32>, vector<128x256xf32>, vector<4x256xf32> -> vector<4x256xf32>
      %85 = arith.addf %76, %84 : vector<4x256xf32>
      %86 = vector.broadcast %0 : vector<1x256xf32> to vector<4x256xf32>
      %87 = arith.addf %85, %86 : vector<4x256xf32>
      %cst_91 = arith.constant 0.000000e+00 : f32
      %88 = vector.broadcast %cst_91 : f32 to vector<4x256xf32>
      %89 = arith.maximumf %87, %88 : vector<4x256xf32>
      %90 = vector.shape_cast %89 : vector<4x256xf32> to vector<1x4x256xf32>
      %c0_92 = arith.constant 0 : index
      %91 = arith.index_cast %3 : i32 to index
      %c0_93 = arith.constant 0 : index
      %c0_94 = arith.constant 0 : index
      %92 = vector.load %arg4[%c0_92, %91, %c0_93, %c0_94] : memref<1x4x4x256xf32, #tpu.memory_space<vmem>>, vector<1x1x4x256xf32>
      %93 = vector.shape_cast %92 : vector<1x1x4x256xf32> to vector<1x4x256xf32>
      %94 = vector.shape_cast %90 : vector<1x4x256xf32> to vector<1x1x4x256xf32>
      tpu.vector_store %arg4[%c0_92, %91, %c0_93, %c0_94], %94 {strides = array<i32>} : memref<1x4x4x256xf32, #tpu.memory_space<vmem>>, vector<1x1x4x256xf32>,
    }
    %c4_i32_1 = arith.constant 4 : i32
    return
  }
  func.func @transform_0(%arg0: i32) -> (i32, i32, i32, i32, i32) {
    %c0_i32 = arith.constant 0 : i32
    %c0_i32_0 = arith.constant 0 : i32
    %c0_i32_1 = arith.constant 0 : i32
    %c0_i32_2 = arith.constant 0 : i32
    %c0_i32_3 = arith.constant 0 : i32
    return %arg0, %c0_i32, %c0_i32_0, %c0_i32_1, %c0_i32_2 : i32, i32, i32, i32, i32
  }
  func.func @transform_1(%arg0: i32) -> (i32, i32, i32, i32) {
    %c0_i32 = arith.constant 0 : i32
    %c0_i32_0 = arith.constant 0 : i32
    %c0_i32_1 = arith.constant 0 : i32
    %c0_i32_2 = arith.constant 0 : i32
    %c0_i32_3 = arith.constant 0 : i32
    return %c0_i32, %c0_i32_0, %c0_i32_1, %c0_i32_2 : i32, i32, i32, i32
  }
  func.func @transform_2(%arg0: i32) -> (i32, i32) {
    %c0_i32 = arith.constant 0 : i32
    %c0_i32_0 = arith.constant 0 : i32
    %c0_i32_1 = arith.constant 0 : i32
    return %c0_i32, %c0_i32_0 : i32, i32
  }
  func.func @transform_3(%arg0: i32) -> (i32, i32, i32, i32) {
    %c0_i32 = arith.constant 0 : i32
    %c0_i32_0 = arith.constant 0 : i32
    %c0_i32_1 = arith.constant 0 : i32
    %c0_i32_2 = arith.constant 0 : i32
    return %arg0, %c0_i32, %c0_i32_0, %c0_i32_1 : i32, i32, i32, i32
  }
}

module attributes {stable_mosaic.version = 11 : i64} {
  func.func @_avgpool_2x2_tokens_kernel(%arg0: i32, %arg1: memref<1x4x4x256xf32, #tpu.memory_space<vmem>>, %arg2: memref<1x4x256xf32, #tpu.memory_space<vmem>>) attributes {dimension_semantics = [#tpu.dimension_semantics<parallel>], iteration_bounds = array<i64: 16>, scalar_prefetch = 0 : i64, scratch_operands = 0 : i64, tpu.core_type = #tpu.core_type<tc>, window_params = [{transform_indices = @transform_0, window_bounds = array<i64: 1, 4, 4, 256>}, {transform_indices = @transform_1, window_bounds = array<i64: 1, 4, 256>}]} {
    %c0 = arith.constant 0 : index
    %c0_0 = arith.constant 0 : index
    %c0_1 = arith.constant 0 : index
    %c0_2 = arith.constant 0 : index
    %0 = vector.load %arg1[%c0, %c0_0, %c0_1, %c0_2] : memref<1x4x4x256xf32, #tpu.memory_space<vmem>>, vector<1x2x2x256xf32>
    %1 = vector.shape_cast %0 : vector<1x2x2x256xf32> to vector<2x2x256xf32>
    %cst = arith.constant dense<0.000000e+00> : vector<2x256xf32>
    %2 = vector.multi_reduction <add>, %1, %cst [0] : vector<2x2x256xf32> to vector<2x256xf32>
    %cst_3 = arith.constant dense<0.000000e+00> : vector<256xf32>
    %3 = vector.multi_reduction <add>, %2, %cst_3 [0] : vector<2x256xf32> to vector<256xf32>
    %4 = vector.shape_cast %3 : vector<256xf32> to vector<1x256xf32>
    %cst_4 = arith.constant 2.500000e-01 : f32
    %5 = vector.broadcast %cst_4 : f32 to vector<1x256xf32>
    %6 = arith.mulf %4, %5 : vector<1x256xf32>
    %c0_5 = arith.constant 0 : index
    %c0_6 = arith.constant 0 : index
    %c0_7 = arith.constant 0 : index
    %7 = vector.load %arg2[%c0_5, %c0_6, %c0_7] : memref<1x4x256xf32, #tpu.memory_space<vmem>>, vector<1x1x256xf32>
    %8 = vector.shape_cast %7 : vector<1x1x256xf32> to vector<1x256xf32>
    %9 = vector.shape_cast %6 : vector<1x256xf32> to vector<1x1x256xf32>
    tpu.vector_store %arg2[%c0_5, %c0_6, %c0_7], %9 {strides = array<i32>} : memref<1x4x256xf32, #tpu.memory_space<vmem>>, vector<1x1x256xf32>,
    %c0_8 = arith.constant 0 : index
    %c0_9 = arith.constant 0 : index
    %c2 = arith.constant 2 : index
    %c0_10 = arith.constant 0 : index
    %10 = vector.load %arg1[%c0_8, %c0_9, %c2, %c0_10] : memref<1x4x4x256xf32, #tpu.memory_space<vmem>>, vector<1x2x2x256xf32>
    %11 = vector.shape_cast %10 : vector<1x2x2x256xf32> to vector<2x2x256xf32>
    %cst_11 = arith.constant dense<0.000000e+00> : vector<2x256xf32>
    %12 = vector.multi_reduction <add>, %11, %cst_11 [0] : vector<2x2x256xf32> to vector<2x256xf32>
    %cst_12 = arith.constant dense<0.000000e+00> : vector<256xf32>
    %13 = vector.multi_reduction <add>, %12, %cst_12 [0] : vector<2x256xf32> to vector<256xf32>
    %14 = vector.shape_cast %13 : vector<256xf32> to vector<1x256xf32>
    %cst_13 = arith.constant 2.500000e-01 : f32
    %15 = vector.broadcast %cst_13 : f32 to vector<1x256xf32>
    %16 = arith.mulf %14, %15 : vector<1x256xf32>
    %c0_14 = arith.constant 0 : index
    %c1 = arith.constant 1 : index
    %c0_15 = arith.constant 0 : index
    %17 = vector.load %arg2[%c0_14, %c1, %c0_15] : memref<1x4x256xf32, #tpu.memory_space<vmem>>, vector<1x1x256xf32>
    %18 = vector.shape_cast %17 : vector<1x1x256xf32> to vector<1x256xf32>
    %19 = vector.shape_cast %16 : vector<1x256xf32> to vector<1x1x256xf32>
    tpu.vector_store %arg2[%c0_14, %c1, %c0_15], %19 {strides = array<i32>} : memref<1x4x256xf32, #tpu.memory_space<vmem>>, vector<1x1x256xf32>,
    %c0_16 = arith.constant 0 : index
    %c2_17 = arith.constant 2 : index
    %c0_18 = arith.constant 0 : index
    %c0_19 = arith.constant 0 : index
    %20 = vector.load %arg1[%c0_16, %c2_17, %c0_18, %c0_19] : memref<1x4x4x256xf32, #tpu.memory_space<vmem>>, vector<1x2x2x256xf32>
    %21 = vector.shape_cast %20 : vector<1x2x2x256xf32> to vector<2x2x256xf32>
    %cst_20 = arith.constant dense<0.000000e+00> : vector<2x256xf32>
    %22 = vector.multi_reduction <add>, %21, %cst_20 [0] : vector<2x2x256xf32> to vector<2x256xf32>
    %cst_21 = arith.constant dense<0.000000e+00> : vector<256xf32>
    %23 = vector.multi_reduction <add>, %22, %cst_21 [0] : vector<2x256xf32> to vector<256xf32>
    %24 = vector.shape_cast %23 : vector<256xf32> to vector<1x256xf32>
    %cst_22 = arith.constant 2.500000e-01 : f32
    %25 = vector.broadcast %cst_22 : f32 to vector<1x256xf32>
    %26 = arith.mulf %24, %25 : vector<1x256xf32>
    %c0_23 = arith.constant 0 : index
    %c2_24 = arith.constant 2 : index
    %c0_25 = arith.constant 0 : index
    %27 = vector.load %arg2[%c0_23, %c2_24, %c0_25] : memref<1x4x256xf32, #tpu.memory_space<vmem>>, vector<1x1x256xf32>
    %28 = vector.shape_cast %27 : vector<1x1x256xf32> to vector<1x256xf32>
    %29 = vector.shape_cast %26 : vector<1x256xf32> to vector<1x1x256xf32>
    tpu.vector_store %arg2[%c0_23, %c2_24, %c0_25], %29 {strides = array<i32>} : memref<1x4x256xf32, #tpu.memory_space<vmem>>, vector<1x1x256xf32>,
    %c0_26 = arith.constant 0 : index
    %c2_27 = arith.constant 2 : index
    %c2_28 = arith.constant 2 : index
    %c0_29 = arith.constant 0 : index
    %30 = vector.load %arg1[%c0_26, %c2_27, %c2_28, %c0_29] : memref<1x4x4x256xf32, #tpu.memory_space<vmem>>, vector<1x2x2x256xf32>
    %31 = vector.shape_cast %30 : vector<1x2x2x256xf32> to vector<2x2x256xf32>
    %cst_30 = arith.constant dense<0.000000e+00> : vector<2x256xf32>
    %32 = vector.multi_reduction <add>, %31, %cst_30 [0] : vector<2x2x256xf32> to vector<2x256xf32>
    %cst_31 = arith.constant dense<0.000000e+00> : vector<256xf32>
    %33 = vector.multi_reduction <add>, %32, %cst_31 [0] : vector<2x256xf32> to vector<256xf32>
    %34 = vector.shape_cast %33 : vector<256xf32> to vector<1x256xf32>
    %cst_32 = arith.constant 2.500000e-01 : f32
    %35 = vector.broadcast %cst_32 : f32 to vector<1x256xf32>
    %36 = arith.mulf %34, %35 : vector<1x256xf32>
    %c0_33 = arith.constant 0 : index
    %c3 = arith.constant 3 : index
    %c0_34 = arith.constant 0 : index
    %37 = vector.load %arg2[%c0_33, %c3, %c0_34] : memref<1x4x256xf32, #tpu.memory_space<vmem>>, vector<1x1x256xf32>
    %38 = vector.shape_cast %37 : vector<1x1x256xf32> to vector<1x256xf32>
    %39 = vector.shape_cast %36 : vector<1x256xf32> to vector<1x1x256xf32>
    tpu.vector_store %arg2[%c0_33, %c3, %c0_34], %39 {strides = array<i32>} : memref<1x4x256xf32, #tpu.memory_space<vmem>>, vector<1x1x256xf32>,
    return
  }
  func.func @transform_0(%arg0: i32) -> (i32, i32, i32, i32) {
    %c0_i32 = arith.constant 0 : i32
    %c0_i32_0 = arith.constant 0 : i32
    %c0_i32_1 = arith.constant 0 : i32
    %c0_i32_2 = arith.constant 0 : i32
    return %arg0, %c0_i32, %c0_i32_0, %c0_i32_1 : i32, i32, i32, i32
  }
  func.func @transform_1(%arg0: i32) -> (i32, i32, i32) {
    %c0_i32 = arith.constant 0 : i32
    %c0_i32_0 = arith.constant 0 : i32
    %c0_i32_1 = arith.constant 0 : i32
    return %arg0, %c0_i32, %c0_i32_0 : i32, i32, i32
  }
}

</mosaic_0001>

<llo_original>
// kernel: simple_view_encoder.5
$region0: #{simple_view_encoder.5}
  #allocation0 [shape = 'u32[]', space=smem, size = 0x4, offset = 0x4, fixed_abs, tag = 'smem constant byte address 0x4 - core index']
  #allocation1 [shape = 'u32[144,128]{1,0:T(1,128)}', space=vmem, size = 0x12000, scoped, tag = 'internal scratch']
  %s0 = inlined_call_operand.vmem [shape: f32[16,4,33,33,3], index: 0, kind: input, shape index: {}]
  %s1 = inlined_call_operand.vmem [shape: f32[3,3,3,32], index: 1, kind: input, shape index: {}]
  %s2 = inlined_call_operand.vmem [shape: f32[1,32], index: 2, kind: input, shape index: {}]
  %s3 = inlined_call_operand.vmem [shape: f32[16,32,32,32], index: 3, kind: output, shape index: {}]
  %s4 = sld [smem:[#allocation0]]
  $region52: #{simple_view_encoder.5} parent=0
    _
  %s6 = ssub.s32 1, %s4
  %s7 = scalar_select 0, %s6, %s4
  loop: start=0, step=1, limit=18
  $region2: #{simple_view_encoder.5} parent=0 // loop_pre_header
    _
  $region3: #{simple_view_encoder.5} parent=0 // loop_header
    %s9 = sphi 0, %s13
    %p10 = scmp.ge.s32.totalorder %s9, 18
    %s19 = sphi 0, %s21
    %s22 = sphi 0, %s19
    %s23 = sphi 0, %s22
    %s39 = sphi 0, %s23
    %s43 = sphi 0, %s43
    %s45 = sphi 0, %s43
    %s46 = sphi 0, %s45
    %s60 = sphi 0, %s46
    %s64 = sphi 0, %s64
    %s66 = sphi 0, %s64
    %s67 = sphi 0, %s66
    %s81 = sphi 0, %s67
    %s87 = sphi 0, %s89
    %s90 = sphi 0, %s87
    %s91 = sphi 0, %s90
    %s107 = sphi 0, %s91
  $region4: #{simple_view_encoder.5} parent=0 // loop_header_branch
    %12 = sbr.rel (%p10) target = $region8
  $region5: #{simple_view_encoder.5} parent=0 // loop_body
    %s14 = ssub.s32 %s9, 1
    %s15 = ssub.s32 %s9, 2
    %s16 = sadd.s32 %s9, 1
    %s17 = ssub.s32 %s9, %s16
    %p18 = scmp.eq.s32.totalorder %s17, 0
    %s20 = sadd.s32 %s19, 1
    %s21 = scalar_select %p18, %s19, %s20
    %p24 = pneg %p18
    %p25 = scmp.eq.s32.totalorder %s9, 15
    %p26 = por %p24, %p25
    %p27 = scmp.ne.s32.totalorder %s19, %s22
    %p28 = scmp.eq.s32.totalorder %s9, 0
    %p29 = por %p27, %p28
    %p30 = scmp.ne.s32.totalorder %s19, %s22
    %p31 = scmp.eq.s32.totalorder %s14, 15
    %p32 = por %p30, %p31
    %p33 = scmp.ne.s32.totalorder %s22, %s23
    %p34 = scmp.eq.s32.totalorder %s14, 0
    %p35 = por %p33, %p34
    %p36 = scmp.ne.s32.totalorder %s22, %s23
    %p37 = scmp.eq.s32.totalorder %s15, 15
    %p38 = por %p36, %p37
    %p40 = scmp.ne.s32.totalorder %s23, %s39
    %p41 = scmp.eq.s32.totalorder %s15, 0
    %p42 = por %p40, %p41
    %s44 = sadd.s32 %s43, 1
    %p47 = scmp.eq.s32.totalorder %s9, 15
    %p48 = scmp.ne.s32.totalorder %s43, %s45
    %p49 = scmp.eq.s32.totalorder %s9, 0
    %p50 = por %p48, %p49
    %p51 = scmp.ne.s32.totalorder %s43, %s45
    %p52 = scmp.eq.s32.totalorder %s14, 15
    %p53 = por %p51, %p52
    %p54 = scmp.ne.s32.totalorder %s45, %s46
    %p55 = scmp.eq.s32.totalorder %s14, 0
    %p56 = por %p54, %p55
    %p57 = scmp.ne.s32.totalorder %s45, %s46
    %p58 = scmp.eq.s32.totalorder %s15, 15
    %p59 = por %p57, %p58
    %p61 = scmp.ne.s32.totalorder %s46, %s60
    %p62 = scmp.eq.s32.totalorder %s15, 0
    %p63 = por %p61, %p62
    %s65 = sadd.s32 %s64, 1
    %p68 = scmp.eq.s32.totalorder %s9, 15
    %p69 = scmp.ne.s32.totalorder %s64, %s66
    %p70 = scmp.eq.s32.totalorder %s9, 0
    %p71 = por %p69, %p70
    %p72 = scmp.ne.s32.totalorder %s64, %s66
    %p73 = scmp.eq.s32.totalorder %s14, 15
    %p74 = por %p72, %p73
    %p75 = scmp.ne.s32.totalorder %s66, %s67
    %p76 = scmp.eq.s32.totalorder %s14, 0
    %p77 = por %p75, %p76
    %p78 = scmp.ne.s32.totalorder %s66, %s67
    %p79 = scmp.eq.s32.totalorder %s15, 15
    %p80 = por %p78, %p79
    %p82 = scmp.ne.s32.totalorder %s67, %s81
    %p83 = scmp.eq.s32.totalorder %s15, 0
    %p84 = por %p82, %p83
    %s85 = ssub.s32 %s9, %s16
    %p86 = scmp.eq.s32.totalorder %s85, 0
    %s88 = sadd.s32 %s87, 1
    %s89 = scalar_select %p86, %s87, %s88
    %p92 = pneg %p86
    %p93 = scmp.eq.s32.totalorder %s9, 15
    %p94 = por %p92, %p93
    %p95 = scmp.ne.s32.totalorder %s87, %s90
    %p96 = scmp.eq.s32.totalorder %s9, 0
    %p97 = por %p95, %p96
    %p98 = scmp.ne.s32.totalorder %s87, %s90
    %p99 = scmp.eq.s32.totalorder %s14, 15
    %p100 = por %p98, %p99
    %p101 = scmp.ne.s32.totalorder %s90, %s91
    %p102 = scmp.eq.s32.totalorder %s14, 0
    %p103 = por %p101, %p102
    %p104 = scmp.ne.s32.totalorder %s90, %s91
    %p105 = scmp.eq.s32.totalorder %s15, 15
    %p106 = por %p104, %p105
    %p108 = scmp.ne.s32.totalorder %s91, %s107
    %p109 = scmp.eq.s32.totalorder %s15, 0
    %p110 = por %p108, %p109
    %p111 = scmp.le.s32.totalorder 1, %s9
    %p112 = scmp.lt.s32.totalorder %s9, 17
    %p113 = pnand %p111, %p112
    %p114 = pneg %p113
    // Predicated region
    $region9: #{simple_view_encoder.5} parent=5 // pred_check
      _
    $region10: #{simple_view_encoder.5} parent=5 // pred_check_branch
      %116 = sbr.rel (%p113) target = $region12
    $region11: #{simple_view_encoder.5} parent=5 // pred_region
      %s117 = ssub.s32 %s9, 1
      // Predicated region
      $region13: #{simple_view_encoder.5} parent=11 // pred_check
        %p118 = pneg %p56
      $region14: #{simple_view_encoder.5} parent=11 // pred_check_branch
        %120 = sbr.rel (%p118) target = $region16
      $region15: #{simple_view_encoder.5} parent=11 // pred_region
        _
      $region16: #{simple_view_encoder.5} parent=11 // pred_fallthru
        _
      // Predicated region
      $region17: #{simple_view_encoder.5} parent=11 // pred_check
        %p121 = pneg %p77
      $region18: #{simple_view_encoder.5} parent=11 // pred_check_branch
        %123 = sbr.rel (%p121) target = $region20
      $region19: #{simple_view_encoder.5} parent=11 // pred_region
        _
      $region20: #{simple_view_encoder.5} parent=11 // pred_fallthru
        _
    $region12: #{simple_view_encoder.5} parent=5 // pred_fallthru
      _
    %p124 = scmp.lt.s32.totalorder %s9, 16
    // Predicated region
    $region21: #{simple_view_encoder.5} parent=5 // pred_check
      %p125 = pneg %p124
    $region22: #{simple_view_encoder.5} parent=5 // pred_check_branch
      %127 = sbr.rel (%p125) target = $region24
    $region23: #{simple_view_encoder.5} parent=5 // pred_region
      // Predicated region
      $region25: #{simple_view_encoder.5} parent=23 // pred_check
        %p128 = pneg %p29
      $region26: #{simple_view_encoder.5} parent=23 // pred_check_branch
        %130 = sbr.rel (%p128) target = $region28
      $region27: #{simple_view_encoder.5} parent=23 // pred_region
        %p131 = scmp.lt.s32.totalorder %s9, 15
        %s132 = scalar_select %p131, %s9, 15
        %s133 = smul.addr %s132, 660
        %s134 = smul.addr %s133, 8
        %s135 = scalar_lea.vmem %s0, %s134
      $region28: #{simple_view_encoder.5} parent=23 // pred_fallthru
        _
    $region24: #{simple_view_encoder.5} parent=5 // pred_fallthru
      _
    %p136 = scmp.le.s32.totalorder 1, %s9
    %p137 = scmp.lt.s32.totalorder %s9, 17
    %p138 = pnand %p136, %p137
    %p139 = pneg %p138
    // Predicated region
    $region29: #{simple_view_encoder.5} parent=5 // pred_check
      _
    $region30: #{simple_view_encoder.5} parent=5 // pred_check_branch
      %141 = sbr.rel (%p138) target = $region32
    $region31: #{simple_view_encoder.5} parent=5 // pred_region
      %s142 = ssub.s32 %s9, 1
      %p143 = scmp.lt.s32.totalorder %s14, 15
      %s144 = scalar_select %p143, %s14, 15
      %s145 = smul.addr %s144, 660
      %s146 = smul.addr %s145, 8
      %s147 = scalar_lea.vmem %s0, %s146
      %p148 = pneg %p35
      %p149 = pneg %p32
      %p150 = pneg %p56
      %p151 = pneg %p53
      %p152 = pneg %p77
      %p153 = pneg %p74
      %p154 = pneg %p103
      %p155 = pneg %p100
      %p156 = scmp.lt.s32.totalorder %s14, 15
      %s157 = scalar_select %p156, %s14, 15
      %s158 = smul.addr %s157, 128
      %s159 = smul.addr %s158, 8
      %s160 = scalar_lea.vmem %s3, %s159
      %p161 = scmp.lt.s32.totalorder %s14, 15
      %s162 = scalar_select %p161, %s14, 15
      %s163 = smul.addr %s162, 660
      %s164 = smul.addr %s163, 8
      %s165 = scalar_lea.vmem %s0, %s164
      %p166 = scmp.lt.s32.totalorder %s14, 15
      %s167 = scalar_select %p166, %s14, 15
      %s168 = smul.addr %s167, 128
      %s169 = smul.addr %s168, 8
      %s170 = scalar_lea.vmem %s3, %s169
      %v171 = vld [vmem:[%s2] sm:$0x1]
      loop: start=0, step=1, limit=32
      $region33: #{simple_view_encoder.5} parent=31 // loop_pre_header
        _
      $region34: #{simple_view_encoder.5} parent=31 // loop_header
        %s173 = sphi 0, %s177
        %p174 = scmp.ge.s32.totalorder %s173, 32
      $region35: #{simple_view_encoder.5} parent=31 // loop_header_branch
        %176 = sbr.rel (%p174) target = $region39
      $region36: #{simple_view_encoder.5} parent=31 // loop_body
        %s178 = smul.u32 %s173, 40
        %s179 = scalar_lea.vmem %s165, %s178
        %v180 = vld [vmem:[%s179] sm:$0xff]
        %v181 = vld [vmem:[%s179 + $0x8] sm:$0xff]
        %v182 = vld [vmem:[%s179 + $0x10] sm:$0xff]
        %v183 = vld [vmem:[%s179 + $0x18] sm:$0xff]
        %v184 = vld [vmem:[%s1] sm:$0x7]
        %s185 = sadd.s32 %s178, 1320
        %s186 = scalar_lea.vmem %s165, %s185
        %v187 = vld [vmem:[%s186] sm:$0xff]
        %v188 = vld [vmem:[%s186 + $0x8] sm:$0xff]
        %v189 = vld [vmem:[%s186 + $0x10] sm:$0xff]
        %v190 = vld [vmem:[%s186 + $0x18] sm:$0xff]
        %s191 = scalar_lea.vmem %s1, 4
        %v192 = vld [vmem:[%s191] sm:$0x7]
        %vm193 = vcmask 23552
        %v195 = vsel %vm193, %v187, 0
        %v198 = vsel %vm193, %v188, 0
        %v201 = vsel %vm193, %v189, 0
        %v204 = vsel %vm193, %v190, 0
        %vm206 = vcmask 1042432
        %v208 = vsel %vm206, %v192, 0
        %210 = vmatprep.subr.mxu0 0.0
        %211 = vmatpush1.msra.mxu0 0.0
        %212 = vmatprep.subr.mxu0 0.0
        %213 = vmatpush1.msra.mxu0 0.0
        %214 = vmatprep.subr.mxu0 0.0
        %215 = vmatpush1.msra.mxu0 0.0
        %216 = vmatprep.subr.mxu0 0.0
        %217 = vmatpush1.msra.mxu0 0.0
        %218 = vmatprep.subr.mxu0 0.0
        %219 = vmatpush1.msra.mxu0 0.0
        %220 = vmatprep.subr.mxu0 0.0
        %221 = vmatpush1.msra.mxu0 0.0
        %222 = vmatprep.subr.mxu0 0.0
        %223 = vmatpush1.msra.mxu0 0.0
        %224 = vmatprep.subr.mxu0 0.0
        %225 = vmatpush1.msra.mxu0 0.0
        %226 = vmatprep.subr.mxu0 0.0
        %227 = vmatpush1.msra.mxu0 0.0
        %228 = vmatprep.subr.mxu0 0.0
        %229 = vmatpush1.msra.mxu0 0.0
        %230 = vmatprep.subr.mxu0 0.0
        %231 = vmatpush1.msra.mxu0 0.0
        %232 = vmatprep.subr.mxu0 0.0
        %233 = vmatpush1.msra.mxu0 0.0
        %234 = vmatprep.subr.mxu0 0.0
        %235 = vmatpush1.msra.mxu0 0.0
        %236 = vmatprep.subr.mxu0 0.0
        %237 = vmatpush1.msra.mxu0 0.0
        %238 = vmatprep.subr.mxu0 0.0
        %239 = vmatpush1.msra.mxu0 0.0
        %240 = vmatprep.subr.mxu0 0.0
        %241 = vmatpush1.msra.mxu0 %v208
        %242 = vmatprep.subr.mxu0 0.0
        %243 = vmatpush2.msra.mxu0 0.0
        %244 = vmatprep.subr.mxu0 0.0
        %245 = vmatpush2.msra.mxu0 0.0
        %246 = vmatprep.subr.mxu0 0.0
        %247 = vmatpush2.msra.mxu0 0.0
        %248 = vmatprep.subr.mxu0 0.0
        %249 = vmatpush2.msra.mxu0 0.0
        %250 = vmatprep.subr.mxu0 0.0
        %251 = vmatpush2.msra.mxu0 0.0
        %252 = vmatprep.subr.mxu0 0.0
        %253 = vmatpush2.msra.mxu0 0.0
        %254 = vmatprep.subr.mxu0 0.0
        %255 = vmatpush2.msra.mxu0 0.0
        %256 = vmatprep.subr.mxu0 0.0
        %257 = vmatpush2.msra.mxu0 0.0
        %258 = vmatprep.subr.mxu0 0.0
        %259 = vmatpush2.msra.mxu0 0.0
        %260 = vmatprep.subr.mxu0 0.0
        %261 = vmatpush2.msra.mxu0 0.0
        %262 = vmatprep.subr.mxu0 0.0
        %263 = vmatpush2.msra.mxu0 0.0
        %264 = vmatprep.subr.mxu0 0.0
        %265 = vmatpush2.msra.mxu0 0.0
        %266 = vmatprep.subr.mxu0 0.0
        %267 = vmatpush2.msra.mxu0 0.0
        %268 = vmatprep.subr.mxu0 0.0
        %269 = vmatpush2.msra.mxu0 0.0
        %270 = vmatprep.subr.mxu0 0.0
        %271 = vmatpush2.msra.mxu0 0.0
        %272 = vmatprep.subr.mxu0 0.0
        %273 = vmatpush2.msra.mxu0 0.0
        %274 = vmatprep.mubr.f32.mxu0 0.0
        %275 = vmatmul.mubr.f32.gmra.mxu0 %v195
        %v276 = vpop.f32.mrf.mxu0
        %v277 = vadd.f32 0.0, %v276
        %v278 = vpop.f32.mrf.mxu0
        %279 = vmatprep.mubr.f32.mxu0 0.0
        %280 = vmatmul.mubr.f32.gmra.mxu0 %v198
        %v281 = vpop.f32.mrf.mxu0
        %v282 = vadd.f32 0.0, %v281
        %v283 = vpop.f32.mrf.mxu0
        %284 = vmatprep.mubr.f32.mxu0 0.0
        %285 = vmatmul.mubr.f32.gmra.mxu0 %v201
        %v286 = vpop.f32.mrf.mxu0
        %v287 = vadd.f32 0.0, %v286
        %v288 = vpop.f32.mrf.mxu0
        %289 = vmatprep.mubr.f32.mxu0 0.0
        %290 = vmatmul.mubr.f32.gmra.mxu0 %v204
        %v291 = vpop.f32.mrf.mxu0
        %v292 = vadd.f32 0.0, %v291
        %v293 = vpop.f32.mrf.mxu0
        %294 = vdwg.mxu0
        %v296 = vsel %vm193, %v180, 0
        %v299 = vsel %vm193, %v181, 0
        %v302 = vsel %vm193, %v182, 0
        %v305 = vsel %vm193, %v183, 0
        %v308 = vsel %vm206, %v184, 0
        %310 = vmatprep.subr.mxu0 0.0
        %311 = vmatpush1.msra.mxu0 0.0
        %312 = vmatprep.subr.mxu0 0.0
        %313 = vmatpush1.msra.mxu0 0.0
        %314 = vmatprep.subr.mxu0 0.0
        %315 = vmatpush1.msra.mxu0 0.0
        %316 = vmatprep.subr.mxu0 0.0
        %317 = vmatpush1.msra.mxu0 0.0
        %318 = vmatprep.subr.mxu0 0.0
        %319 = vmatpush1.msra.mxu0 0.0
        %320 = vmatprep.subr.mxu0 0.0
        %321 = vmatpush1.msra.mxu0 0.0
        %322 = vmatprep.subr.mxu0 0.0
        %323 = vmatpush1.msra.mxu0 0.0
        %324 = vmatprep.subr.mxu0 0.0
        %325 = vmatpush1.msra.mxu0 0.0
        %326 = vmatprep.subr.mxu0 0.0
        %327 = vmatpush1.msra.mxu0 0.0
        %328 = vmatprep.subr.mxu0 0.0
        %329 = vmatpush1.msra.mxu0 0.0
        %330 = vmatprep.subr.mxu0 0.0
        %331 = vmatpush1.msra.mxu0 0.0
        %332 = vmatprep.subr.mxu0 0.0
        %333 = vmatpush1.msra.mxu0 0.0
        %334 = vmatprep.subr.mxu0 0.0
        %335 = vmatpush1.msra.mxu0 0.0
        %336 = vmatprep.subr.mxu0 0.0
        %337 = vmatpush1.msra.mxu0 0.0
        %338 = vmatprep.subr.mxu0 0.0
        %339 = vmatpush1.msra.mxu0 0.0
        %340 = vmatprep.subr.mxu0 0.0
        %341 = vmatpush1.msra.mxu0 %v308
        %342 = vmatprep.subr.mxu0 0.0
        %343 = vmatpush2.msra.mxu0 0.0
        %344 = vmatprep.subr.mxu0 0.0
        %345 = vmatpush2.msra.mxu0 0.0
        %346 = vmatprep.subr.mxu0 0.0
        %347 = vmatpush2.msra.mxu0 0.0
        %348 = vmatprep.subr.mxu0 0.0
        %349 = vmatpush2.msra.mxu0 0.0
        %350 = vmatprep.subr.mxu0 0.0
        %351 = vmatpush2.msra.mxu0 0.0
        %352 = vmatprep.subr.mxu0 0.0
        %353 = vmatpush2.msra.mxu0 0.0
        %354 = vmatprep.subr.mxu0 0.0
        %355 = vmatpush2.msra.mxu0 0.0
        %356 = vmatprep.subr.mxu0 0.0
        %357 = vmatpush2.msra.mxu0 0.0
        %358 = vmatprep.subr.mxu0 0.0
        %359 = vmatpush2.msra.mxu0 0.0
        %360 = vmatprep.subr.mxu0 0.0
        %361 = vmatpush2.msra.mxu0 0.0
        %362 = vmatprep.subr.mxu0 0.0
        %363 = vmatpush2.msra.mxu0 0.0
        %364 = vmatprep.subr.mxu0 0.0
        %365 = vmatpush2.msra.mxu0 0.0
        %366 = vmatprep.subr.mxu0 0.0
        %367 = vmatpush2.msra.mxu0 0.0
        %368 = vmatprep.subr.mxu0 0.0
        %369 = vmatpush2.msra.mxu0 0.0
        %370 = vmatprep.subr.mxu0 0.0
        %371 = vmatpush2.msra.mxu0 0.0
        %372 = vmatprep.subr.mxu0 0.0
        %373 = vmatpush2.msra.mxu0 0.0
        %374 = vmatprep.mubr.f32.mxu0 0.0
        %375 = vmatmul.mubr.f32.gmra.mxu0 %v296
        %v376 = vpop.f32.mrf.mxu0
        %v377 = vadd.f32 %v277, %v376
        %v378 = vpop.f32.mrf.mxu0
        %379 = vmatprep.mubr.f32.mxu0 0.0
        %380 = vmatmul.mubr.f32.gmra.mxu0 %v299
        %v381 = vpop.f32.mrf.mxu0
        %v382 = vadd.f32 %v282, %v381
        %v383 = vpop.f32.mrf.mxu0
        %384 = vmatprep.mubr.f32.mxu0 0.0
        %385 = vmatmul.mubr.f32.gmra.mxu0 %v302
        %v386 = vpop.f32.mrf.mxu0
        %v387 = vadd.f32 %v287, %v386
        %v388 = vpop.f32.mrf.mxu0
        %389 = vmatprep.mubr.f32.mxu0 0.0
        %390 = vmatmul.mubr.f32.gmra.mxu0 %v305
        %v391 = vpop.f32.mrf.mxu0
        %v392 = vadd.f32 %v292, %v391
        %v393 = vpop.f32.mrf.mxu0
        %394 = vdwg.mxu0
        %v395 = vld [vmem:[%s179 + $0x1] sm:$0xff]
        %v396 = vld [vmem:[%s179 + $0x9] sm:$0xff]
        %v397 = vld [vmem:[%s179 + $0x11] sm:$0xff]
        %v398 = vld [vmem:[%s179 + $0x19] sm:$0xff]
        %s399 = scalar_lea.vmem %s1, 8
        %v400 = vld [vmem:[%s399] sm:$0x7]
        %v402 = vsel %vm193, %v395, 0
        %v405 = vsel %vm193, %v396, 0
        %v408 = vsel %vm193, %v397, 0
        %v411 = vsel %vm193, %v398, 0
        %v414 = vsel %vm206, %v400, 0
        %416 = vmatprep.subr.mxu0 0.0
        %417 = vmatpush1.msra.mxu0 0.0
        %418 = vmatprep.subr.mxu0 0.0
        %419 = vmatpush1.msra.mxu0 0.0
        %420 = vmatprep.subr.mxu0 0.0
        %421 = vmatpush1.msra.mxu0 0.0
        %422 = vmatprep.subr.mxu0 0.0
        %423 = vmatpush1.msra.mxu0 0.0
        %424 = vmatprep.subr.mxu0 0.0
        %425 = vmatpush1.msra.mxu0 0.0
        %426 = vmatprep.subr.mxu0 0.0
        %427 = vmatpush1.msra.mxu0 0.0
        %428 = vmatprep.subr.mxu0 0.0
        %429 = vmatpush1.msra.mxu0 0.0
        %430 = vmatprep.subr.mxu0 0.0
        %431 = vmatpush1.msra.mxu0 0.0
        %432 = vmatprep.subr.mxu0 0.0
        %433 = vmatpush1.msra.mxu0 0.0
        %434 = vmatprep.subr.mxu0 0.0
        %435 = vmatpush1.msra.mxu0 0.0
        %436 = vmatprep.subr.mxu0 0.0
        %437 = vmatpush1.msra.mxu0 0.0
        %438 = vmatprep.subr.mxu0 0.0
        %439 = vmatpush1.msra.mxu0 0.0
        %440 = vmatprep.subr.mxu0 0.0
        %441 = vmatpush1.msra.mxu0 0.0
        %442 = vmatprep.subr.mxu0 0.0
        %443 = vmatpush1.msra.mxu0 0.0
        %444 = vmatprep.subr.mxu0 0.0
        %445 = vmatpush1.msra.mxu0 0.0
        %446 = vmatprep.subr.mxu0 0.0
        %447 = vmatpush1.msra.mxu0 %v414
        %448 = vmatprep.subr.mxu0 0.0
        %449 = vmatpush2.msra.mxu0 0.0
        %450 = vmatprep.subr.mxu0 0.0
        %451 = vmatpush2.msra.mxu0 0.0
        %452 = vmatprep.subr.mxu0 0.0
        %453 = vmatpush2.msra.mxu0 0.0
        %454 = vmatprep.subr.mxu0 0.0
        %455 = vmatpush2.msra.mxu0 0.0
        %456 = vmatprep.subr.mxu0 0.0
        %457 = vmatpush2.msra.mxu0 0.0
        %458 = vmatprep.subr.mxu0 0.0
        %459 = vmatpush2.msra.mxu0 0.0
        %460 = vmatprep.subr.mxu0 0.0
        %461 = vmatpush2.msra.mxu0 0.0
        %462 = vmatprep.subr.mxu0 0.0
        %463 = vmatpush2.msra.mxu0 0.0
        %464 = vmatprep.subr.mxu0 0.0
        %465 = vmatpush2.msra.mxu0 0.0
        %466 = vmatprep.subr.mxu0 0.0
        %467 = vmatpush2.msra.mxu0 0.0
        %468 = vmatprep.subr.mxu0 0.0
        %469 = vmatpush2.msra.mxu0 0.0
        %470 = vmatprep.subr.mxu0 0.0
        %471 = vmatpush2.msra.mxu0 0.0
        %472 = vmatprep.subr.mxu0 0.0
        %473 = vmatpush2.msra.mxu0 0.0
        %474 = vmatprep.subr.mxu0 0.0
        %475 = vmatpush2.msra.mxu0 0.0
        %476 = vmatprep.subr.mxu0 0.0
        %477 = vmatpush2.msra.mxu0 0.0
        %478 = vmatprep.subr.mxu0 0.0
        %479 = vmatpush2.msra.mxu0 0.0
        %480 = vmatprep.mubr.f32.mxu0 0.0
        %481 = vmatmul.mubr.f32.gmra.mxu0 %v402
        %v482 = vpop.f32.mrf.mxu0
        %v483 = vadd.f32 0.0, %v482
        %v484 = vpop.f32.mrf.mxu0
        %485 = vmatprep.mubr.f32.mxu0 0.0
        %486 = vmatmul.mubr.f32.gmra.mxu0 %v405
        %v487 = vpop.f32.mrf.mxu0
        %v488 = vadd.f32 0.0, %v487
        %v489 = vpop.f32.mrf.mxu0
        %490 = vmatprep.mubr.f32.mxu0 0.0
        %491 = vmatmul.mubr.f32.gmra.mxu0 %v408
        %v492 = vpop.f32.mrf.mxu0
        %v493 = vadd.f32 0.0, %v492
        %v494 = vpop.f32.mrf.mxu0
        %495 = vmatprep.mubr.f32.mxu0 0.0
        %496 = vmatmul.mubr.f32.gmra.mxu0 %v411
        %v497 = vpop.f32.mrf.mxu0
        %v498 = vadd.f32 0.0, %v497
        %v499 = vpop.f32.mrf.mxu0
        %500 = vdwg.mxu0
        %v501 = vadd.f32 %v377, %v483
        %v502 = vadd.f32 %v382, %v488
        %v503 = vadd.f32 %v387, %v493
        %v504 = vadd.f32 %v392, %v498
        %s505 = sadd.s32 %s178, 2640
        %s506 = scalar_lea.vmem %s165, %s505
        %v507 = vld [vmem:[%s506] sm:$0xff]
        %v508 = vld [vmem:[%s506 + $0x8] sm:$0xff]
        %v509 = vld [vmem:[%s506 + $0x10] sm:$0xff]
        %v510 = vld [vmem:[%s506 + $0x18] sm:$0xff]
        %s511 = scalar_lea.vmem %s1, 12
        %v512 = vld [vmem:[%s511] sm:$0x7]
        %v514 = vsel %vm193, %v507, 0
        %v517 = vsel %vm193, %v508, 0
        %v520 = vsel %vm193, %v509, 0
        %v523 = vsel %vm193, %v510, 0
        %v526 = vsel %vm206, %v512, 0
        %528 = vmatprep.subr.mxu0 0.0
        %529 = vmatpush1.msra.mxu0 0.0
        %530 = vmatprep.subr.mxu0 0.0
        %531 = vmatpush1.msra.mxu0 0.0
        %532 = vmatprep.subr.mxu0 0.0
        %533 = vmatpush1.msra.mxu0 0.0
        %534 = vmatprep.subr.mxu0 0.0
        %535 = vmatpush1.msra.mxu0 0.0
        %536 = vmatprep.subr.mxu0 0.0
        %537 = vmatpush1.msra.mxu0 0.0
        %538 = vmatprep.subr.mxu0 0.0
        %539 = vmatpush1.msra.mxu0 0.0
        %540 = vmatprep.subr.mxu0 0.0
        %541 = vmatpush1.msra.mxu0 0.0
        %542 = vmatprep.subr.mxu0 0.0
        %543 = vmatpush1.msra.mxu0 0.0
        %544 = vmatprep.subr.mxu0 0.0
        %545 = vmatpush1.msra.mxu0 0.0
        %546 = vmatprep.subr.mxu0 0.0
        %547 = vmatpush1.msra.mxu0 0.0
        %548 = vmatprep.subr.mxu0 0.0
        %549 = vmatpush1.msra.mxu0 0.0
        %550 = vmatprep.subr.mxu0 0.0
        %551 = vmatpush1.msra.mxu0 0.0
        %552 = vmatprep.subr.mxu0 0.0
        %553 = vmatpush1.msra.mxu0 0.0
        %554 = vmatprep.subr.mxu0 0.0
        %555 = vmatpush1.msra.mxu0 0.0
        %556 = vmatprep.subr.mxu0 0.0
        %557 = vmatpush1.msra.mxu0 0.0
        %558 = vmatprep.subr.mxu0 0.0
        %559 = vmatpush1.msra.mxu0 %v526
        %560 = vmatprep.subr.mxu0 0.0
        %561 = vmatpush2.msra.mxu0 0.0
        %562 = vmatprep.subr.mxu0 0.0
        %563 = vmatpush2.msra.mxu0 0.0
        %564 = vmatprep.subr.mxu0 0.0
        %565 = vmatpush2.msra.mxu0 0.0
        %566 = vmatprep.subr.mxu0 0.0
        %567 = vmatpush2.msra.mxu0 0.0
        %568 = vmatprep.subr.mxu0 0.0
        %569 = vmatpush2.msra.mxu0 0.0
        %570 = vmatprep.subr.mxu0 0.0
        %571 = vmatpush2.msra.mxu0 0.0
        %572 = vmatprep.subr.mxu0 0.0
        %573 = vmatpush2.msra.mxu0 0.0
        %574 = vmatprep.subr.mxu0 0.0
        %575 = vmatpush2.msra.mxu0 0.0
        %576 = vmatprep.subr.mxu0 0.0
        %577 = vmatpush2.msra.mxu0 0.0
        %578 = vmatprep.subr.mxu0 0.0
        %579 = vmatpush2.msra.mxu0 0.0
        %580 = vmatprep.subr.mxu0 0.0
        %581 = vmatpush2.msra.mxu0 0.0
        %582 = vmatprep.subr.mxu0 0.0
        %583 = vmatpush2.msra.mxu0 0.0
        %584 = vmatprep.subr.mxu0 0.0
        %585 = vmatpush2.msra.mxu0 0.0
        %586 = vmatprep.subr.mxu0 0.0
        %587 = vmatpush2.msra.mxu0 0.0
        %588 = vmatprep.subr.mxu0 0.0
        %589 = vmatpush2.msra.mxu0 0.0
        %590 = vmatprep.subr.mxu0 0.0
        %591 = vmatpush2.msra.mxu0 0.0
        %592 = vmatprep.mubr.f32.mxu0 0.0
        %593 = vmatmul.mubr.f32.gmra.mxu0 %v514
        %v594 = vpop.f32.mrf.mxu0
        %v595 = vadd.f32 0.0, %v594
        %v596 = vpop.f32.mrf.mxu0
        %597 = vmatprep.mubr.f32.mxu0 0.0
        %598 = vmatmul.mubr.f32.gmra.mxu0 %v517
        %v599 = vpop.f32.mrf.mxu0
        %v600 = vadd.f32 0.0, %v599
        %v601 = vpop.f32.mrf.mxu0
        %602 = vmatprep.mubr.f32.mxu0 0.0
        %603 = vmatmul.mubr.f32.gmra.mxu0 %v520
        %v604 = vpop.f32.mrf.mxu0
        %v605 = vadd.f32 0.0, %v604
        %v606 = vpop.f32.mrf.mxu0
        %607 = vmatprep.mubr.f32.mxu0 0.0
        %608 = vmatmul.mubr.f32.gmra.mxu0 %v523
        %v609 = vpop.f32.mrf.mxu0
        %v610 = vadd.f32 0.0, %v609
        %v611 = vpop.f32.mrf.mxu0
        %612 = vdwg.mxu0
        %v613 = vadd.f32 %v501, %v595
        %v614 = vadd.f32 %v502, %v600
        %v615 = vadd.f32 %v503, %v605
        %v616 = vadd.f32 %v504, %v610
        %s617 = sadd.s32 %s178, 3960
        %s618 = scalar_lea.vmem %s165, %s617
        %v619 = vld [vmem:[%s618] sm:$0xff]
        %v620 = vld [vmem:[%s618 + $0x8] sm:$0xff]
        %v621 = vld [vmem:[%s618 + $0x10] sm:$0xff]
        %v622 = vld [vmem:[%s618 + $0x18] sm:$0xff]
        %s623 = scalar_lea.vmem %s1, 16
        %v624 = vld [vmem:[%s623] sm:$0x7]
        %v626 = vsel %vm193, %v619, 0
        %v629 = vsel %vm193, %v620, 0
        %v632 = vsel %vm193, %v621, 0
        %v635 = vsel %vm193, %v622, 0
        %v638 = vsel %vm206, %v624, 0
        %640 = vmatprep.subr.mxu0 0.0
        %641 = vmatpush1.msra.mxu0 0.0
        %642 = vmatprep.subr.mxu0 0.0
        %643 = vmatpush1.msra.mxu0 0.0
        %644 = vmatprep.subr.mxu0 0.0
        %645 = vmatpush1.msra.mxu0 0.0
        %646 = vmatprep.subr.mxu0 0.0
        %647 = vmatpush1.msra.mxu0 0.0
        %648 = vmatprep.subr.mxu0 0.0
        %649 = vmatpush1.msra.mxu0 0.0
        %650 = vmatprep.subr.mxu0 0.0
        %651 = vmatpush1.msra.mxu0 0.0
        %652 = vmatprep.subr.mxu0 0.0
        %653 = vmatpush1.msra.mxu0 0.0
        %654 = vmatprep.subr.mxu0 0.0
        %655 = vmatpush1.msra.mxu0 0.0
        %656 = vmatprep.subr.mxu0 0.0
        %657 = vmatpush1.msra.mxu0 0.0
        %658 = vmatprep.subr.mxu0 0.0
        %659 = vmatpush1.msra.mxu0 0.0
        %660 = vmatprep.subr.mxu0 0.0
        %661 = vmatpush1.msra.mxu0 0.0
        %662 = vmatprep.subr.mxu0 0.0
        %663 = vmatpush1.msra.mxu0 0.0
        %664 = vmatprep.subr.mxu0 0.0
        %665 = vmatpush1.msra.mxu0 0.0
        %666 = vmatprep.subr.mxu0 0.0
        %667 = vmatpush1.msra.mxu0 0.0
        %668 = vmatprep.subr.mxu0 0.0
        %669 = vmatpush1.msra.mxu0 0.0
        %670 = vmatprep.subr.mxu0 0.0
        %671 = vmatpush1.msra.mxu0 %v638
        %672 = vmatprep.subr.mxu0 0.0
        %673 = vmatpush2.msra.mxu0 0.0
        %674 = vmatprep.subr.mxu0 0.0
        %675 = vmatpush2.msra.mxu0 0.0
        %676 = vmatprep.subr.mxu0 0.0
        %677 = vmatpush2.msra.mxu0 0.0
        %678 = vmatprep.subr.mxu0 0.0
        %679 = vmatpush2.msra.mxu0 0.0
        %680 = vmatprep.subr.mxu0 0.0
        %681 = vmatpush2.msra.mxu0 0.0
        %682 = vmatprep.subr.mxu0 0.0
        %683 = vmatpush2.msra.mxu0 0.0
        %684 = vmatprep.subr.mxu0 0.0
        %685 = vmatpush2.msra.mxu0 0.0
        %686 = vmatprep.subr.mxu0 0.0
        %687 = vmatpush2.msra.mxu0 0.0
        %688 = vmatprep.subr.mxu0 0.0
        %689 = vmatpush2.msra.mxu0 0.0
        %690 = vmatprep.subr.mxu0 0.0
        %691 = vmatpush2.msra.mxu0 0.0
        %692 = vmatprep.subr.mxu0 0.0
        %693 = vmatpush2.msra.mxu0 0.0
        %694 = vmatprep.subr.mxu0 0.0
        %695 = vmatpush2.msra.mxu0 0.0
        %696 = vmatprep.subr.mxu0 0.0
        %697 = vmatpush2.msra.mxu0 0.0
        %698 = vmatprep.subr.mxu0 0.0
        %699 = vmatpush2.msra.mxu0 0.0
        %700 = vmatprep.subr.mxu0 0.0
        %701 = vmatpush2.msra.mxu0 0.0
        %702 = vmatprep.subr.mxu0 0.0
        %703 = vmatpush2.msra.mxu0 0.0
        %704 = vmatprep.mubr.f32.mxu0 0.0
        %705 = vmatmul.mubr.f32.gmra.mxu0 %v626
        %v706 = vpop.f32.mrf.mxu0
        %v707 = vadd.f32 0.0, %v706
        %v708 = vpop.f32.mrf.mxu0
        %709 = vmatprep.mubr.f32.mxu0 0.0
        %710 = vmatmul.mubr.f32.gmra.mxu0 %v629
        %v711 = vpop.f32.mrf.mxu0
        %v712 = vadd.f32 0.0, %v711
        %v713 = vpop.f32.mrf.mxu0
        %714 = vmatprep.mubr.f32.mxu0 0.0
        %715 = vmatmul.mubr.f32.gmra.mxu0 %v632
        %v716 = vpop.f32.mrf.mxu0
        %v717 = vadd.f32 0.0, %v716
        %v718 = vpop.f32.mrf.mxu0
        %719 = vmatprep.mubr.f32.mxu0 0.0
        %720 = vmatmul.mubr.f32.gmra.mxu0 %v635
        %v721 = vpop.f32.mrf.mxu0
        %v722 = vadd.f32 0.0, %v721
        %v723 = vpop.f32.mrf.mxu0
        %724 = vdwg.mxu0
        %v725 = vadd.f32 %v613, %v707
        %v726 = vadd.f32 %v614, %v712
        %v727 = vadd.f32 %v615, %v717
        %v728 = vadd.f32 %v616, %v722
        %v729 = vld [vmem:[%s506 + $0x1] sm:$0xff]
        %v730 = vld [vmem:[%s506 + $0x9] sm:$0xff]
        %v731 = vld [vmem:[%s506 + $0x11] sm:$0xff]
        %v732 = vld [vmem:[%s506 + $0x19] sm:$0xff]
        %s733 = scalar_lea.vmem %s1, 20
        %v734 = vld [vmem:[%s733] sm:$0x7]
        %v736 = vsel %vm193, %v729, 0
        %v739 = vsel %vm193, %v730, 0
        %v742 = vsel %vm193, %v731, 0
        %v745 = vsel %vm193, %v732, 0
        %v748 = vsel %vm206, %v734, 0
        %750 = vmatprep.subr.mxu0 0.0
        %751 = vmatpush1.msra.mxu0 0.0
        %752 = vmatprep.subr.mxu0 0.0
        %753 = vmatpush1.msra.mxu0 0.0
        %754 = vmatprep.subr.mxu0 0.0
        %755 = vmatpush1.msra.mxu0 0.0
        %756 = vmatprep.subr.mxu0 0.0
        %757 = vmatpush1.msra.mxu0 0.0
        %758 = vmatprep.subr.mxu0 0.0
        %759 = vmatpush1.msra.mxu0 0.0
        %760 = vmatprep.subr.mxu0 0.0
        %761 = vmatpush1.msra.mxu0 0.0
        %762 = vmatprep.subr.mxu0 0.0
        %763 = vmatpush1.msra.mxu0 0.0
        %764 = vmatprep.subr.mxu0 0.0
        %765 = vmatpush1.msra.mxu0 0.0
        %766 = vmatprep.subr.mxu0 0.0
        %767 = vmatpush1.msra.mxu0 0.0
        %768 = vmatprep.subr.mxu0 0.0
        %769 = vmatpush1.msra.mxu0 0.0
        %770 = vmatprep.subr.mxu0 0.0
        %771 = vmatpush1.msra.mxu0 0.0
        %772 = vmatprep.subr.mxu0 0.0
        %773 = vmatpush1.msra.mxu0 0.0
        %774 = vmatprep.subr.mxu0 0.0
        %775 = vmatpush1.msra.mxu0 0.0
        %776 = vmatprep.subr.mxu0 0.0
        %777 = vmatpush1.msra.mxu0 0.0
        %778 = vmatprep.subr.mxu0 0.0
        %779 = vmatpush1.msra.mxu0 0.0
        %780 = vmatprep.subr.mxu0 0.0
        %781 = vmatpush1.msra.mxu0 %v748
        %782 = vmatprep.subr.mxu0 0.0
        %783 = vmatpush2.msra.mxu0 0.0
        %784 = vmatprep.subr.mxu0 0.0
        %785 = vmatpush2.msra.mxu0 0.0
        %786 = vmatprep.subr.mxu0 0.0
        %787 = vmatpush2.msra.mxu0 0.0
        %788 = vmatprep.subr.mxu0 0.0
        %789 = vmatpush2.msra.mxu0 0.0
        %790 = vmatprep.subr.mxu0 0.0
        %791 = vmatpush2.msra.mxu0 0.0
        %792 = vmatprep.subr.mxu0 0.0
        %793 = vmatpush2.msra.mxu0 0.0
        %794 = vmatprep.subr.mxu0 0.0
        %795 = vmatpush2.msra.mxu0 0.0
        %796 = vmatprep.subr.mxu0 0.0
        %797 = vmatpush2.msra.mxu0 0.0
        %798 = vmatprep.subr.mxu0 0.0
        %799 = vmatpush2.msra.mxu0 0.0
        %800 = vmatprep.subr.mxu0 0.0
        %801 = vmatpush2.msra.mxu0 0.0
        %802 = vmatprep.subr.mxu0 0.0
        %803 = vmatpush2.msra.mxu0 0.0
        %804 = vmatprep.subr.mxu0 0.0
        %805 = vmatpush2.msra.mxu0 0.0
        %806 = vmatprep.subr.mxu0 0.0
        %807 = vmatpush2.msra.mxu0 0.0
        %808 = vmatprep.subr.mxu0 0.0
        %809 = vmatpush2.msra.mxu0 0.0
        %810 = vmatprep.subr.mxu0 0.0
        %811 = vmatpush2.msra.mxu0 0.0
        %812 = vmatprep.subr.mxu0 0.0
        %813 = vmatpush2.msra.mxu0 0.0
        %814 = vmatprep.mubr.f32.mxu0 0.0
        %815 = vmatmul.mubr.f32.gmra.mxu0 %v736
        %v816 = vpop.f32.mrf.mxu0
        %v817 = vadd.f32 0.0, %v816
        %v818 = vpop.f32.mrf.mxu0
        %819 = vmatprep.mubr.f32.mxu0 0.0
        %820 = vmatmul.mubr.f32.gmra.mxu0 %v739
        %v821 = vpop.f32.mrf.mxu0
        %v822 = vadd.f32 0.0, %v821
        %v823 = vpop.f32.mrf.mxu0
        %824 = vmatprep.mubr.f32.mxu0 0.0
        %825 = vmatmul.mubr.f32.gmra.mxu0 %v742
        %v826 = vpop.f32.mrf.mxu0
        %v827 = vadd.f32 0.0, %v826
        %v828 = vpop.f32.mrf.mxu0
        %829 = vmatprep.mubr.f32.mxu0 0.0
        %830 = vmatmul.mubr.f32.gmra.mxu0 %v745
        %v831 = vpop.f32.mrf.mxu0
        %v832 = vadd.f32 0.0, %v831
        %v833 = vpop.f32.mrf.mxu0
        %834 = vdwg.mxu0
        %v835 = vadd.f32 %v725, %v817
        %v836 = vadd.f32 %v726, %v822
        %v837 = vadd.f32 %v727, %v827
        %v838 = vadd.f32 %v728, %v832
        %s839 = sadd.s32 %s173, 1
        %s840 = smul.u32 %s839, 40
        %s841 = scalar_lea.vmem %s165, %s840
        %v842 = vld [vmem:[%s841] sm:$0xff]
        %v843 = vld [vmem:[%s841 + $0x8] sm:$0xff]
        %v844 = vld [vmem:[%s841 + $0x10] sm:$0xff]
        %v845 = vld [vmem:[%s841 + $0x18] sm:$0xff]
        %s846 = scalar_lea.vmem %s1, 24
        %v847 = vld [vmem:[%s846] sm:$0x7]
        %v849 = vsel %vm193, %v842, 0
        %v852 = vsel %vm193, %v843, 0
        %v855 = vsel %vm193, %v844, 0
        %v858 = vsel %vm193, %v845, 0
        %v861 = vsel %vm206, %v847, 0
        %863 = vmatprep.subr.mxu0 0.0
        %864 = vmatpush1.msra.mxu0 0.0
        %865 = vmatprep.subr.mxu0 0.0
        %866 = vmatpush1.msra.mxu0 0.0
        %867 = vmatprep.subr.mxu0 0.0
        %868 = vmatpush1.msra.mxu0 0.0
        %869 = vmatprep.subr.mxu0 0.0
        %870 = vmatpush1.msra.mxu0 0.0
        %871 = vmatprep.subr.mxu0 0.0
        %872 = vmatpush1.msra.mxu0 0.0
        %873 = vmatprep.subr.mxu0 0.0
        %874 = vmatpush1.msra.mxu0 0.0
        %875 = vmatprep.subr.mxu0 0.0
        %876 = vmatpush1.msra.mxu0 0.0
        %877 = vmatprep.subr.mxu0 0.0
        %878 = vmatpush1.msra.mxu0 0.0
        %879 = vmatprep.subr.mxu0 0.0
        %880 = vmatpush1.msra.mxu0 0.0
        %881 = vmatprep.subr.mxu0 0.0
        %882 = vmatpush1.msra.mxu0 0.0
        %883 = vmatprep.subr.mxu0 0.0
        %884 = vmatpush1.msra.mxu0 0.0
        %885 = vmatprep.subr.mxu0 0.0
        %886 = vmatpush1.msra.mxu0 0.0
        %887 = vmatprep.subr.mxu0 0.0
        %888 = vmatpush1.msra.mxu0 0.0
        %889 = vmatprep.subr.mxu0 0.0
        %890 = vmatpush1.msra.mxu0 0.0
        %891 = vmatprep.subr.mxu0 0.0
        %892 = vmatpush1.msra.mxu0 0.0
        %893 = vmatprep.subr.mxu0 0.0
        %894 = vmatpush1.msra.mxu0 %v861
        %895 = vmatprep.subr.mxu0 0.0
        %896 = vmatpush2.msra.mxu0 0.0
        %897 = vmatprep.subr.mxu0 0.0
        %898 = vmatpush2.msra.mxu0 0.0
        %899 = vmatprep.subr.mxu0 0.0
        %900 = vmatpush2.msra.mxu0 0.0
        %901 = vmatprep.subr.mxu0 0.0
        %902 = vmatpush2.msra.mxu0 0.0
        %903 = vmatprep.subr.mxu0 0.0
        %904 = vmatpush2.msra.mxu0 0.0
        %905 = vmatprep.subr.mxu0 0.0
        %906 = vmatpush2.msra.mxu0 0.0
        %907 = vmatprep.subr.mxu0 0.0
        %908 = vmatpush2.msra.mxu0 0.0
        %909 = vmatprep.subr.mxu0 0.0
        %910 = vmatpush2.msra.mxu0 0.0
        %911 = vmatprep.subr.mxu0 0.0
        %912 = vmatpush2.msra.mxu0 0.0
        %913 = vmatprep.subr.mxu0 0.0
        %914 = vmatpush2.msra.mxu0 0.0
        %915 = vmatprep.subr.mxu0 0.0
        %916 = vmatpush2.msra.mxu0 0.0
        %917 = vmatprep.subr.mxu0 0.0
        %918 = vmatpush2.msra.mxu0 0.0
        %919 = vmatprep.subr.mxu0 0.0
        %920 = vmatpush2.msra.mxu0 0.0
        %921 = vmatprep.subr.mxu0 0.0
        %922 = vmatpush2.msra.mxu0 0.0
        %923 = vmatprep.subr.mxu0 0.0
        %924 = vmatpush2.msra.mxu0 0.0
        %925 = vmatprep.subr.mxu0 0.0
        %926 = vmatpush2.msra.mxu0 0.0
        %927 = vmatprep.mubr.f32.mxu0 0.0
        %928 = vmatmul.mubr.f32.gmra.mxu0 %v849
        %v929 = vpop.f32.mrf.mxu0
        %v930 = vadd.f32 0.0, %v929
        %v931 = vpop.f32.mrf.mxu0
        %932 = vmatprep.mubr.f32.mxu0 0.0
        %933 = vmatmul.mubr.f32.gmra.mxu0 %v852
        %v934 = vpop.f32.mrf.mxu0
        %v935 = vadd.f32 0.0, %v934
        %v936 = vpop.f32.mrf.mxu0
        %937 = vmatprep.mubr.f32.mxu0 0.0
        %938 = vmatmul.mubr.f32.gmra.mxu0 %v855
        %v939 = vpop.f32.mrf.mxu0
        %v940 = vadd.f32 0.0, %v939
        %v941 = vpop.f32.mrf.mxu0
        %942 = vmatprep.mubr.f32.mxu0 0.0
        %943 = vmatmul.mubr.f32.gmra.mxu0 %v858
        %v944 = vpop.f32.mrf.mxu0
        %v945 = vadd.f32 0.0, %v944
        %v946 = vpop.f32.mrf.mxu0
        %947 = vdwg.mxu0
        %v948 = vadd.f32 %v835, %v930
        %v949 = vadd.f32 %v836, %v935
        %v950 = vadd.f32 %v837, %v940
        %v951 = vadd.f32 %v838, %v945
        %s952 = sadd.s32 %s840, 1320
        %s953 = scalar_lea.vmem %s165, %s952
        %v954 = vld [vmem:[%s953] sm:$0xff]
        %v955 = vld [vmem:[%s953 + $0x8] sm:$0xff]
        %v956 = vld [vmem:[%s953 + $0x10] sm:$0xff]
        %v957 = vld [vmem:[%s953 + $0x18] sm:$0xff]
        %s958 = scalar_lea.vmem %s1, 28
        %v959 = vld [vmem:[%s958] sm:$0x7]
        %v961 = vsel %vm193, %v954, 0
        %v964 = vsel %vm193, %v955, 0
        %v967 = vsel %vm193, %v956, 0
        %v970 = vsel %vm193, %v957, 0
        %v973 = vsel %vm206, %v959, 0
        %975 = vmatprep.subr.mxu0 0.0
        %976 = vmatpush1.msra.mxu0 0.0
        %977 = vmatprep.subr.mxu0 0.0
        %978 = vmatpush1.msra.mxu0 0.0
        %979 = vmatprep.subr.mxu0 0.0
        %980 = vmatpush1.msra.mxu0 0.0
        %981 = vmatprep.subr.mxu0 0.0
        %982 = vmatpush1.msra.mxu0 0.0
        %983 = vmatprep.subr.mxu0 0.0
        %984 = vmatpush1.msra.mxu0 0.0
        %985 = vmatprep.subr.mxu0 0.0
        %986 = vmatpush1.msra.mxu0 0.0
        %987 = vmatprep.subr.mxu0 0.0
        %988 = vmatpush1.msra.mxu0 0.0
        %989 = vmatprep.subr.mxu0 0.0
        %990 = vmatpush1.msra.mxu0 0.0
        %991 = vmatprep.subr.mxu0 0.0
        %992 = vmatpush1.msra.mxu0 0.0
        %993 = vmatprep.subr.mxu0 0.0
        %994 = vmatpush1.msra.mxu0 0.0
        %995 = vmatprep.subr.mxu0 0.0
        %996 = vmatpush1.msra.mxu0 0.0
        %997 = vmatprep.subr.mxu0 0.0
        %998 = vmatpush1.msra.mxu0 0.0
        %999 = vmatprep.subr.mxu0 0.0
        %1000 = vmatpush1.msra.mxu0 0.0
        %1001 = vmatprep.subr.mxu0 0.0
        %1002 = vmatpush1.msra.mxu0 0.0
        %1003 = vmatprep.subr.mxu0 0.0
        %1004 = vmatpush1.msra.mxu0 0.0
        %1005 = vmatprep.subr.mxu0 0.0
        %1006 = vmatpush1.msra.mxu0 %v973
        %1007 = vmatprep.subr.mxu0 0.0
        %1008 = vmatpush2.msra.mxu0 0.0
        %1009 = vmatprep.subr.mxu0 0.0
        %1010 = vmatpush2.msra.mxu0 0.0
        %1011 = vmatprep.subr.mxu0 0.0
        %1012 = vmatpush2.msra.mxu0 0.0
        %1013 = vmatprep.subr.mxu0 0.0
        %1014 = vmatpush2.msra.mxu0 0.0
        %1015 = vmatprep.subr.mxu0 0.0
        %1016 = vmatpush2.msra.mxu0 0.0
        %1017 = vmatprep.subr.mxu0 0.0
        %1018 = vmatpush2.msra.mxu0 0.0
        %1019 = vmatprep.subr.mxu0 0.0
        %1020 = vmatpush2.msra.mxu0 0.0
        %1021 = vmatprep.subr.mxu0 0.0
        %1022 = vmatpush2.msra.mxu0 0.0
        %1023 = vmatprep.subr.mxu0 0.0
        %1024 = vmatpush2.msra.mxu0 0.0
        %1025 = vmatprep.subr.mxu0 0.0
        %1026 = vmatpush2.msra.mxu0 0.0
        %1027 = vmatprep.subr.mxu0 0.0
        %1028 = vmatpush2.msra.mxu0 0.0
        %1029 = vmatprep.subr.mxu0 0.0
        %1030 = vmatpush2.msra.mxu0 0.0
        %1031 = vmatprep.subr.mxu0 0.0
        %1032 = vmatpush2.msra.mxu0 0.0
        %1033 = vmatprep.subr.mxu0 0.0
        %1034 = vmatpush2.msra.mxu0 0.0
        %1035 = vmatprep.subr.mxu0 0.0
        %1036 = vmatpush2.msra.mxu0 0.0
        %1037 = vmatprep.subr.mxu0 0.0
        %1038 = vmatpush2.msra.mxu0 0.0
        %1039 = vmatprep.mubr.f32.mxu0 0.0
        %1040 = vmatmul.mubr.f32.gmra.mxu0 %v961
        %v1041 = vpop.f32.mrf.mxu0
        %v1042 = vadd.f32 0.0, %v1041
        %v1043 = vpop.f32.mrf.mxu0
        %1044 = vmatprep.mubr.f32.mxu0 0.0
        %1045 = vmatmul.mubr.f32.gmra.mxu0 %v964
        %v1046 = vpop.f32.mrf.mxu0
        %v1047 = vadd.f32 0.0, %v1046
        %v1048 = vpop.f32.mrf.mxu0
        %1049 = vmatprep.mubr.f32.mxu0 0.0
        %1050 = vmatmul.mubr.f32.gmra.mxu0 %v967
        %v1051 = vpop.f32.mrf.mxu0
        %v1052 = vadd.f32 0.0, %v1051
        %v1053 = vpop.f32.mrf.mxu0
        %1054 = vmatprep.mubr.f32.mxu0 0.0
        %1055 = vmatmul.mubr.f32.gmra.mxu0 %v970
        %v1056 = vpop.f32.mrf.mxu0
        %v1057 = vadd.f32 0.0, %v1056
        %v1058 = vpop.f32.mrf.mxu0
        %1059 = vdwg.mxu0
        %v1060 = vadd.f32 %v948, %v1042
        %v1061 = vadd.f32 %v949, %v1047
        %v1062 = vadd.f32 %v950, %v1052
        %v1063 = vadd.f32 %v951, %v1057
        %v1064 = vld [vmem:[%s841 + $0x1] sm:$0xff]
        %v1065 = vld [vmem:[%s841 + $0x9] sm:$0xff]
        %v1066 = vld [vmem:[%s841 + $0x11] sm:$0xff]
        %v1067 = vld [vmem:[%s841 + $0x19] sm:$0xff]
        %s1068 = scalar_lea.vmem %s1, 32
        %v1069 = vld [vmem:[%s1068] sm:$0x7]
        %v1071 = vsel %vm193, %v1064, 0
        %v1074 = vsel %vm193, %v1065, 0
        %v1077 = vsel %vm193, %v1066, 0
        %v1080 = vsel %vm193, %v1067, 0
        %v1083 = vsel %vm206, %v1069, 0
        %1085 = vmatprep.subr.mxu0 0.0
        %1086 = vmatpush1.msra.mxu0 0.0
        %1087 = vmatprep.subr.mxu0 0.0
        %1088 = vmatpush1.msra.mxu0 0.0
        %1089 = vmatprep.subr.mxu0 0.0
        %1090 = vmatpush1.msra.mxu0 0.0
        %1091 = vmatprep.subr.mxu0 0.0
        %1092 = vmatpush1.msra.mxu0 0.0
        %1093 = vmatprep.subr.mxu0 0.0
        %1094 = vmatpush1.msra.mxu0 0.0
        %1095 = vmatprep.subr.mxu0 0.0
        %1096 = vmatpush1.msra.mxu0 0.0
        %1097 = vmatprep.subr.mxu0 0.0
        %1098 = vmatpush1.msra.mxu0 0.0
        %1099 = vmatprep.subr.mxu0 0.0
        %1100 = vmatpush1.msra.mxu0 0.0
        %1101 = vmatprep.subr.mxu0 0.0
        %1102 = vmatpush1.msra.mxu0 0.0
        %1103 = vmatprep.subr.mxu0 0.0
        %1104 = vmatpush1.msra.mxu0 0.0
        %1105 = vmatprep.subr.mxu0 0.0
        %1106 = vmatpush1.msra.mxu0 0.0
        %1107 = vmatprep.subr.mxu0 0.0
        %1108 = vmatpush1.msra.mxu0 0.0
        %1109 = vmatprep.subr.mxu0 0.0
        %1110 = vmatpush1.msra.mxu0 0.0
        %1111 = vmatprep.subr.mxu0 0.0
        %1112 = vmatpush1.msra.mxu0 0.0
        %1113 = vmatprep.subr.mxu0 0.0
        %1114 = vmatpush1.msra.mxu0 0.0
        %1115 = vmatprep.subr.mxu0 0.0
        %1116 = vmatpush1.msra.mxu0 %v1083
        %1117 = vmatprep.subr.mxu0 0.0
        %1118 = vmatpush2.msra.mxu0 0.0
        %1119 = vmatprep.subr.mxu0 0.0
        %1120 = vmatpush2.msra.mxu0 0.0
        %1121 = vmatprep.subr.mxu0 0.0
        %1122 = vmatpush2.msra.mxu0 0.0
        %1123 = vmatprep.subr.mxu0 0.0
        %1124 = vmatpush2.msra.mxu0 0.0
        %1125 = vmatprep.subr.mxu0 0.0
        %1126 = vmatpush2.msra.mxu0 0.0
        %1127 = vmatprep.subr.mxu0 0.0
        %1128 = vmatpush2.msra.mxu0 0.0
        %1129 = vmatprep.subr.mxu0 0.0
        %1130 = vmatpush2.msra.mxu0 0.0
        %1131 = vmatprep.subr.mxu0 0.0
        %1132 = vmatpush2.msra.mxu0 0.0
        %1133 = vmatprep.subr.mxu0 0.0
        %1134 = vmatpush2.msra.mxu0 0.0
        %1135 = vmatprep.subr.mxu0 0.0
        %1136 = vmatpush2.msra.mxu0 0.0
        %1137 = vmatprep.subr.mxu0 0.0
        %1138 = vmatpush2.msra.mxu0 0.0
        %1139 = vmatprep.subr.mxu0 0.0
        %1140 = vmatpush2.msra.mxu0 0.0
        %1141 = vmatprep.subr.mxu0 0.0
        %1142 = vmatpush2.msra.mxu0 0.0
        %1143 = vmatprep.subr.mxu0 0.0
        %1144 = vmatpush2.msra.mxu0 0.0
        %1145 = vmatprep.subr.mxu0 0.0
        %1146 = vmatpush2.msra.mxu0 0.0
        %1147 = vmatprep.subr.mxu0 0.0
        %1148 = vmatpush2.msra.mxu0 0.0
        %1149 = vmatprep.mubr.f32.mxu0 0.0
        %1150 = vmatmul.mubr.f32.gmra.mxu0 %v1071
        %v1151 = vpop.f32.mrf.mxu0
        %v1152 = vadd.f32 0.0, %v1151
        %v1153 = vpop.f32.mrf.mxu0
        %1154 = vmatprep.mubr.f32.mxu0 0.0
        %1155 = vmatmul.mubr.f32.gmra.mxu0 %v1074
        %v1156 = vpop.f32.mrf.mxu0
        %v1157 = vadd.f32 0.0, %v1156
        %v1158 = vpop.f32.mrf.mxu0
        %1159 = vmatprep.mubr.f32.mxu0 0.0
        %1160 = vmatmul.mubr.f32.gmra.mxu0 %v1077
        %v1161 = vpop.f32.mrf.mxu0
        %v1162 = vadd.f32 0.0, %v1161
        %v1163 = vpop.f32.mrf.mxu0
        %1164 = vmatprep.mubr.f32.mxu0 0.0
        %1165 = vmatmul.mubr.f32.gmra.mxu0 %v1080
        %v1166 = vpop.f32.mrf.mxu0
        %v1167 = vadd.f32 0.0, %v1166
        %v1168 = vpop.f32.mrf.mxu0
        %1169 = vdwg.mxu0
        %v1170 = vadd.f32 %v1060, %v1152
        %v1171 = vadd.f32 %v1061, %v1157
        %v1172 = vadd.f32 %v1062, %v1162
        %v1173 = vadd.f32 %v1063, %v1167
        %v1175 = vlaneseq
        %v1176 = vshrl.u32 %v1175, 7
        %v1177 = vsub.s32 0, %v1176
        %v1178 = vrot.slane %v171, %v1177
        %v1180 = vadd.f32 %v1170, %v1178
        %v1181 = vadd.f32 %v1171, %v1178
        %v1182 = vadd.f32 %v1172, %v1178
        %v1183 = vadd.f32 %v1173, %v1178
        %v1184 = vmax.f32 %v1180, 0.0
        %v1185 = vmax.f32 %v1181, 0.0
        %v1186 = vmax.f32 %v1182, 0.0
        %v1187 = vmax.f32 %v1183, 0.0
        %s1188 = smul.u32 %s173, 32
        %s1189 = scalar_lea.vmem %s170, %s1188
        %vm1190 = vcmask 261120
        %1191 = vst.msk [vmem:[%s1189] sm:$0xff] %vm1190, %v1184
        %1192 = vst.msk [vmem:[%s1189 + $0x8] sm:$0xff] %vm1190, %v1185
        %1193 = vst.msk [vmem:[%s1189 + $0x10] sm:$0xff] %vm1190, %v1186
        %1194 = vst.msk [vmem:[%s1189 + $0x18] sm:$0xff] %vm1190, %v1187
      $region37: #{simple_view_encoder.5} parent=31 // loop_footer
        %s177 = sadd.s32 1, %s173
      $region38: #{simple_view_encoder.5} parent=31 // loop_footer_branch
        %172 = sbr.rel target = $region34
      $region39: #{simple_view_encoder.5} parent=31 // loop_exit
        _
      %p1195 = scmp.lt.s32.totalorder %s14, 15
      %s1196 = scalar_select %p1195, %s14, 15
      %s1197 = smul.addr %s1196, 128
      %s1198 = smul.addr %s1197, 8
      %s1199 = scalar_lea.vmem %s3, %s1198
      // Predicated region
      $region40: #{simple_view_encoder.5} parent=31 // pred_check
        %p1200 = pneg %p100
      $region41: #{simple_view_encoder.5} parent=31 // pred_check_branch
        %1202 = sbr.rel (%p1200) target = $region43
      $region42: #{simple_view_encoder.5} parent=31 // pred_region
        _
      $region43: #{simple_view_encoder.5} parent=31 // pred_fallthru
        _
    $region32: #{simple_view_encoder.5} parent=5 // pred_fallthru
      _
    %p1203 = scmp.le.s32.totalorder 2, %s9
    // Predicated region
    $region44: #{simple_view_encoder.5} parent=5 // pred_check
      %p1204 = pneg %p1203
    $region45: #{simple_view_encoder.5} parent=5 // pred_check_branch
      %1206 = sbr.rel (%p1204) target = $region47
    $region46: #{simple_view_encoder.5} parent=5 // pred_region
      %s1207 = ssub.s32 %s9, 2
      // Predicated region
      $region48: #{simple_view_encoder.5} parent=46 // pred_check
        %p1208 = pneg %p106
      $region49: #{simple_view_encoder.5} parent=46 // pred_check_branch
        %1210 = sbr.rel (%p1208) target = $region51
      $region50: #{simple_view_encoder.5} parent=46 // pred_region
        %p1211 = scmp.lt.s32.totalorder %s15, 15
        %s1212 = scalar_select %p1211, %s15, 15
        %s1213 = smul.addr %s1212, 128
        %s1214 = smul.addr %s1213, 8
        %s1215 = scalar_lea.vmem %s3, %s1214
      $region51: #{simple_view_encoder.5} parent=46 // pred_fallthru
        _
    $region47: #{simple_view_encoder.5} parent=5 // pred_fallthru
      _
  $region6: #{simple_view_encoder.5} parent=0 // loop_footer
    %s13 = sadd.s32 1, %s9
  $region7: #{simple_view_encoder.5} parent=0 // loop_footer_branch
    %8 = sbr.rel target = $region3
  $region8: #{simple_view_encoder.5} parent=0 // loop_exit
    _

// kernel: simple_view_encoder.6
$region0: #{simple_view_encoder.6}
  #allocation0 [shape = 'u32[]', space=smem, size = 0x4, offset = 0x4, fixed_abs, tag = 'smem constant byte address 0x4 - core index']
  #allocation1 [shape = 'u32[144,128]{1,0:T(1,128)}', space=vmem, size = 0x12000, scoped, tag = 'internal scratch']
  %s0 = inlined_call_operand.vmem [shape: f32[16,4,17,17,32], index: 0, kind: input, shape index: {}]
  %s1 = inlined_call_operand.vmem [shape: f32[3,3,32,64], index: 1, kind: input, shape index: {}]
  %s2 = inlined_call_operand.vmem [shape: f32[1,64], index: 2, kind: input, shape index: {}]
  %s3 = inlined_call_operand.vmem [shape: f32[16,16,16,64], index: 3, kind: output, shape index: {}]
  %s4 = sld [smem:[#allocation0]]
  $region52: #{simple_view_encoder.6} parent=0
    _
  %s6 = ssub.s32 1, %s4
  %s7 = scalar_select 0, %s6, %s4
  loop: start=0, step=1, limit=18
  $region2: #{simple_view_encoder.6} parent=0 // loop_pre_header
    _
  $region3: #{simple_view_encoder.6} parent=0 // loop_header
    %s9 = sphi 0, %s13
    %p10 = scmp.ge.s32.totalorder %s9, 18
    %s19 = sphi 0, %s21
    %s22 = sphi 0, %s19
    %s23 = sphi 0, %s22
    %s39 = sphi 0, %s23
    %s43 = sphi 0, %s43
    %s45 = sphi 0, %s43
    %s46 = sphi 0, %s45
    %s60 = sphi 0, %s46
    %s64 = sphi 0, %s64
    %s66 = sphi 0, %s64
    %s67 = sphi 0, %s66
    %s81 = sphi 0, %s67
    %s87 = sphi 0, %s89
    %s90 = sphi 0, %s87
    %s91 = sphi 0, %s90
    %s107 = sphi 0, %s91
  $region4: #{simple_view_encoder.6} parent=0 // loop_header_branch
    %12 = sbr.rel (%p10) target = $region8
  $region5: #{simple_view_encoder.6} parent=0 // loop_body
    %s14 = ssub.s32 %s9, 1
    %s15 = ssub.s32 %s9, 2
    %s16 = sadd.s32 %s9, 1
    %s17 = ssub.s32 %s9, %s16
    %p18 = scmp.eq.s32.totalorder %s17, 0
    %s20 = sadd.s32 %s19, 1
    %s21 = scalar_select %p18, %s19, %s20
    %p24 = pneg %p18
    %p25 = scmp.eq.s32.totalorder %s9, 15
    %p26 = por %p24, %p25
    %p27 = scmp.ne.s32.totalorder %s19, %s22
    %p28 = scmp.eq.s32.totalorder %s9, 0
    %p29 = por %p27, %p28
    %p30 = scmp.ne.s32.totalorder %s19, %s22
    %p31 = scmp.eq.s32.totalorder %s14, 15
    %p32 = por %p30, %p31
    %p33 = scmp.ne.s32.totalorder %s22, %s23
    %p34 = scmp.eq.s32.totalorder %s14, 0
    %p35 = por %p33, %p34
    %p36 = scmp.ne.s32.totalorder %s22, %s23
    %p37 = scmp.eq.s32.totalorder %s15, 15
    %p38 = por %p36, %p37
    %p40 = scmp.ne.s32.totalorder %s23, %s39
    %p41 = scmp.eq.s32.totalorder %s15, 0
    %p42 = por %p40, %p41
    %s44 = sadd.s32 %s43, 1
    %p47 = scmp.eq.s32.totalorder %s9, 15
    %p48 = scmp.ne.s32.totalorder %s43, %s45
    %p49 = scmp.eq.s32.totalorder %s9, 0
    %p50 = por %p48, %p49
    %p51 = scmp.ne.s32.totalorder %s43, %s45
    %p52 = scmp.eq.s32.totalorder %s14, 15
    %p53 = por %p51, %p52
    %p54 = scmp.ne.s32.totalorder %s45, %s46
    %p55 = scmp.eq.s32.totalorder %s14, 0
    %p56 = por %p54, %p55
    %p57 = scmp.ne.s32.totalorder %s45, %s46
    %p58 = scmp.eq.s32.totalorder %s15, 15
    %p59 = por %p57, %p58
    %p61 = scmp.ne.s32.totalorder %s46, %s60
    %p62 = scmp.eq.s32.totalorder %s15, 0
    %p63 = por %p61, %p62
    %s65 = sadd.s32 %s64, 1
    %p68 = scmp.eq.s32.totalorder %s9, 15
    %p69 = scmp.ne.s32.totalorder %s64, %s66
    %p70 = scmp.eq.s32.totalorder %s9, 0
    %p71 = por %p69, %p70
    %p72 = scmp.ne.s32.totalorder %s64, %s66
    %p73 = scmp.eq.s32.totalorder %s14, 15
    %p74 = por %p72, %p73
    %p75 = scmp.ne.s32.totalorder %s66, %s67
    %p76 = scmp.eq.s32.totalorder %s14, 0
    %p77 = por %p75, %p76
    %p78 = scmp.ne.s32.totalorder %s66, %s67
    %p79 = scmp.eq.s32.totalorder %s15, 15
    %p80 = por %p78, %p79
    %p82 = scmp.ne.s32.totalorder %s67, %s81
    %p83 = scmp.eq.s32.totalorder %s15, 0
    %p84 = por %p82, %p83
    %s85 = ssub.s32 %s9, %s16
    %p86 = scmp.eq.s32.totalorder %s85, 0
    %s88 = sadd.s32 %s87, 1
    %s89 = scalar_select %p86, %s87, %s88
    %p92 = pneg %p86
    %p93 = scmp.eq.s32.totalorder %s9, 15
    %p94 = por %p92, %p93
    %p95 = scmp.ne.s32.totalorder %s87, %s90
    %p96 = scmp.eq.s32.totalorder %s9, 0
    %p97 = por %p95, %p96
    %p98 = scmp.ne.s32.totalorder %s87, %s90
    %p99 = scmp.eq.s32.totalorder %s14, 15
    %p100 = por %p98, %p99
    %p101 = scmp.ne.s32.totalorder %s90, %s91
    %p102 = scmp.eq.s32.totalorder %s14, 0
    %p103 = por %p101, %p102
    %p104 = scmp.ne.s32.totalorder %s90, %s91
    %p105 = scmp.eq.s32.totalorder %s15, 15
    %p106 = por %p104, %p105
    %p108 = scmp.ne.s32.totalorder %s91, %s107
    %p109 = scmp.eq.s32.totalorder %s15, 0
    %p110 = por %p108, %p109
    %p111 = scmp.le.s32.totalorder 1, %s9
    %p112 = scmp.lt.s32.totalorder %s9, 17
    %p113 = pnand %p111, %p112
    %p114 = pneg %p113
    // Predicated region
    $region9: #{simple_view_encoder.6} parent=5 // pred_check
      _
    $region10: #{simple_view_encoder.6} parent=5 // pred_check_branch
      %116 = sbr.rel (%p113) target = $region12
    $region11: #{simple_view_encoder.6} parent=5 // pred_region
      %s117 = ssub.s32 %s9, 1
      // Predicated region
      $region13: #{simple_view_encoder.6} parent=11 // pred_check
        %p118 = pneg %p56
      $region14: #{simple_view_encoder.6} parent=11 // pred_check_branch
        %120 = sbr.rel (%p118) target = $region16
      $region15: #{simple_view_encoder.6} parent=11 // pred_region
        _
      $region16: #{simple_view_encoder.6} parent=11 // pred_fallthru
        _
      // Predicated region
      $region17: #{simple_view_encoder.6} parent=11 // pred_check
        %p121 = pneg %p77
      $region18: #{simple_view_encoder.6} parent=11 // pred_check_branch
        %123 = sbr.rel (%p121) target = $region20
      $region19: #{simple_view_encoder.6} parent=11 // pred_region
        _
      $region20: #{simple_view_encoder.6} parent=11 // pred_fallthru
        _
    $region12: #{simple_view_encoder.6} parent=5 // pred_fallthru
      _
    %p124 = scmp.lt.s32.totalorder %s9, 16
    // Predicated region
    $region21: #{simple_view_encoder.6} parent=5 // pred_check
      %p125 = pneg %p124
    $region22: #{simple_view_encoder.6} parent=5 // pred_check_branch
      %127 = sbr.rel (%p125) target = $region24
    $region23: #{simple_view_encoder.6} parent=5 // pred_region
      // Predicated region
      $region25: #{simple_view_encoder.6} parent=23 // pred_check
        %p128 = pneg %p29
      $region26: #{simple_view_encoder.6} parent=23 // pred_check_branch
        %130 = sbr.rel (%p128) target = $region28
      $region27: #{simple_view_encoder.6} parent=23 // pred_region
        %p131 = scmp.lt.s32.totalorder %s9, 15
        %s132 = scalar_select %p131, %s9, 15
        %s133 = smul.addr %s132, 204
        %s134 = smul.addr %s133, 8
        %s135 = scalar_lea.vmem %s0, %s134
      $region28: #{simple_view_encoder.6} parent=23 // pred_fallthru
        _
    $region24: #{simple_view_encoder.6} parent=5 // pred_fallthru
      _
    %p136 = scmp.le.s32.totalorder 1, %s9
    %p137 = scmp.lt.s32.totalorder %s9, 17
    %p138 = pnand %p136, %p137
    %p139 = pneg %p138
    // Predicated region
    $region29: #{simple_view_encoder.6} parent=5 // pred_check
      _
    $region30: #{simple_view_encoder.6} parent=5 // pred_check_branch
      %141 = sbr.rel (%p138) target = $region32
    $region31: #{simple_view_encoder.6} parent=5 // pred_region
      %s142 = ssub.s32 %s9, 1
      %p143 = scmp.lt.s32.totalorder %s14, 15
      %s144 = scalar_select %p143, %s14, 15
      %s145 = smul.addr %s144, 204
      %s146 = smul.addr %s145, 8
      %s147 = scalar_lea.vmem %s0, %s146
      %p148 = pneg %p35
      %p149 = pneg %p32
      %p150 = pneg %p56
      %p151 = pneg %p53
      %p152 = pneg %p77
      %p153 = pneg %p74
      %p154 = pneg %p103
      %p155 = pneg %p100
      %p156 = scmp.lt.s32.totalorder %s14, 15
      %s157 = scalar_select %p156, %s14, 15
      %s158 = smul.addr %s157, 32
      %s159 = smul.addr %s158, 8
      %s160 = scalar_lea.vmem %s3, %s159
      %p161 = scmp.lt.s32.totalorder %s14, 15
      %s162 = scalar_select %p161, %s14, 15
      %s163 = smul.addr %s162, 204
      %s164 = smul.addr %s163, 8
      %s165 = scalar_lea.vmem %s0, %s164
      %p166 = scmp.lt.s32.totalorder %s14, 15
      %s167 = scalar_select %p166, %s14, 15
      %s168 = smul.addr %s167, 32
      %s169 = smul.addr %s168, 8
      %s170 = scalar_lea.vmem %s3, %s169
      %v171 = vld [vmem:[%s2] sm:$0x1]
      loop: start=0, step=1, limit=16
      $region33: #{simple_view_encoder.6} parent=31 // loop_pre_header
        _
      $region34: #{simple_view_encoder.6} parent=31 // loop_header
        %s173 = sphi 0, %s177
        %p174 = scmp.ge.s32.totalorder %s173, 16
      $region35: #{simple_view_encoder.6} parent=31 // loop_header_branch
        %176 = sbr.rel (%p174) target = $region39
      $region36: #{simple_view_encoder.6} parent=31 // loop_body
        %s178 = smul.u32 %s173, 24
        %s179 = scalar_lea.vmem %s165, %s178
        %v180 = vld [vmem:[%s179] sm:$0xff]
        %v181 = vld [vmem:[%s179 + $0x8] sm:$0xff]
        %v182 = vld [vmem:[%s1] sm:$0xff]
        %v183 = vld [vmem:[%s1 + $0x8] sm:$0xff]
        %v184 = vld [vmem:[%s1 + $0x10] sm:$0xff]
        %v185 = vld [vmem:[%s1 + $0x18] sm:$0xff]
        %s186 = sadd.s32 %s178, 408
        %s187 = scalar_lea.vmem %s165, %s186
        %v188 = vld [vmem:[%s187] sm:$0xff]
        %v189 = vld [vmem:[%s187 + $0x8] sm:$0xff]
        %s190 = scalar_lea.vmem %s1, 32
        %v191 = vld [vmem:[%s190] sm:$0xff]
        %v192 = vld [vmem:[%s190 + $0x8] sm:$0xff]
        %v193 = vld [vmem:[%s190 + $0x10] sm:$0xff]
        %v194 = vld [vmem:[%s190 + $0x18] sm:$0xff]
        %vm195 = vcmask 261120
        %v197 = vsel %vm195, %v188, 0
        %v200 = vsel %vm195, %v189, 0
        %202 = vmatprep.subr.mxu0 0.0
        %203 = vmatpush1.msra.mxu0 0.0
        %204 = vmatprep.subr.mxu0 0.0
        %205 = vmatpush1.msra.mxu0 0.0
        %206 = vmatprep.subr.mxu0 0.0
        %207 = vmatpush1.msra.mxu0 0.0
        %208 = vmatprep.subr.mxu0 0.0
        %209 = vmatpush1.msra.mxu0 0.0
        %210 = vmatprep.subr.mxu0 0.0
        %211 = vmatpush1.msra.mxu0 0.0
        %212 = vmatprep.subr.mxu0 0.0
        %213 = vmatpush1.msra.mxu0 0.0
        %214 = vmatprep.subr.mxu0 0.0
        %215 = vmatpush1.msra.mxu0 0.0
        %216 = vmatprep.subr.mxu0 0.0
        %217 = vmatpush1.msra.mxu0 0.0
        %218 = vmatprep.subr.mxu0 0.0
        %219 = vmatpush1.msra.mxu0 0.0
        %220 = vmatprep.subr.mxu0 0.0
        %221 = vmatpush1.msra.mxu0 0.0
        %222 = vmatprep.subr.mxu0 0.0
        %223 = vmatpush1.msra.mxu0 0.0
        %224 = vmatprep.subr.mxu0 0.0
        %225 = vmatpush1.msra.mxu0 0.0
        %226 = vmatprep.subr.mxu0 0.0
        %227 = vmatpush1.msra.mxu0 %v194
        %228 = vmatprep.subr.mxu0 0.0
        %229 = vmatpush1.msra.mxu0 %v193
        %230 = vmatprep.subr.mxu0 0.0
        %231 = vmatpush1.msra.mxu0 %v192
        %232 = vmatprep.subr.mxu0 0.0
        %233 = vmatpush1.msra.mxu0 %v191
        %234 = vmatprep.subr.mxu0 0.0
        %235 = vmatpush2.msra.mxu0 0.0
        %236 = vmatprep.subr.mxu0 0.0
        %237 = vmatpush2.msra.mxu0 0.0
        %238 = vmatprep.subr.mxu0 0.0
        %239 = vmatpush2.msra.mxu0 0.0
        %240 = vmatprep.subr.mxu0 0.0
        %241 = vmatpush2.msra.mxu0 0.0
        %242 = vmatprep.subr.mxu0 0.0
        %243 = vmatpush2.msra.mxu0 0.0
        %244 = vmatprep.subr.mxu0 0.0
        %245 = vmatpush2.msra.mxu0 0.0
        %246 = vmatprep.subr.mxu0 0.0
        %247 = vmatpush2.msra.mxu0 0.0
        %248 = vmatprep.subr.mxu0 0.0
        %249 = vmatpush2.msra.mxu0 0.0
        %250 = vmatprep.subr.mxu0 0.0
        %251 = vmatpush2.msra.mxu0 0.0
        %252 = vmatprep.subr.mxu0 0.0
        %253 = vmatpush2.msra.mxu0 0.0
        %254 = vmatprep.subr.mxu0 0.0
        %255 = vmatpush2.msra.mxu0 0.0
        %256 = vmatprep.subr.mxu0 0.0
        %257 = vmatpush2.msra.mxu0 0.0
        %258 = vmatprep.subr.mxu0 0.0
        %259 = vmatpush2.msra.mxu0 0.0
        %260 = vmatprep.subr.mxu0 0.0
        %261 = vmatpush2.msra.mxu0 0.0
        %262 = vmatprep.subr.mxu0 0.0
        %263 = vmatpush2.msra.mxu0 0.0
        %264 = vmatprep.subr.mxu0 0.0
        %265 = vmatpush2.msra.mxu0 0.0
        %266 = vmatprep.mubr.f32.mxu0 0.0
        %267 = vmatmul.mubr.f32.gmra.mxu0 %v197
        %v268 = vpop.f32.mrf.mxu0
        %v269 = vadd.f32 0.0, %v268
        %v270 = vpop.f32.mrf.mxu0
        %271 = vmatprep.mubr.f32.mxu0 0.0
        %272 = vmatmul.mubr.f32.gmra.mxu0 %v200
        %v273 = vpop.f32.mrf.mxu0
        %v274 = vadd.f32 0.0, %v273
        %v275 = vpop.f32.mrf.mxu0
        %276 = vdwg.mxu0
        %v278 = vsel %vm195, %v180, 0
        %v281 = vsel %vm195, %v181, 0
        %283 = vmatprep.subr.mxu0 0.0
        %284 = vmatpush1.msra.mxu0 0.0
        %285 = vmatprep.subr.mxu0 0.0
        %286 = vmatpush1.msra.mxu0 0.0
        %287 = vmatprep.subr.mxu0 0.0
        %288 = vmatpush1.msra.mxu0 0.0
        %289 = vmatprep.subr.mxu0 0.0
        %290 = vmatpush1.msra.mxu0 0.0
        %291 = vmatprep.subr.mxu0 0.0
        %292 = vmatpush1.msra.mxu0 0.0
        %293 = vmatprep.subr.mxu0 0.0
        %294 = vmatpush1.msra.mxu0 0.0
        %295 = vmatprep.subr.mxu0 0.0
        %296 = vmatpush1.msra.mxu0 0.0
        %297 = vmatprep.subr.mxu0 0.0
        %298 = vmatpush1.msra.mxu0 0.0
        %299 = vmatprep.subr.mxu0 0.0
        %300 = vmatpush1.msra.mxu0 0.0
        %301 = vmatprep.subr.mxu0 0.0
        %302 = vmatpush1.msra.mxu0 0.0
        %303 = vmatprep.subr.mxu0 0.0
        %304 = vmatpush1.msra.mxu0 0.0
        %305 = vmatprep.subr.mxu0 0.0
        %306 = vmatpush1.msra.mxu0 0.0
        %307 = vmatprep.subr.mxu0 0.0
        %308 = vmatpush1.msra.mxu0 %v185
        %309 = vmatprep.subr.mxu0 0.0
        %310 = vmatpush1.msra.mxu0 %v184
        %311 = vmatprep.subr.mxu0 0.0
        %312 = vmatpush1.msra.mxu0 %v183
        %313 = vmatprep.subr.mxu0 0.0
        %314 = vmatpush1.msra.mxu0 %v182
        %315 = vmatprep.subr.mxu0 0.0
        %316 = vmatpush2.msra.mxu0 0.0
        %317 = vmatprep.subr.mxu0 0.0
        %318 = vmatpush2.msra.mxu0 0.0
        %319 = vmatprep.subr.mxu0 0.0
        %320 = vmatpush2.msra.mxu0 0.0
        %321 = vmatprep.subr.mxu0 0.0
        %322 = vmatpush2.msra.mxu0 0.0
        %323 = vmatprep.subr.mxu0 0.0
        %324 = vmatpush2.msra.mxu0 0.0
        %325 = vmatprep.subr.mxu0 0.0
        %326 = vmatpush2.msra.mxu0 0.0
        %327 = vmatprep.subr.mxu0 0.0
        %328 = vmatpush2.msra.mxu0 0.0
        %329 = vmatprep.subr.mxu0 0.0
        %330 = vmatpush2.msra.mxu0 0.0
        %331 = vmatprep.subr.mxu0 0.0
        %332 = vmatpush2.msra.mxu0 0.0
        %333 = vmatprep.subr.mxu0 0.0
        %334 = vmatpush2.msra.mxu0 0.0
        %335 = vmatprep.subr.mxu0 0.0
        %336 = vmatpush2.msra.mxu0 0.0
        %337 = vmatprep.subr.mxu0 0.0
        %338 = vmatpush2.msra.mxu0 0.0
        %339 = vmatprep.subr.mxu0 0.0
        %340 = vmatpush2.msra.mxu0 0.0
        %341 = vmatprep.subr.mxu0 0.0
        %342 = vmatpush2.msra.mxu0 0.0
        %343 = vmatprep.subr.mxu0 0.0
        %344 = vmatpush2.msra.mxu0 0.0
        %345 = vmatprep.subr.mxu0 0.0
        %346 = vmatpush2.msra.mxu0 0.0
        %347 = vmatprep.mubr.f32.mxu0 0.0
        %348 = vmatmul.mubr.f32.gmra.mxu0 %v278
        %v349 = vpop.f32.mrf.mxu0
        %v350 = vadd.f32 %v269, %v349
        %v351 = vpop.f32.mrf.mxu0
        %352 = vmatprep.mubr.f32.mxu0 0.0
        %353 = vmatmul.mubr.f32.gmra.mxu0 %v281
        %v354 = vpop.f32.mrf.mxu0
        %v355 = vadd.f32 %v274, %v354
        %v356 = vpop.f32.mrf.mxu0
        %357 = vdwg.mxu0
        %v358 = vld [vmem:[%s179 + $0x1] sm:$0xff]
        %v359 = vld [vmem:[%s179 + $0x9] sm:$0xff]
        %s360 = scalar_lea.vmem %s1, 64
        %v361 = vld [vmem:[%s360] sm:$0xff]
        %v362 = vld [vmem:[%s360 + $0x8] sm:$0xff]
        %v363 = vld [vmem:[%s360 + $0x10] sm:$0xff]
        %v364 = vld [vmem:[%s360 + $0x18] sm:$0xff]
        %v366 = vsel %vm195, %v358, 0
        %v369 = vsel %vm195, %v359, 0
        %371 = vmatprep.subr.mxu0 0.0
        %372 = vmatpush1.msra.mxu0 0.0
        %373 = vmatprep.subr.mxu0 0.0
        %374 = vmatpush1.msra.mxu0 0.0
        %375 = vmatprep.subr.mxu0 0.0
        %376 = vmatpush1.msra.mxu0 0.0
        %377 = vmatprep.subr.mxu0 0.0
        %378 = vmatpush1.msra.mxu0 0.0
        %379 = vmatprep.subr.mxu0 0.0
        %380 = vmatpush1.msra.mxu0 0.0
        %381 = vmatprep.subr.mxu0 0.0
        %382 = vmatpush1.msra.mxu0 0.0
        %383 = vmatprep.subr.mxu0 0.0
        %384 = vmatpush1.msra.mxu0 0.0
        %385 = vmatprep.subr.mxu0 0.0
        %386 = vmatpush1.msra.mxu0 0.0
        %387 = vmatprep.subr.mxu0 0.0
        %388 = vmatpush1.msra.mxu0 0.0
        %389 = vmatprep.subr.mxu0 0.0
        %390 = vmatpush1.msra.mxu0 0.0
        %391 = vmatprep.subr.mxu0 0.0
        %392 = vmatpush1.msra.mxu0 0.0
        %393 = vmatprep.subr.mxu0 0.0
        %394 = vmatpush1.msra.mxu0 0.0
        %395 = vmatprep.subr.mxu0 0.0
        %396 = vmatpush1.msra.mxu0 %v364
        %397 = vmatprep.subr.mxu0 0.0
        %398 = vmatpush1.msra.mxu0 %v363
        %399 = vmatprep.subr.mxu0 0.0
        %400 = vmatpush1.msra.mxu0 %v362
        %401 = vmatprep.subr.mxu0 0.0
        %402 = vmatpush1.msra.mxu0 %v361
        %403 = vmatprep.subr.mxu0 0.0
        %404 = vmatpush2.msra.mxu0 0.0
        %405 = vmatprep.subr.mxu0 0.0
        %406 = vmatpush2.msra.mxu0 0.0
        %407 = vmatprep.subr.mxu0 0.0
        %408 = vmatpush2.msra.mxu0 0.0
        %409 = vmatprep.subr.mxu0 0.0
        %410 = vmatpush2.msra.mxu0 0.0
        %411 = vmatprep.subr.mxu0 0.0
        %412 = vmatpush2.msra.mxu0 0.0
        %413 = vmatprep.subr.mxu0 0.0
        %414 = vmatpush2.msra.mxu0 0.0
        %415 = vmatprep.subr.mxu0 0.0
        %416 = vmatpush2.msra.mxu0 0.0
        %417 = vmatprep.subr.mxu0 0.0
        %418 = vmatpush2.msra.mxu0 0.0
        %419 = vmatprep.subr.mxu0 0.0
        %420 = vmatpush2.msra.mxu0 0.0
        %421 = vmatprep.subr.mxu0 0.0
        %422 = vmatpush2.msra.mxu0 0.0
        %423 = vmatprep.subr.mxu0 0.0
        %424 = vmatpush2.msra.mxu0 0.0
        %425 = vmatprep.subr.mxu0 0.0
        %426 = vmatpush2.msra.mxu0 0.0
        %427 = vmatprep.subr.mxu0 0.0
        %428 = vmatpush2.msra.mxu0 0.0
        %429 = vmatprep.subr.mxu0 0.0
        %430 = vmatpush2.msra.mxu0 0.0
        %431 = vmatprep.subr.mxu0 0.0
        %432 = vmatpush2.msra.mxu0 0.0
        %433 = vmatprep.subr.mxu0 0.0
        %434 = vmatpush2.msra.mxu0 0.0
        %435 = vmatprep.mubr.f32.mxu0 0.0
        %436 = vmatmul.mubr.f32.gmra.mxu0 %v366
        %v437 = vpop.f32.mrf.mxu0
        %v438 = vadd.f32 0.0, %v437
        %v439 = vpop.f32.mrf.mxu0
        %440 = vmatprep.mubr.f32.mxu0 0.0
        %441 = vmatmul.mubr.f32.gmra.mxu0 %v369
        %v442 = vpop.f32.mrf.mxu0
        %v443 = vadd.f32 0.0, %v442
        %v444 = vpop.f32.mrf.mxu0
        %445 = vdwg.mxu0
        %v446 = vadd.f32 %v350, %v438
        %v447 = vadd.f32 %v355, %v443
        %s448 = sadd.s32 %s178, 816
        %s449 = scalar_lea.vmem %s165, %s448
        %v450 = vld [vmem:[%s449] sm:$0xff]
        %v451 = vld [vmem:[%s449 + $0x8] sm:$0xff]
        %s452 = scalar_lea.vmem %s1, 96
        %v453 = vld [vmem:[%s452] sm:$0xff]
        %v454 = vld [vmem:[%s452 + $0x8] sm:$0xff]
        %v455 = vld [vmem:[%s452 + $0x10] sm:$0xff]
        %v456 = vld [vmem:[%s452 + $0x18] sm:$0xff]
        %v458 = vsel %vm195, %v450, 0
        %v461 = vsel %vm195, %v451, 0
        %463 = vmatprep.subr.mxu0 0.0
        %464 = vmatpush1.msra.mxu0 0.0
        %465 = vmatprep.subr.mxu0 0.0
        %466 = vmatpush1.msra.mxu0 0.0
        %467 = vmatprep.subr.mxu0 0.0
        %468 = vmatpush1.msra.mxu0 0.0
        %469 = vmatprep.subr.mxu0 0.0
        %470 = vmatpush1.msra.mxu0 0.0
        %471 = vmatprep.subr.mxu0 0.0
        %472 = vmatpush1.msra.mxu0 0.0
        %473 = vmatprep.subr.mxu0 0.0
        %474 = vmatpush1.msra.mxu0 0.0
        %475 = vmatprep.subr.mxu0 0.0
        %476 = vmatpush1.msra.mxu0 0.0
        %477 = vmatprep.subr.mxu0 0.0
        %478 = vmatpush1.msra.mxu0 0.0
        %479 = vmatprep.subr.mxu0 0.0
        %480 = vmatpush1.msra.mxu0 0.0
        %481 = vmatprep.subr.mxu0 0.0
        %482 = vmatpush1.msra.mxu0 0.0
        %483 = vmatprep.subr.mxu0 0.0
        %484 = vmatpush1.msra.mxu0 0.0
        %485 = vmatprep.subr.mxu0 0.0
        %486 = vmatpush1.msra.mxu0 0.0
        %487 = vmatprep.subr.mxu0 0.0
        %488 = vmatpush1.msra.mxu0 %v456
        %489 = vmatprep.subr.mxu0 0.0
        %490 = vmatpush1.msra.mxu0 %v455
        %491 = vmatprep.subr.mxu0 0.0
        %492 = vmatpush1.msra.mxu0 %v454
        %493 = vmatprep.subr.mxu0 0.0
        %494 = vmatpush1.msra.mxu0 %v453
        %495 = vmatprep.subr.mxu0 0.0
        %496 = vmatpush2.msra.mxu0 0.0
        %497 = vmatprep.subr.mxu0 0.0
        %498 = vmatpush2.msra.mxu0 0.0
        %499 = vmatprep.subr.mxu0 0.0
        %500 = vmatpush2.msra.mxu0 0.0
        %501 = vmatprep.subr.mxu0 0.0
        %502 = vmatpush2.msra.mxu0 0.0
        %503 = vmatprep.subr.mxu0 0.0
        %504 = vmatpush2.msra.mxu0 0.0
        %505 = vmatprep.subr.mxu0 0.0
        %506 = vmatpush2.msra.mxu0 0.0
        %507 = vmatprep.subr.mxu0 0.0
        %508 = vmatpush2.msra.mxu0 0.0
        %509 = vmatprep.subr.mxu0 0.0
        %510 = vmatpush2.msra.mxu0 0.0
        %511 = vmatprep.subr.mxu0 0.0
        %512 = vmatpush2.msra.mxu0 0.0
        %513 = vmatprep.subr.mxu0 0.0
        %514 = vmatpush2.msra.mxu0 0.0
        %515 = vmatprep.subr.mxu0 0.0
        %516 = vmatpush2.msra.mxu0 0.0
        %517 = vmatprep.subr.mxu0 0.0
        %518 = vmatpush2.msra.mxu0 0.0
        %519 = vmatprep.subr.mxu0 0.0
        %520 = vmatpush2.msra.mxu0 0.0
        %521 = vmatprep.subr.mxu0 0.0
        %522 = vmatpush2.msra.mxu0 0.0
        %523 = vmatprep.subr.mxu0 0.0
        %524 = vmatpush2.msra.mxu0 0.0
        %525 = vmatprep.subr.mxu0 0.0
        %526 = vmatpush2.msra.mxu0 0.0
        %527 = vmatprep.mubr.f32.mxu0 0.0
        %528 = vmatmul.mubr.f32.gmra.mxu0 %v458
        %v529 = vpop.f32.mrf.mxu0
        %v530 = vadd.f32 0.0, %v529
        %v531 = vpop.f32.mrf.mxu0
        %532 = vmatprep.mubr.f32.mxu0 0.0
        %533 = vmatmul.mubr.f32.gmra.mxu0 %v461
        %v534 = vpop.f32.mrf.mxu0
        %v535 = vadd.f32 0.0, %v534
        %v536 = vpop.f32.mrf.mxu0
        %537 = vdwg.mxu0
        %v538 = vadd.f32 %v446, %v530
        %v539 = vadd.f32 %v447, %v535
        %s540 = sadd.s32 %s178, 1224
        %s541 = scalar_lea.vmem %s165, %s540
        %v542 = vld [vmem:[%s541] sm:$0xff]
        %v543 = vld [vmem:[%s541 + $0x8] sm:$0xff]
        %s544 = scalar_lea.vmem %s1, 128
        %v545 = vld [vmem:[%s544] sm:$0xff]
        %v546 = vld [vmem:[%s544 + $0x8] sm:$0xff]
        %v547 = vld [vmem:[%s544 + $0x10] sm:$0xff]
        %v548 = vld [vmem:[%s544 + $0x18] sm:$0xff]
        %v550 = vsel %vm195, %v542, 0
        %v553 = vsel %vm195, %v543, 0
        %555 = vmatprep.subr.mxu0 0.0
        %556 = vmatpush1.msra.mxu0 0.0
        %557 = vmatprep.subr.mxu0 0.0
        %558 = vmatpush1.msra.mxu0 0.0
        %559 = vmatprep.subr.mxu0 0.0
        %560 = vmatpush1.msra.mxu0 0.0
        %561 = vmatprep.subr.mxu0 0.0
        %562 = vmatpush1.msra.mxu0 0.0
        %563 = vmatprep.subr.mxu0 0.0
        %564 = vmatpush1.msra.mxu0 0.0
        %565 = vmatprep.subr.mxu0 0.0
        %566 = vmatpush1.msra.mxu0 0.0
        %567 = vmatprep.subr.mxu0 0.0
        %568 = vmatpush1.msra.mxu0 0.0
        %569 = vmatprep.subr.mxu0 0.0
        %570 = vmatpush1.msra.mxu0 0.0
        %571 = vmatprep.subr.mxu0 0.0
        %572 = vmatpush1.msra.mxu0 0.0
        %573 = vmatprep.subr.mxu0 0.0
        %574 = vmatpush1.msra.mxu0 0.0
        %575 = vmatprep.subr.mxu0 0.0
        %576 = vmatpush1.msra.mxu0 0.0
        %577 = vmatprep.subr.mxu0 0.0
        %578 = vmatpush1.msra.mxu0 0.0
        %579 = vmatprep.subr.mxu0 0.0
        %580 = vmatpush1.msra.mxu0 %v548
        %581 = vmatprep.subr.mxu0 0.0
        %582 = vmatpush1.msra.mxu0 %v547
        %583 = vmatprep.subr.mxu0 0.0
        %584 = vmatpush1.msra.mxu0 %v546
        %585 = vmatprep.subr.mxu0 0.0
        %586 = vmatpush1.msra.mxu0 %v545
        %587 = vmatprep.subr.mxu0 0.0
        %588 = vmatpush2.msra.mxu0 0.0
        %589 = vmatprep.subr.mxu0 0.0
        %590 = vmatpush2.msra.mxu0 0.0
        %591 = vmatprep.subr.mxu0 0.0
        %592 = vmatpush2.msra.mxu0 0.0
        %593 = vmatprep.subr.mxu0 0.0
        %594 = vmatpush2.msra.mxu0 0.0
        %595 = vmatprep.subr.mxu0 0.0
        %596 = vmatpush2.msra.mxu0 0.0
        %597 = vmatprep.subr.mxu0 0.0
        %598 = vmatpush2.msra.mxu0 0.0
        %599 = vmatprep.subr.mxu0 0.0
        %600 = vmatpush2.msra.mxu0 0.0
        %601 = vmatprep.subr.mxu0 0.0
        %602 = vmatpush2.msra.mxu0 0.0
        %603 = vmatprep.subr.mxu0 0.0
        %604 = vmatpush2.msra.mxu0 0.0
        %605 = vmatprep.subr.mxu0 0.0
        %606 = vmatpush2.msra.mxu0 0.0
        %607 = vmatprep.subr.mxu0 0.0
        %608 = vmatpush2.msra.mxu0 0.0
        %609 = vmatprep.subr.mxu0 0.0
        %610 = vmatpush2.msra.mxu0 0.0
        %611 = vmatprep.subr.mxu0 0.0
        %612 = vmatpush2.msra.mxu0 0.0
        %613 = vmatprep.subr.mxu0 0.0
        %614 = vmatpush2.msra.mxu0 0.0
        %615 = vmatprep.subr.mxu0 0.0
        %616 = vmatpush2.msra.mxu0 0.0
        %617 = vmatprep.subr.mxu0 0.0
        %618 = vmatpush2.msra.mxu0 0.0
        %619 = vmatprep.mubr.f32.mxu0 0.0
        %620 = vmatmul.mubr.f32.gmra.mxu0 %v550
        %v621 = vpop.f32.mrf.mxu0
        %v622 = vadd.f32 0.0, %v621
        %v623 = vpop.f32.mrf.mxu0
        %624 = vmatprep.mubr.f32.mxu0 0.0
        %625 = vmatmul.mubr.f32.gmra.mxu0 %v553
        %v626 = vpop.f32.mrf.mxu0
        %v627 = vadd.f32 0.0, %v626
        %v628 = vpop.f32.mrf.mxu0
        %629 = vdwg.mxu0
        %v630 = vadd.f32 %v538, %v622
        %v631 = vadd.f32 %v539, %v627
        %v632 = vld [vmem:[%s449 + $0x1] sm:$0xff]
        %v633 = vld [vmem:[%s449 + $0x9] sm:$0xff]
        %s634 = scalar_lea.vmem %s1, 160
        %v635 = vld [vmem:[%s634] sm:$0xff]
        %v636 = vld [vmem:[%s634 + $0x8] sm:$0xff]
        %v637 = vld [vmem:[%s634 + $0x10] sm:$0xff]
        %v638 = vld [vmem:[%s634 + $0x18] sm:$0xff]
        %v640 = vsel %vm195, %v632, 0
        %v643 = vsel %vm195, %v633, 0
        %645 = vmatprep.subr.mxu0 0.0
        %646 = vmatpush1.msra.mxu0 0.0
        %647 = vmatprep.subr.mxu0 0.0
        %648 = vmatpush1.msra.mxu0 0.0
        %649 = vmatprep.subr.mxu0 0.0
        %650 = vmatpush1.msra.mxu0 0.0
        %651 = vmatprep.subr.mxu0 0.0
        %652 = vmatpush1.msra.mxu0 0.0
        %653 = vmatprep.subr.mxu0 0.0
        %654 = vmatpush1.msra.mxu0 0.0
        %655 = vmatprep.subr.mxu0 0.0
        %656 = vmatpush1.msra.mxu0 0.0
        %657 = vmatprep.subr.mxu0 0.0
        %658 = vmatpush1.msra.mxu0 0.0
        %659 = vmatprep.subr.mxu0 0.0
        %660 = vmatpush1.msra.mxu0 0.0
        %661 = vmatprep.subr.mxu0 0.0
        %662 = vmatpush1.msra.mxu0 0.0
        %663 = vmatprep.subr.mxu0 0.0
        %664 = vmatpush1.msra.mxu0 0.0
        %665 = vmatprep.subr.mxu0 0.0
        %666 = vmatpush1.msra.mxu0 0.0
        %667 = vmatprep.subr.mxu0 0.0
        %668 = vmatpush1.msra.mxu0 0.0
        %669 = vmatprep.subr.mxu0 0.0
        %670 = vmatpush1.msra.mxu0 %v638
        %671 = vmatprep.subr.mxu0 0.0
        %672 = vmatpush1.msra.mxu0 %v637
        %673 = vmatprep.subr.mxu0 0.0
        %674 = vmatpush1.msra.mxu0 %v636
        %675 = vmatprep.subr.mxu0 0.0
        %676 = vmatpush1.msra.mxu0 %v635
        %677 = vmatprep.subr.mxu0 0.0
        %678 = vmatpush2.msra.mxu0 0.0
        %679 = vmatprep.subr.mxu0 0.0
        %680 = vmatpush2.msra.mxu0 0.0
        %681 = vmatprep.subr.mxu0 0.0
        %682 = vmatpush2.msra.mxu0 0.0
        %683 = vmatprep.subr.mxu0 0.0
        %684 = vmatpush2.msra.mxu0 0.0
        %685 = vmatprep.subr.mxu0 0.0
        %686 = vmatpush2.msra.mxu0 0.0
        %687 = vmatprep.subr.mxu0 0.0
        %688 = vmatpush2.msra.mxu0 0.0
        %689 = vmatprep.subr.mxu0 0.0
        %690 = vmatpush2.msra.mxu0 0.0
        %691 = vmatprep.subr.mxu0 0.0
        %692 = vmatpush2.msra.mxu0 0.0
        %693 = vmatprep.subr.mxu0 0.0
        %694 = vmatpush2.msra.mxu0 0.0
        %695 = vmatprep.subr.mxu0 0.0
        %696 = vmatpush2.msra.mxu0 0.0
        %697 = vmatprep.subr.mxu0 0.0
        %698 = vmatpush2.msra.mxu0 0.0
        %699 = vmatprep.subr.mxu0 0.0
        %700 = vmatpush2.msra.mxu0 0.0
        %701 = vmatprep.subr.mxu0 0.0
        %702 = vmatpush2.msra.mxu0 0.0
        %703 = vmatprep.subr.mxu0 0.0
        %704 = vmatpush2.msra.mxu0 0.0
        %705 = vmatprep.subr.mxu0 0.0
        %706 = vmatpush2.msra.mxu0 0.0
        %707 = vmatprep.subr.mxu0 0.0
        %708 = vmatpush2.msra.mxu0 0.0
        %709 = vmatprep.mubr.f32.mxu0 0.0
        %710 = vmatmul.mubr.f32.gmra.mxu0 %v640
        %v711 = vpop.f32.mrf.mxu0
        %v712 = vadd.f32 0.0, %v711
        %v713 = vpop.f32.mrf.mxu0
        %714 = vmatprep.mubr.f32.mxu0 0.0
        %715 = vmatmul.mubr.f32.gmra.mxu0 %v643
        %v716 = vpop.f32.mrf.mxu0
        %v717 = vadd.f32 0.0, %v716
        %v718 = vpop.f32.mrf.mxu0
        %719 = vdwg.mxu0
        %v720 = vadd.f32 %v630, %v712
        %v721 = vadd.f32 %v631, %v717
        %s722 = sadd.s32 %s173, 1
        %s723 = smul.u32 %s722, 24
        %s724 = scalar_lea.vmem %s165, %s723
        %v725 = vld [vmem:[%s724] sm:$0xff]
        %v726 = vld [vmem:[%s724 + $0x8] sm:$0xff]
        %s727 = scalar_lea.vmem %s1, 192
        %v728 = vld [vmem:[%s727] sm:$0xff]
        %v729 = vld [vmem:[%s727 + $0x8] sm:$0xff]
        %v730 = vld [vmem:[%s727 + $0x10] sm:$0xff]
        %v731 = vld [vmem:[%s727 + $0x18] sm:$0xff]
        %v733 = vsel %vm195, %v725, 0
        %v736 = vsel %vm195, %v726, 0
        %738 = vmatprep.subr.mxu0 0.0
        %739 = vmatpush1.msra.mxu0 0.0
        %740 = vmatprep.subr.mxu0 0.0
        %741 = vmatpush1.msra.mxu0 0.0
        %742 = vmatprep.subr.mxu0 0.0
        %743 = vmatpush1.msra.mxu0 0.0
        %744 = vmatprep.subr.mxu0 0.0
        %745 = vmatpush1.msra.mxu0 0.0
        %746 = vmatprep.subr.mxu0 0.0
        %747 = vmatpush1.msra.mxu0 0.0
        %748 = vmatprep.subr.mxu0 0.0
        %749 = vmatpush1.msra.mxu0 0.0
        %750 = vmatprep.subr.mxu0 0.0
        %751 = vmatpush1.msra.mxu0 0.0
        %752 = vmatprep.subr.mxu0 0.0
        %753 = vmatpush1.msra.mxu0 0.0
        %754 = vmatprep.subr.mxu0 0.0
        %755 = vmatpush1.msra.mxu0 0.0
        %756 = vmatprep.subr.mxu0 0.0
        %757 = vmatpush1.msra.mxu0 0.0
        %758 = vmatprep.subr.mxu0 0.0
        %759 = vmatpush1.msra.mxu0 0.0
        %760 = vmatprep.subr.mxu0 0.0
        %761 = vmatpush1.msra.mxu0 0.0
        %762 = vmatprep.subr.mxu0 0.0
        %763 = vmatpush1.msra.mxu0 %v731
        %764 = vmatprep.subr.mxu0 0.0
        %765 = vmatpush1.msra.mxu0 %v730
        %766 = vmatprep.subr.mxu0 0.0
        %767 = vmatpush1.msra.mxu0 %v729
        %768 = vmatprep.subr.mxu0 0.0
        %769 = vmatpush1.msra.mxu0 %v728
        %770 = vmatprep.subr.mxu0 0.0
        %771 = vmatpush2.msra.mxu0 0.0
        %772 = vmatprep.subr.mxu0 0.0
        %773 = vmatpush2.msra.mxu0 0.0
        %774 = vmatprep.subr.mxu0 0.0
        %775 = vmatpush2.msra.mxu0 0.0
        %776 = vmatprep.subr.mxu0 0.0
        %777 = vmatpush2.msra.mxu0 0.0
        %778 = vmatprep.subr.mxu0 0.0
        %779 = vmatpush2.msra.mxu0 0.0
        %780 = vmatprep.subr.mxu0 0.0
        %781 = vmatpush2.msra.mxu0 0.0
        %782 = vmatprep.subr.mxu0 0.0
        %783 = vmatpush2.msra.mxu0 0.0
        %784 = vmatprep.subr.mxu0 0.0
        %785 = vmatpush2.msra.mxu0 0.0
        %786 = vmatprep.subr.mxu0 0.0
        %787 = vmatpush2.msra.mxu0 0.0
        %788 = vmatprep.subr.mxu0 0.0
        %789 = vmatpush2.msra.mxu0 0.0
        %790 = vmatprep.subr.mxu0 0.0
        %791 = vmatpush2.msra.mxu0 0.0
        %792 = vmatprep.subr.mxu0 0.0
        %793 = vmatpush2.msra.mxu0 0.0
        %794 = vmatprep.subr.mxu0 0.0
        %795 = vmatpush2.msra.mxu0 0.0
        %796 = vmatprep.subr.mxu0 0.0
        %797 = vmatpush2.msra.mxu0 0.0
        %798 = vmatprep.subr.mxu0 0.0
        %799 = vmatpush2.msra.mxu0 0.0
        %800 = vmatprep.subr.mxu0 0.0
        %801 = vmatpush2.msra.mxu0 0.0
        %802 = vmatprep.mubr.f32.mxu0 0.0
        %803 = vmatmul.mubr.f32.gmra.mxu0 %v733
        %v804 = vpop.f32.mrf.mxu0
        %v805 = vadd.f32 0.0, %v804
        %v806 = vpop.f32.mrf.mxu0
        %807 = vmatprep.mubr.f32.mxu0 0.0
        %808 = vmatmul.mubr.f32.gmra.mxu0 %v736
        %v809 = vpop.f32.mrf.mxu0
        %v810 = vadd.f32 0.0, %v809
        %v811 = vpop.f32.mrf.mxu0
        %812 = vdwg.mxu0
        %v813 = vadd.f32 %v720, %v805
        %v814 = vadd.f32 %v721, %v810
        %s815 = sadd.s32 %s723, 408
        %s816 = scalar_lea.vmem %s165, %s815
        %v817 = vld [vmem:[%s816] sm:$0xff]
        %v818 = vld [vmem:[%s816 + $0x8] sm:$0xff]
        %s819 = scalar_lea.vmem %s1, 224
        %v820 = vld [vmem:[%s819] sm:$0xff]
        %v821 = vld [vmem:[%s819 + $0x8] sm:$0xff]
        %v822 = vld [vmem:[%s819 + $0x10] sm:$0xff]
        %v823 = vld [vmem:[%s819 + $0x18] sm:$0xff]
        %v825 = vsel %vm195, %v817, 0
        %v828 = vsel %vm195, %v818, 0
        %830 = vmatprep.subr.mxu0 0.0
        %831 = vmatpush1.msra.mxu0 0.0
        %832 = vmatprep.subr.mxu0 0.0
        %833 = vmatpush1.msra.mxu0 0.0
        %834 = vmatprep.subr.mxu0 0.0
        %835 = vmatpush1.msra.mxu0 0.0
        %836 = vmatprep.subr.mxu0 0.0
        %837 = vmatpush1.msra.mxu0 0.0
        %838 = vmatprep.subr.mxu0 0.0
        %839 = vmatpush1.msra.mxu0 0.0
        %840 = vmatprep.subr.mxu0 0.0
        %841 = vmatpush1.msra.mxu0 0.0
        %842 = vmatprep.subr.mxu0 0.0
        %843 = vmatpush1.msra.mxu0 0.0
        %844 = vmatprep.subr.mxu0 0.0
        %845 = vmatpush1.msra.mxu0 0.0
        %846 = vmatprep.subr.mxu0 0.0
        %847 = vmatpush1.msra.mxu0 0.0
        %848 = vmatprep.subr.mxu0 0.0
        %849 = vmatpush1.msra.mxu0 0.0
        %850 = vmatprep.subr.mxu0 0.0
        %851 = vmatpush1.msra.mxu0 0.0
        %852 = vmatprep.subr.mxu0 0.0
        %853 = vmatpush1.msra.mxu0 0.0
        %854 = vmatprep.subr.mxu0 0.0
        %855 = vmatpush1.msra.mxu0 %v823
        %856 = vmatprep.subr.mxu0 0.0
        %857 = vmatpush1.msra.mxu0 %v822
        %858 = vmatprep.subr.mxu0 0.0
        %859 = vmatpush1.msra.mxu0 %v821
        %860 = vmatprep.subr.mxu0 0.0
        %861 = vmatpush1.msra.mxu0 %v820
        %862 = vmatprep.subr.mxu0 0.0
        %863 = vmatpush2.msra.mxu0 0.0
        %864 = vmatprep.subr.mxu0 0.0
        %865 = vmatpush2.msra.mxu0 0.0
        %866 = vmatprep.subr.mxu0 0.0
        %867 = vmatpush2.msra.mxu0 0.0
        %868 = vmatprep.subr.mxu0 0.0
        %869 = vmatpush2.msra.mxu0 0.0
        %870 = vmatprep.subr.mxu0 0.0
        %871 = vmatpush2.msra.mxu0 0.0
        %872 = vmatprep.subr.mxu0 0.0
        %873 = vmatpush2.msra.mxu0 0.0
        %874 = vmatprep.subr.mxu0 0.0
        %875 = vmatpush2.msra.mxu0 0.0
        %876 = vmatprep.subr.mxu0 0.0
        %877 = vmatpush2.msra.mxu0 0.0
        %878 = vmatprep.subr.mxu0 0.0
        %879 = vmatpush2.msra.mxu0 0.0
        %880 = vmatprep.subr.mxu0 0.0
        %881 = vmatpush2.msra.mxu0 0.0
        %882 = vmatprep.subr.mxu0 0.0
        %883 = vmatpush2.msra.mxu0 0.0
        %884 = vmatprep.subr.mxu0 0.0
        %885 = vmatpush2.msra.mxu0 0.0
        %886 = vmatprep.subr.mxu0 0.0
        %887 = vmatpush2.msra.mxu0 0.0
        %888 = vmatprep.subr.mxu0 0.0
        %889 = vmatpush2.msra.mxu0 0.0
        %890 = vmatprep.subr.mxu0 0.0
        %891 = vmatpush2.msra.mxu0 0.0
        %892 = vmatprep.subr.mxu0 0.0
        %893 = vmatpush2.msra.mxu0 0.0
        %894 = vmatprep.mubr.f32.mxu0 0.0
        %895 = vmatmul.mubr.f32.gmra.mxu0 %v825
        %v896 = vpop.f32.mrf.mxu0
        %v897 = vadd.f32 0.0, %v896
        %v898 = vpop.f32.mrf.mxu0
        %899 = vmatprep.mubr.f32.mxu0 0.0
        %900 = vmatmul.mubr.f32.gmra.mxu0 %v828
        %v901 = vpop.f32.mrf.mxu0
        %v902 = vadd.f32 0.0, %v901
        %v903 = vpop.f32.mrf.mxu0
        %904 = vdwg.mxu0
        %v905 = vadd.f32 %v813, %v897
        %v906 = vadd.f32 %v814, %v902
        %v907 = vld [vmem:[%s724 + $0x1] sm:$0xff]
        %v908 = vld [vmem:[%s724 + $0x9] sm:$0xff]
        %s909 = scalar_lea.vmem %s1, 256
        %v910 = vld [vmem:[%s909] sm:$0xff]
        %v911 = vld [vmem:[%s909 + $0x8] sm:$0xff]
        %v912 = vld [vmem:[%s909 + $0x10] sm:$0xff]
        %v913 = vld [vmem:[%s909 + $0x18] sm:$0xff]
        %v915 = vsel %vm195, %v907, 0
        %v918 = vsel %vm195, %v908, 0
        %920 = vmatprep.subr.mxu0 0.0
        %921 = vmatpush1.msra.mxu0 0.0
        %922 = vmatprep.subr.mxu0 0.0
        %923 = vmatpush1.msra.mxu0 0.0
        %924 = vmatprep.subr.mxu0 0.0
        %925 = vmatpush1.msra.mxu0 0.0
        %926 = vmatprep.subr.mxu0 0.0
        %927 = vmatpush1.msra.mxu0 0.0
        %928 = vmatprep.subr.mxu0 0.0
        %929 = vmatpush1.msra.mxu0 0.0
        %930 = vmatprep.subr.mxu0 0.0
        %931 = vmatpush1.msra.mxu0 0.0
        %932 = vmatprep.subr.mxu0 0.0
        %933 = vmatpush1.msra.mxu0 0.0
        %934 = vmatprep.subr.mxu0 0.0
        %935 = vmatpush1.msra.mxu0 0.0
        %936 = vmatprep.subr.mxu0 0.0
        %937 = vmatpush1.msra.mxu0 0.0
        %938 = vmatprep.subr.mxu0 0.0
        %939 = vmatpush1.msra.mxu0 0.0
        %940 = vmatprep.subr.mxu0 0.0
        %941 = vmatpush1.msra.mxu0 0.0
        %942 = vmatprep.subr.mxu0 0.0
        %943 = vmatpush1.msra.mxu0 0.0
        %944 = vmatprep.subr.mxu0 0.0
        %945 = vmatpush1.msra.mxu0 %v913
        %946 = vmatprep.subr.mxu0 0.0
        %947 = vmatpush1.msra.mxu0 %v912
        %948 = vmatprep.subr.mxu0 0.0
        %949 = vmatpush1.msra.mxu0 %v911
        %950 = vmatprep.subr.mxu0 0.0
        %951 = vmatpush1.msra.mxu0 %v910
        %952 = vmatprep.subr.mxu0 0.0
        %953 = vmatpush2.msra.mxu0 0.0
        %954 = vmatprep.subr.mxu0 0.0
        %955 = vmatpush2.msra.mxu0 0.0
        %956 = vmatprep.subr.mxu0 0.0
        %957 = vmatpush2.msra.mxu0 0.0
        %958 = vmatprep.subr.mxu0 0.0
        %959 = vmatpush2.msra.mxu0 0.0
        %960 = vmatprep.subr.mxu0 0.0
        %961 = vmatpush2.msra.mxu0 0.0
        %962 = vmatprep.subr.mxu0 0.0
        %963 = vmatpush2.msra.mxu0 0.0
        %964 = vmatprep.subr.mxu0 0.0
        %965 = vmatpush2.msra.mxu0 0.0
        %966 = vmatprep.subr.mxu0 0.0
        %967 = vmatpush2.msra.mxu0 0.0
        %968 = vmatprep.subr.mxu0 0.0
        %969 = vmatpush2.msra.mxu0 0.0
        %970 = vmatprep.subr.mxu0 0.0
        %971 = vmatpush2.msra.mxu0 0.0
        %972 = vmatprep.subr.mxu0 0.0
        %973 = vmatpush2.msra.mxu0 0.0
        %974 = vmatprep.subr.mxu0 0.0
        %975 = vmatpush2.msra.mxu0 0.0
        %976 = vmatprep.subr.mxu0 0.0
        %977 = vmatpush2.msra.mxu0 0.0
        %978 = vmatprep.subr.mxu0 0.0
        %979 = vmatpush2.msra.mxu0 0.0
        %980 = vmatprep.subr.mxu0 0.0
        %981 = vmatpush2.msra.mxu0 0.0
        %982 = vmatprep.subr.mxu0 0.0
        %983 = vmatpush2.msra.mxu0 0.0
        %984 = vmatprep.mubr.f32.mxu0 0.0
        %985 = vmatmul.mubr.f32.gmra.mxu0 %v915
        %v986 = vpop.f32.mrf.mxu0
        %v987 = vadd.f32 0.0, %v986
        %v988 = vpop.f32.mrf.mxu0
        %989 = vmatprep.mubr.f32.mxu0 0.0
        %990 = vmatmul.mubr.f32.gmra.mxu0 %v918
        %v991 = vpop.f32.mrf.mxu0
        %v992 = vadd.f32 0.0, %v991
        %v993 = vpop.f32.mrf.mxu0
        %994 = vdwg.mxu0
        %v995 = vadd.f32 %v905, %v987
        %v996 = vadd.f32 %v906, %v992
        %v998 = vlaneseq
        %v999 = vshrl.u32 %v998, 7
        %v1000 = vsub.s32 0, %v999
        %v1001 = vrot.slane %v171, %v1000
        %v1003 = vadd.f32 %v995, %v1001
        %v1004 = vadd.f32 %v996, %v1001
        %v1005 = vmax.f32 %v1003, 0.0
        %v1006 = vmax.f32 %v1004, 0.0
        %s1007 = smul.u32 %s173, 16
        %s1008 = scalar_lea.vmem %s170, %s1007
        %vm1009 = vcmask 523264
        %1010 = vst.msk [vmem:[%s1008] sm:$0xff] %vm1009, %v1005
        %1011 = vst.msk [vmem:[%s1008 + $0x8] sm:$0xff] %vm1009, %v1006
      $region37: #{simple_view_encoder.6} parent=31 // loop_footer
        %s177 = sadd.s32 1, %s173
      $region38: #{simple_view_encoder.6} parent=31 // loop_footer_branch
        %172 = sbr.rel target = $region34
      $region39: #{simple_view_encoder.6} parent=31 // loop_exit
        _
      %p1012 = scmp.lt.s32.totalorder %s14, 15
      %s1013 = scalar_select %p1012, %s14, 15
      %s1014 = smul.addr %s1013, 32
      %s1015 = smul.addr %s1014, 8
      %s1016 = scalar_lea.vmem %s3, %s1015
      // Predicated region
      $region40: #{simple_view_encoder.6} parent=31 // pred_check
        %p1017 = pneg %p100
      $region41: #{simple_view_encoder.6} parent=31 // pred_check_branch
        %1019 = sbr.rel (%p1017) target = $region43
      $region42: #{simple_view_encoder.6} parent=31 // pred_region
        _
      $region43: #{simple_view_encoder.6} parent=31 // pred_fallthru
        _
    $region32: #{simple_view_encoder.6} parent=5 // pred_fallthru
      _
    %p1020 = scmp.le.s32.totalorder 2, %s9
    // Predicated region
    $region44: #{simple_view_encoder.6} parent=5 // pred_check
      %p1021 = pneg %p1020
    $region45: #{simple_view_encoder.6} parent=5 // pred_check_branch
      %1023 = sbr.rel (%p1021) target = $region47
    $region46: #{simple_view_encoder.6} parent=5 // pred_region
      %s1024 = ssub.s32 %s9, 2
      // Predicated region
      $region48: #{simple_view_encoder.6} parent=46 // pred_check
        %p1025 = pneg %p106
      $region49: #{simple_view_encoder.6} parent=46 // pred_check_branch
        %1027 = sbr.rel (%p1025) target = $region51
      $region50: #{simple_view_encoder.6} parent=46 // pred_region
        %p1028 = scmp.lt.s32.totalorder %s15, 15
        %s1029 = scalar_select %p1028, %s15, 15
        %s1030 = smul.addr %s1029, 32
        %s1031 = smul.addr %s1030, 8
        %s1032 = scalar_lea.vmem %s3, %s1031
      $region51: #{simple_view_encoder.6} parent=46 // pred_fallthru
        _
    $region47: #{simple_view_encoder.6} parent=5 // pred_fallthru
      _
  $region6: #{simple_view_encoder.6} parent=0 // loop_footer
    %s13 = sadd.s32 1, %s9
  $region7: #{simple_view_encoder.6} parent=0 // loop_footer_branch
    %8 = sbr.rel target = $region3
  $region8: #{simple_view_encoder.6} parent=0 // loop_exit
    _

// kernel: simple_view_encoder.7
$region0: #{simple_view_encoder.7}
  #allocation0 [shape = 'u32[]', space=smem, size = 0x4, offset = 0x4, fixed_abs, tag = 'smem constant byte address 0x4 - core index']
  #allocation1 [shape = 'u32[144,128]{1,0:T(1,128)}', space=vmem, size = 0x12000, scoped, tag = 'internal scratch']
  %s0 = inlined_call_operand.vmem [shape: f32[16,4,9,9,64], index: 0, kind: input, shape index: {}]
  %s1 = inlined_call_operand.vmem [shape: f32[3,3,64,128], index: 1, kind: input, shape index: {}]
  %s2 = inlined_call_operand.vmem [shape: f32[1,128], index: 2, kind: input, shape index: {}]
  %s3 = inlined_call_operand.vmem [shape: f32[16,8,8,128], index: 3, kind: output, shape index: {}]
  %s4 = sld [smem:[#allocation0]]
  $region52: #{simple_view_encoder.7} parent=0
    _
  %s6 = ssub.s32 1, %s4
  %s7 = scalar_select 0, %s6, %s4
  loop: start=0, step=1, limit=18
  $region2: #{simple_view_encoder.7} parent=0 // loop_pre_header
    _
  $region3: #{simple_view_encoder.7} parent=0 // loop_header
    %s9 = sphi 0, %s13
    %p10 = scmp.ge.s32.totalorder %s9, 18
    %s19 = sphi 0, %s21
    %s22 = sphi 0, %s19
    %s23 = sphi 0, %s22
    %s39 = sphi 0, %s23
    %s43 = sphi 0, %s43
    %s45 = sphi 0, %s43
    %s46 = sphi 0, %s45
    %s60 = sphi 0, %s46
    %s64 = sphi 0, %s64
    %s66 = sphi 0, %s64
    %s67 = sphi 0, %s66
    %s81 = sphi 0, %s67
    %s87 = sphi 0, %s89
    %s90 = sphi 0, %s87
    %s91 = sphi 0, %s90
    %s107 = sphi 0, %s91
  $region4: #{simple_view_encoder.7} parent=0 // loop_header_branch
    %12 = sbr.rel (%p10) target = $region8
  $region5: #{simple_view_encoder.7} parent=0 // loop_body
    %s14 = ssub.s32 %s9, 1
    %s15 = ssub.s32 %s9, 2
    %s16 = sadd.s32 %s9, 1
    %s17 = ssub.s32 %s9, %s16
    %p18 = scmp.eq.s32.totalorder %s17, 0
    %s20 = sadd.s32 %s19, 1
    %s21 = scalar_select %p18, %s19, %s20
    %p24 = pneg %p18
    %p25 = scmp.eq.s32.totalorder %s9, 15
    %p26 = por %p24, %p25
    %p27 = scmp.ne.s32.totalorder %s19, %s22
    %p28 = scmp.eq.s32.totalorder %s9, 0
    %p29 = por %p27, %p28
    %p30 = scmp.ne.s32.totalorder %s19, %s22
    %p31 = scmp.eq.s32.totalorder %s14, 15
    %p32 = por %p30, %p31
    %p33 = scmp.ne.s32.totalorder %s22, %s23
    %p34 = scmp.eq.s32.totalorder %s14, 0
    %p35 = por %p33, %p34
    %p36 = scmp.ne.s32.totalorder %s22, %s23
    %p37 = scmp.eq.s32.totalorder %s15, 15
    %p38 = por %p36, %p37
    %p40 = scmp.ne.s32.totalorder %s23, %s39
    %p41 = scmp.eq.s32.totalorder %s15, 0
    %p42 = por %p40, %p41
    %s44 = sadd.s32 %s43, 1
    %p47 = scmp.eq.s32.totalorder %s9, 15
    %p48 = scmp.ne.s32.totalorder %s43, %s45
    %p49 = scmp.eq.s32.totalorder %s9, 0
    %p50 = por %p48, %p49
    %p51 = scmp.ne.s32.totalorder %s43, %s45
    %p52 = scmp.eq.s32.totalorder %s14, 15
    %p53 = por %p51, %p52
    %p54 = scmp.ne.s32.totalorder %s45, %s46
    %p55 = scmp.eq.s32.totalorder %s14, 0
    %p56 = por %p54, %p55
    %p57 = scmp.ne.s32.totalorder %s45, %s46
    %p58 = scmp.eq.s32.totalorder %s15, 15
    %p59 = por %p57, %p58
    %p61 = scmp.ne.s32.totalorder %s46, %s60
    %p62 = scmp.eq.s32.totalorder %s15, 0
    %p63 = por %p61, %p62
    %s65 = sadd.s32 %s64, 1
    %p68 = scmp.eq.s32.totalorder %s9, 15
    %p69 = scmp.ne.s32.totalorder %s64, %s66
    %p70 = scmp.eq.s32.totalorder %s9, 0
    %p71 = por %p69, %p70
    %p72 = scmp.ne.s32.totalorder %s64, %s66
    %p73 = scmp.eq.s32.totalorder %s14, 15
    %p74 = por %p72, %p73
    %p75 = scmp.ne.s32.totalorder %s66, %s67
    %p76 = scmp.eq.s32.totalorder %s14, 0
    %p77 = por %p75, %p76
    %p78 = scmp.ne.s32.totalorder %s66, %s67
    %p79 = scmp.eq.s32.totalorder %s15, 15
    %p80 = por %p78, %p79
    %p82 = scmp.ne.s32.totalorder %s67, %s81
    %p83 = scmp.eq.s32.totalorder %s15, 0
    %p84 = por %p82, %p83
    %s85 = ssub.s32 %s9, %s16
    %p86 = scmp.eq.s32.totalorder %s85, 0
    %s88 = sadd.s32 %s87, 1
    %s89 = scalar_select %p86, %s87, %s88
    %p92 = pneg %p86
    %p93 = scmp.eq.s32.totalorder %s9, 15
    %p94 = por %p92, %p93
    %p95 = scmp.ne.s32.totalorder %s87, %s90
    %p96 = scmp.eq.s32.totalorder %s9, 0
    %p97 = por %p95, %p96
    %p98 = scmp.ne.s32.totalorder %s87, %s90
    %p99 = scmp.eq.s32.totalorder %s14, 15
    %p100 = por %p98, %p99
    %p101 = scmp.ne.s32.totalorder %s90, %s91
    %p102 = scmp.eq.s32.totalorder %s14, 0
    %p103 = por %p101, %p102
    %p104 = scmp.ne.s32.totalorder %s90, %s91
    %p105 = scmp.eq.s32.totalorder %s15, 15
    %p106 = por %p104, %p105
    %p108 = scmp.ne.s32.totalorder %s91, %s107
    %p109 = scmp.eq.s32.totalorder %s15, 0
    %p110 = por %p108, %p109
    %p111 = scmp.le.s32.totalorder 1, %s9
    %p112 = scmp.lt.s32.totalorder %s9, 17
    %p113 = pnand %p111, %p112
    %p114 = pneg %p113
    // Predicated region
    $region9: #{simple_view_encoder.7} parent=5 // pred_check
      _
    $region10: #{simple_view_encoder.7} parent=5 // pred_check_branch
      %116 = sbr.rel (%p113) target = $region12
    $region11: #{simple_view_encoder.7} parent=5 // pred_region
      %s117 = ssub.s32 %s9, 1
      // Predicated region
      $region13: #{simple_view_encoder.7} parent=11 // pred_check
        %p118 = pneg %p56
      $region14: #{simple_view_encoder.7} parent=11 // pred_check_branch
        %120 = sbr.rel (%p118) target = $region16
      $region15: #{simple_view_encoder.7} parent=11 // pred_region
        _
      $region16: #{simple_view_encoder.7} parent=11 // pred_fallthru
        _
      // Predicated region
      $region17: #{simple_view_encoder.7} parent=11 // pred_check
        %p121 = pneg %p77
      $region18: #{simple_view_encoder.7} parent=11 // pred_check_branch
        %123 = sbr.rel (%p121) target = $region20
      $region19: #{simple_view_encoder.7} parent=11 // pred_region
        _
      $region20: #{simple_view_encoder.7} parent=11 // pred_fallthru
        _
    $region12: #{simple_view_encoder.7} parent=5 // pred_fallthru
      _
    %p124 = scmp.lt.s32.totalorder %s9, 16
    // Predicated region
    $region21: #{simple_view_encoder.7} parent=5 // pred_check
      %p125 = pneg %p124
    $region22: #{simple_view_encoder.7} parent=5 // pred_check_branch
      %127 = sbr.rel (%p125) target = $region24
    $region23: #{simple_view_encoder.7} parent=5 // pred_region
      // Predicated region
      $region25: #{simple_view_encoder.7} parent=23 // pred_check
        %p128 = pneg %p29
      $region26: #{simple_view_encoder.7} parent=23 // pred_check_branch
        %130 = sbr.rel (%p128) target = $region28
      $region27: #{simple_view_encoder.7} parent=23 // pred_region
        %p131 = scmp.lt.s32.totalorder %s9, 15
        %s132 = scalar_select %p131, %s9, 15
        %s133 = smul.addr %s132, 72
        %s134 = smul.addr %s133, 8
        %s135 = scalar_lea.vmem %s0, %s134
      $region28: #{simple_view_encoder.7} parent=23 // pred_fallthru
        _
    $region24: #{simple_view_encoder.7} parent=5 // pred_fallthru
      _
    %p136 = scmp.le.s32.totalorder 1, %s9
    %p137 = scmp.lt.s32.totalorder %s9, 17
    %p138 = pnand %p136, %p137
    %p139 = pneg %p138
    // Predicated region
    $region29: #{simple_view_encoder.7} parent=5 // pred_check
      _
    $region30: #{simple_view_encoder.7} parent=5 // pred_check_branch
      %141 = sbr.rel (%p138) target = $region32
    $region31: #{simple_view_encoder.7} parent=5 // pred_region
      %s142 = ssub.s32 %s9, 1
      %p143 = scmp.lt.s32.totalorder %s14, 15
      %s144 = scalar_select %p143, %s14, 15
      %s145 = smul.addr %s144, 72
      %s146 = smul.addr %s145, 8
      %s147 = scalar_lea.vmem %s0, %s146
      %p148 = pneg %p35
      %p149 = pneg %p32
      %p150 = pneg %p56
      %p151 = pneg %p53
      %p152 = pneg %p77
      %p153 = pneg %p74
      %p154 = pneg %p103
      %p155 = pneg %p100
      %p156 = scmp.lt.s32.totalorder %s14, 15
      %s157 = scalar_select %p156, %s14, 15
      %s158 = smul.addr %s157, 8
      %s159 = smul.addr %s158, 8
      %s160 = scalar_lea.vmem %s3, %s159
      %p161 = scmp.lt.s32.totalorder %s14, 15
      %s162 = scalar_select %p161, %s14, 15
      %s163 = smul.addr %s162, 72
      %s164 = smul.addr %s163, 8
      %s165 = scalar_lea.vmem %s0, %s164
      %p166 = scmp.lt.s32.totalorder %s14, 15
      %s167 = scalar_select %p166, %s14, 15
      %s168 = smul.addr %s167, 8
      %s169 = smul.addr %s168, 8
      %s170 = scalar_lea.vmem %s3, %s169
      %v171 = vld [vmem:[%s2] sm:$0x1]
      loop: start=0, step=1, limit=8
      $region33: #{simple_view_encoder.7} parent=31 // loop_pre_header
        _
      $region34: #{simple_view_encoder.7} parent=31 // loop_header
        %s173 = sphi 0, %s177
        %p174 = scmp.ge.s32.totalorder %s173, 8
      $region35: #{simple_view_encoder.7} parent=31 // loop_header_branch
        %176 = sbr.rel (%p174) target = $region39
      $region36: #{simple_view_encoder.7} parent=31 // loop_body
        %s178 = smul.u32 %s173, 16
        %s179 = scalar_lea.vmem %s165, %s178
        %v180 = vld [vmem:[%s179] sm:$0xff]
        %v181 = vld [vmem:[%s1] sm:$0xff]
        %v182 = vld [vmem:[%s1 + $0x8] sm:$0xff]
        %v183 = vld [vmem:[%s1 + $0x10] sm:$0xff]
        %v184 = vld [vmem:[%s1 + $0x18] sm:$0xff]
        %v185 = vld [vmem:[%s1 + $0x20] sm:$0xff]
        %v186 = vld [vmem:[%s1 + $0x28] sm:$0xff]
        %v187 = vld [vmem:[%s1 + $0x30] sm:$0xff]
        %v188 = vld [vmem:[%s1 + $0x38] sm:$0xff]
        %s189 = sadd.s32 %s178, 144
        %s190 = scalar_lea.vmem %s165, %s189
        %v191 = vld [vmem:[%s190] sm:$0xff]
        %s192 = scalar_lea.vmem %s1, 64
        %v193 = vld [vmem:[%s192] sm:$0xff]
        %v194 = vld [vmem:[%s192 + $0x8] sm:$0xff]
        %v195 = vld [vmem:[%s192 + $0x10] sm:$0xff]
        %v196 = vld [vmem:[%s192 + $0x18] sm:$0xff]
        %v197 = vld [vmem:[%s192 + $0x20] sm:$0xff]
        %v198 = vld [vmem:[%s192 + $0x28] sm:$0xff]
        %v199 = vld [vmem:[%s192 + $0x30] sm:$0xff]
        %v200 = vld [vmem:[%s192 + $0x38] sm:$0xff]
        %vm201 = vcmask 523264
        %v203 = vsel %vm201, %v191, 0
        %205 = vmatprep.subr.mxu0 0.0
        %206 = vmatpush1.msra.mxu0 0.0
        %207 = vmatprep.subr.mxu0 0.0
        %208 = vmatpush1.msra.mxu0 0.0
        %209 = vmatprep.subr.mxu0 0.0
        %210 = vmatpush1.msra.mxu0 0.0
        %211 = vmatprep.subr.mxu0 0.0
        %212 = vmatpush1.msra.mxu0 0.0
        %213 = vmatprep.subr.mxu0 0.0
        %214 = vmatpush1.msra.mxu0 0.0
        %215 = vmatprep.subr.mxu0 0.0
        %216 = vmatpush1.msra.mxu0 0.0
        %217 = vmatprep.subr.mxu0 0.0
        %218 = vmatpush1.msra.mxu0 0.0
        %219 = vmatprep.subr.mxu0 0.0
        %220 = vmatpush1.msra.mxu0 0.0
        %221 = vmatprep.subr.mxu0 0.0
        %222 = vmatpush1.msra.mxu0 %v200
        %223 = vmatprep.subr.mxu0 0.0
        %224 = vmatpush1.msra.mxu0 %v199
        %225 = vmatprep.subr.mxu0 0.0
        %226 = vmatpush1.msra.mxu0 %v198
        %227 = vmatprep.subr.mxu0 0.0
        %228 = vmatpush1.msra.mxu0 %v197
        %229 = vmatprep.subr.mxu0 0.0
        %230 = vmatpush1.msra.mxu0 %v196
        %231 = vmatprep.subr.mxu0 0.0
        %232 = vmatpush1.msra.mxu0 %v195
        %233 = vmatprep.subr.mxu0 0.0
        %234 = vmatpush1.msra.mxu0 %v194
        %235 = vmatprep.subr.mxu0 0.0
        %236 = vmatpush1.msra.mxu0 %v193
        %237 = vmatprep.subr.mxu0 0.0
        %238 = vmatpush2.msra.mxu0 0.0
        %239 = vmatprep.subr.mxu0 0.0
        %240 = vmatpush2.msra.mxu0 0.0
        %241 = vmatprep.subr.mxu0 0.0
        %242 = vmatpush2.msra.mxu0 0.0
        %243 = vmatprep.subr.mxu0 0.0
        %244 = vmatpush2.msra.mxu0 0.0
        %245 = vmatprep.subr.mxu0 0.0
        %246 = vmatpush2.msra.mxu0 0.0
        %247 = vmatprep.subr.mxu0 0.0
        %248 = vmatpush2.msra.mxu0 0.0
        %249 = vmatprep.subr.mxu0 0.0
        %250 = vmatpush2.msra.mxu0 0.0
        %251 = vmatprep.subr.mxu0 0.0
        %252 = vmatpush2.msra.mxu0 0.0
        %253 = vmatprep.subr.mxu0 0.0
        %254 = vmatpush2.msra.mxu0 0.0
        %255 = vmatprep.subr.mxu0 0.0
        %256 = vmatpush2.msra.mxu0 0.0
        %257 = vmatprep.subr.mxu0 0.0
        %258 = vmatpush2.msra.mxu0 0.0
        %259 = vmatprep.subr.mxu0 0.0
        %260 = vmatpush2.msra.mxu0 0.0
        %261 = vmatprep.subr.mxu0 0.0
        %262 = vmatpush2.msra.mxu0 0.0
        %263 = vmatprep.subr.mxu0 0.0
        %264 = vmatpush2.msra.mxu0 0.0
        %265 = vmatprep.subr.mxu0 0.0
        %266 = vmatpush2.msra.mxu0 0.0
        %267 = vmatprep.subr.mxu0 0.0
        %268 = vmatpush2.msra.mxu0 0.0
        %269 = vmatprep.mubr.f32.mxu0 0.0
        %270 = vmatmul.mubr.f32.gmra.mxu0 %v203
        %v271 = vpop.f32.mrf.mxu0
        %v272 = vadd.f32 0.0, %v271
        %v273 = vpop.f32.mrf.mxu0
        %274 = vdwg.mxu0
        %v276 = vsel %vm201, %v180, 0
        %278 = vmatprep.subr.mxu0 0.0
        %279 = vmatpush1.msra.mxu0 0.0
        %280 = vmatprep.subr.mxu0 0.0
        %281 = vmatpush1.msra.mxu0 0.0
        %282 = vmatprep.subr.mxu0 0.0
        %283 = vmatpush1.msra.mxu0 0.0
        %284 = vmatprep.subr.mxu0 0.0
        %285 = vmatpush1.msra.mxu0 0.0
        %286 = vmatprep.subr.mxu0 0.0
        %287 = vmatpush1.msra.mxu0 0.0
        %288 = vmatprep.subr.mxu0 0.0
        %289 = vmatpush1.msra.mxu0 0.0
        %290 = vmatprep.subr.mxu0 0.0
        %291 = vmatpush1.msra.mxu0 0.0
        %292 = vmatprep.subr.mxu0 0.0
        %293 = vmatpush1.msra.mxu0 0.0
        %294 = vmatprep.subr.mxu0 0.0
        %295 = vmatpush1.msra.mxu0 %v188
        %296 = vmatprep.subr.mxu0 0.0
        %297 = vmatpush1.msra.mxu0 %v187
        %298 = vmatprep.subr.mxu0 0.0
        %299 = vmatpush1.msra.mxu0 %v186
        %300 = vmatprep.subr.mxu0 0.0
        %301 = vmatpush1.msra.mxu0 %v185
        %302 = vmatprep.subr.mxu0 0.0
        %303 = vmatpush1.msra.mxu0 %v184
        %304 = vmatprep.subr.mxu0 0.0
        %305 = vmatpush1.msra.mxu0 %v183
        %306 = vmatprep.subr.mxu0 0.0
        %307 = vmatpush1.msra.mxu0 %v182
        %308 = vmatprep.subr.mxu0 0.0
        %309 = vmatpush1.msra.mxu0 %v181
        %310 = vmatprep.subr.mxu0 0.0
        %311 = vmatpush2.msra.mxu0 0.0
        %312 = vmatprep.subr.mxu0 0.0
        %313 = vmatpush2.msra.mxu0 0.0
        %314 = vmatprep.subr.mxu0 0.0
        %315 = vmatpush2.msra.mxu0 0.0
        %316 = vmatprep.subr.mxu0 0.0
        %317 = vmatpush2.msra.mxu0 0.0
        %318 = vmatprep.subr.mxu0 0.0
        %319 = vmatpush2.msra.mxu0 0.0
        %320 = vmatprep.subr.mxu0 0.0
        %321 = vmatpush2.msra.mxu0 0.0
        %322 = vmatprep.subr.mxu0 0.0
        %323 = vmatpush2.msra.mxu0 0.0
        %324 = vmatprep.subr.mxu0 0.0
        %325 = vmatpush2.msra.mxu0 0.0
        %326 = vmatprep.subr.mxu0 0.0
        %327 = vmatpush2.msra.mxu0 0.0
        %328 = vmatprep.subr.mxu0 0.0
        %329 = vmatpush2.msra.mxu0 0.0
        %330 = vmatprep.subr.mxu0 0.0
        %331 = vmatpush2.msra.mxu0 0.0
        %332 = vmatprep.subr.mxu0 0.0
        %333 = vmatpush2.msra.mxu0 0.0
        %334 = vmatprep.subr.mxu0 0.0
        %335 = vmatpush2.msra.mxu0 0.0
        %336 = vmatprep.subr.mxu0 0.0
        %337 = vmatpush2.msra.mxu0 0.0
        %338 = vmatprep.subr.mxu0 0.0
        %339 = vmatpush2.msra.mxu0 0.0
        %340 = vmatprep.subr.mxu0 0.0
        %341 = vmatpush2.msra.mxu0 0.0
        %342 = vmatprep.mubr.f32.mxu0 0.0
        %343 = vmatmul.mubr.f32.gmra.mxu0 %v276
        %v344 = vpop.f32.mrf.mxu0
        %v345 = vadd.f32 %v272, %v344
        %v346 = vpop.f32.mrf.mxu0
        %347 = vdwg.mxu0
        %v348 = vld [vmem:[%s179 + $0x1] sm:$0xff]
        %s349 = scalar_lea.vmem %s1, 128
        %v350 = vld [vmem:[%s349] sm:$0xff]
        %v351 = vld [vmem:[%s349 + $0x8] sm:$0xff]
        %v352 = vld [vmem:[%s349 + $0x10] sm:$0xff]
        %v353 = vld [vmem:[%s349 + $0x18] sm:$0xff]
        %v354 = vld [vmem:[%s349 + $0x20] sm:$0xff]
        %v355 = vld [vmem:[%s349 + $0x28] sm:$0xff]
        %v356 = vld [vmem:[%s349 + $0x30] sm:$0xff]
        %v357 = vld [vmem:[%s349 + $0x38] sm:$0xff]
        %v359 = vsel %vm201, %v348, 0
        %361 = vmatprep.subr.mxu0 0.0
        %362 = vmatpush1.msra.mxu0 0.0
        %363 = vmatprep.subr.mxu0 0.0
        %364 = vmatpush1.msra.mxu0 0.0
        %365 = vmatprep.subr.mxu0 0.0
        %366 = vmatpush1.msra.mxu0 0.0
        %367 = vmatprep.subr.mxu0 0.0
        %368 = vmatpush1.msra.mxu0 0.0
        %369 = vmatprep.subr.mxu0 0.0
        %370 = vmatpush1.msra.mxu0 0.0
        %371 = vmatprep.subr.mxu0 0.0
        %372 = vmatpush1.msra.mxu0 0.0
        %373 = vmatprep.subr.mxu0 0.0
        %374 = vmatpush1.msra.mxu0 0.0
        %375 = vmatprep.subr.mxu0 0.0
        %376 = vmatpush1.msra.mxu0 0.0
        %377 = vmatprep.subr.mxu0 0.0
        %378 = vmatpush1.msra.mxu0 %v357
        %379 = vmatprep.subr.mxu0 0.0
        %380 = vmatpush1.msra.mxu0 %v356
        %381 = vmatprep.subr.mxu0 0.0
        %382 = vmatpush1.msra.mxu0 %v355
        %383 = vmatprep.subr.mxu0 0.0
        %384 = vmatpush1.msra.mxu0 %v354
        %385 = vmatprep.subr.mxu0 0.0
        %386 = vmatpush1.msra.mxu0 %v353
        %387 = vmatprep.subr.mxu0 0.0
        %388 = vmatpush1.msra.mxu0 %v352
        %389 = vmatprep.subr.mxu0 0.0
        %390 = vmatpush1.msra.mxu0 %v351
        %391 = vmatprep.subr.mxu0 0.0
        %392 = vmatpush1.msra.mxu0 %v350
        %393 = vmatprep.subr.mxu0 0.0
        %394 = vmatpush2.msra.mxu0 0.0
        %395 = vmatprep.subr.mxu0 0.0
        %396 = vmatpush2.msra.mxu0 0.0
        %397 = vmatprep.subr.mxu0 0.0
        %398 = vmatpush2.msra.mxu0 0.0
        %399 = vmatprep.subr.mxu0 0.0
        %400 = vmatpush2.msra.mxu0 0.0
        %401 = vmatprep.subr.mxu0 0.0
        %402 = vmatpush2.msra.mxu0 0.0
        %403 = vmatprep.subr.mxu0 0.0
        %404 = vmatpush2.msra.mxu0 0.0
        %405 = vmatprep.subr.mxu0 0.0
        %406 = vmatpush2.msra.mxu0 0.0
        %407 = vmatprep.subr.mxu0 0.0
        %408 = vmatpush2.msra.mxu0 0.0
        %409 = vmatprep.subr.mxu0 0.0
        %410 = vmatpush2.msra.mxu0 0.0
        %411 = vmatprep.subr.mxu0 0.0
        %412 = vmatpush2.msra.mxu0 0.0
        %413 = vmatprep.subr.mxu0 0.0
        %414 = vmatpush2.msra.mxu0 0.0
        %415 = vmatprep.subr.mxu0 0.0
        %416 = vmatpush2.msra.mxu0 0.0
        %417 = vmatprep.subr.mxu0 0.0
        %418 = vmatpush2.msra.mxu0 0.0
        %419 = vmatprep.subr.mxu0 0.0
        %420 = vmatpush2.msra.mxu0 0.0
        %421 = vmatprep.subr.mxu0 0.0
        %422 = vmatpush2.msra.mxu0 0.0
        %423 = vmatprep.subr.mxu0 0.0
        %424 = vmatpush2.msra.mxu0 0.0
        %425 = vmatprep.mubr.f32.mxu0 0.0
        %426 = vmatmul.mubr.f32.gmra.mxu0 %v359
        %v427 = vpop.f32.mrf.mxu0
        %v428 = vadd.f32 0.0, %v427
        %v429 = vpop.f32.mrf.mxu0
        %430 = vdwg.mxu0
        %v431 = vadd.f32 %v345, %v428
        %s432 = sadd.s32 %s178, 288
        %s433 = scalar_lea.vmem %s165, %s432
        %v434 = vld [vmem:[%s433] sm:$0xff]
        %s435 = scalar_lea.vmem %s1, 192
        %v436 = vld [vmem:[%s435] sm:$0xff]
        %v437 = vld [vmem:[%s435 + $0x8] sm:$0xff]
        %v438 = vld [vmem:[%s435 + $0x10] sm:$0xff]
        %v439 = vld [vmem:[%s435 + $0x18] sm:$0xff]
        %v440 = vld [vmem:[%s435 + $0x20] sm:$0xff]
        %v441 = vld [vmem:[%s435 + $0x28] sm:$0xff]
        %v442 = vld [vmem:[%s435 + $0x30] sm:$0xff]
        %v443 = vld [vmem:[%s435 + $0x38] sm:$0xff]
        %v445 = vsel %vm201, %v434, 0
        %447 = vmatprep.subr.mxu0 0.0
        %448 = vmatpush1.msra.mxu0 0.0
        %449 = vmatprep.subr.mxu0 0.0
        %450 = vmatpush1.msra.mxu0 0.0
        %451 = vmatprep.subr.mxu0 0.0
        %452 = vmatpush1.msra.mxu0 0.0
        %453 = vmatprep.subr.mxu0 0.0
        %454 = vmatpush1.msra.mxu0 0.0
        %455 = vmatprep.subr.mxu0 0.0
        %456 = vmatpush1.msra.mxu0 0.0
        %457 = vmatprep.subr.mxu0 0.0
        %458 = vmatpush1.msra.mxu0 0.0
        %459 = vmatprep.subr.mxu0 0.0
        %460 = vmatpush1.msra.mxu0 0.0
        %461 = vmatprep.subr.mxu0 0.0
        %462 = vmatpush1.msra.mxu0 0.0
        %463 = vmatprep.subr.mxu0 0.0
        %464 = vmatpush1.msra.mxu0 %v443
        %465 = vmatprep.subr.mxu0 0.0
        %466 = vmatpush1.msra.mxu0 %v442
        %467 = vmatprep.subr.mxu0 0.0
        %468 = vmatpush1.msra.mxu0 %v441
        %469 = vmatprep.subr.mxu0 0.0
        %470 = vmatpush1.msra.mxu0 %v440
        %471 = vmatprep.subr.mxu0 0.0
        %472 = vmatpush1.msra.mxu0 %v439
        %473 = vmatprep.subr.mxu0 0.0
        %474 = vmatpush1.msra.mxu0 %v438
        %475 = vmatprep.subr.mxu0 0.0
        %476 = vmatpush1.msra.mxu0 %v437
        %477 = vmatprep.subr.mxu0 0.0
        %478 = vmatpush1.msra.mxu0 %v436
        %479 = vmatprep.subr.mxu0 0.0
        %480 = vmatpush2.msra.mxu0 0.0
        %481 = vmatprep.subr.mxu0 0.0
        %482 = vmatpush2.msra.mxu0 0.0
        %483 = vmatprep.subr.mxu0 0.0
        %484 = vmatpush2.msra.mxu0 0.0
        %485 = vmatprep.subr.mxu0 0.0
        %486 = vmatpush2.msra.mxu0 0.0
        %487 = vmatprep.subr.mxu0 0.0
        %488 = vmatpush2.msra.mxu0 0.0
        %489 = vmatprep.subr.mxu0 0.0
        %490 = vmatpush2.msra.mxu0 0.0
        %491 = vmatprep.subr.mxu0 0.0
        %492 = vmatpush2.msra.mxu0 0.0
        %493 = vmatprep.subr.mxu0 0.0
        %494 = vmatpush2.msra.mxu0 0.0
        %495 = vmatprep.subr.mxu0 0.0
        %496 = vmatpush2.msra.mxu0 0.0
        %497 = vmatprep.subr.mxu0 0.0
        %498 = vmatpush2.msra.mxu0 0.0
        %499 = vmatprep.subr.mxu0 0.0
        %500 = vmatpush2.msra.mxu0 0.0
        %501 = vmatprep.subr.mxu0 0.0
        %502 = vmatpush2.msra.mxu0 0.0
        %503 = vmatprep.subr.mxu0 0.0
        %504 = vmatpush2.msra.mxu0 0.0
        %505 = vmatprep.subr.mxu0 0.0
        %506 = vmatpush2.msra.mxu0 0.0
        %507 = vmatprep.subr.mxu0 0.0
        %508 = vmatpush2.msra.mxu0 0.0
        %509 = vmatprep.subr.mxu0 0.0
        %510 = vmatpush2.msra.mxu0 0.0
        %511 = vmatprep.mubr.f32.mxu0 0.0
        %512 = vmatmul.mubr.f32.gmra.mxu0 %v445
        %v513 = vpop.f32.mrf.mxu0
        %v514 = vadd.f32 0.0, %v513
        %v515 = vpop.f32.mrf.mxu0
        %516 = vdwg.mxu0
        %v517 = vadd.f32 %v431, %v514
        %s518 = sadd.s32 %s178, 432
        %s519 = scalar_lea.vmem %s165, %s518
        %v520 = vld [vmem:[%s519] sm:$0xff]
        %s521 = scalar_lea.vmem %s1, 256
        %v522 = vld [vmem:[%s521] sm:$0xff]
        %v523 = vld [vmem:[%s521 + $0x8] sm:$0xff]
        %v524 = vld [vmem:[%s521 + $0x10] sm:$0xff]
        %v525 = vld [vmem:[%s521 + $0x18] sm:$0xff]
        %v526 = vld [vmem:[%s521 + $0x20] sm:$0xff]
        %v527 = vld [vmem:[%s521 + $0x28] sm:$0xff]
        %v528 = vld [vmem:[%s521 + $0x30] sm:$0xff]
        %v529 = vld [vmem:[%s521 + $0x38] sm:$0xff]
        %v531 = vsel %vm201, %v520, 0
        %533 = vmatprep.subr.mxu0 0.0
        %534 = vmatpush1.msra.mxu0 0.0
        %535 = vmatprep.subr.mxu0 0.0
        %536 = vmatpush1.msra.mxu0 0.0
        %537 = vmatprep.subr.mxu0 0.0
        %538 = vmatpush1.msra.mxu0 0.0
        %539 = vmatprep.subr.mxu0 0.0
        %540 = vmatpush1.msra.mxu0 0.0
        %541 = vmatprep.subr.mxu0 0.0
        %542 = vmatpush1.msra.mxu0 0.0
        %543 = vmatprep.subr.mxu0 0.0
        %544 = vmatpush1.msra.mxu0 0.0
        %545 = vmatprep.subr.mxu0 0.0
        %546 = vmatpush1.msra.mxu0 0.0
        %547 = vmatprep.subr.mxu0 0.0
        %548 = vmatpush1.msra.mxu0 0.0
        %549 = vmatprep.subr.mxu0 0.0
        %550 = vmatpush1.msra.mxu0 %v529
        %551 = vmatprep.subr.mxu0 0.0
        %552 = vmatpush1.msra.mxu0 %v528
        %553 = vmatprep.subr.mxu0 0.0
        %554 = vmatpush1.msra.mxu0 %v527
        %555 = vmatprep.subr.mxu0 0.0
        %556 = vmatpush1.msra.mxu0 %v526
        %557 = vmatprep.subr.mxu0 0.0
        %558 = vmatpush1.msra.mxu0 %v525
        %559 = vmatprep.subr.mxu0 0.0
        %560 = vmatpush1.msra.mxu0 %v524
        %561 = vmatprep.subr.mxu0 0.0
        %562 = vmatpush1.msra.mxu0 %v523
        %563 = vmatprep.subr.mxu0 0.0
        %564 = vmatpush1.msra.mxu0 %v522
        %565 = vmatprep.subr.mxu0 0.0
        %566 = vmatpush2.msra.mxu0 0.0
        %567 = vmatprep.subr.mxu0 0.0
        %568 = vmatpush2.msra.mxu0 0.0
        %569 = vmatprep.subr.mxu0 0.0
        %570 = vmatpush2.msra.mxu0 0.0
        %571 = vmatprep.subr.mxu0 0.0
        %572 = vmatpush2.msra.mxu0 0.0
        %573 = vmatprep.subr.mxu0 0.0
        %574 = vmatpush2.msra.mxu0 0.0
        %575 = vmatprep.subr.mxu0 0.0
        %576 = vmatpush2.msra.mxu0 0.0
        %577 = vmatprep.subr.mxu0 0.0
        %578 = vmatpush2.msra.mxu0 0.0
        %579 = vmatprep.subr.mxu0 0.0
        %580 = vmatpush2.msra.mxu0 0.0
        %581 = vmatprep.subr.mxu0 0.0
        %582 = vmatpush2.msra.mxu0 0.0
        %583 = vmatprep.subr.mxu0 0.0
        %584 = vmatpush2.msra.mxu0 0.0
        %585 = vmatprep.subr.mxu0 0.0
        %586 = vmatpush2.msra.mxu0 0.0
        %587 = vmatprep.subr.mxu0 0.0
        %588 = vmatpush2.msra.mxu0 0.0
        %589 = vmatprep.subr.mxu0 0.0
        %590 = vmatpush2.msra.mxu0 0.0
        %591 = vmatprep.subr.mxu0 0.0
        %592 = vmatpush2.msra.mxu0 0.0
        %593 = vmatprep.subr.mxu0 0.0
        %594 = vmatpush2.msra.mxu0 0.0
        %595 = vmatprep.subr.mxu0 0.0
        %596 = vmatpush2.msra.mxu0 0.0
        %597 = vmatprep.mubr.f32.mxu0 0.0
        %598 = vmatmul.mubr.f32.gmra.mxu0 %v531
        %v599 = vpop.f32.mrf.mxu0
        %v600 = vadd.f32 0.0, %v599
        %v601 = vpop.f32.mrf.mxu0
        %602 = vdwg.mxu0
        %v603 = vadd.f32 %v517, %v600
        %v604 = vld [vmem:[%s433 + $0x1] sm:$0xff]
        %s605 = scalar_lea.vmem %s1, 320
        %v606 = vld [vmem:[%s605] sm:$0xff]
        %v607 = vld [vmem:[%s605 + $0x8] sm:$0xff]
        %v608 = vld [vmem:[%s605 + $0x10] sm:$0xff]
        %v609 = vld [vmem:[%s605 + $0x18] sm:$0xff]
        %v610 = vld [vmem:[%s605 + $0x20] sm:$0xff]
        %v611 = vld [vmem:[%s605 + $0x28] sm:$0xff]
        %v612 = vld [vmem:[%s605 + $0x30] sm:$0xff]
        %v613 = vld [vmem:[%s605 + $0x38] sm:$0xff]
        %v615 = vsel %vm201, %v604, 0
        %617 = vmatprep.subr.mxu0 0.0
        %618 = vmatpush1.msra.mxu0 0.0
        %619 = vmatprep.subr.mxu0 0.0
        %620 = vmatpush1.msra.mxu0 0.0
        %621 = vmatprep.subr.mxu0 0.0
        %622 = vmatpush1.msra.mxu0 0.0
        %623 = vmatprep.subr.mxu0 0.0
        %624 = vmatpush1.msra.mxu0 0.0
        %625 = vmatprep.subr.mxu0 0.0
        %626 = vmatpush1.msra.mxu0 0.0
        %627 = vmatprep.subr.mxu0 0.0
        %628 = vmatpush1.msra.mxu0 0.0
        %629 = vmatprep.subr.mxu0 0.0
        %630 = vmatpush1.msra.mxu0 0.0
        %631 = vmatprep.subr.mxu0 0.0
        %632 = vmatpush1.msra.mxu0 0.0
        %633 = vmatprep.subr.mxu0 0.0
        %634 = vmatpush1.msra.mxu0 %v613
        %635 = vmatprep.subr.mxu0 0.0
        %636 = vmatpush1.msra.mxu0 %v612
        %637 = vmatprep.subr.mxu0 0.0
        %638 = vmatpush1.msra.mxu0 %v611
        %639 = vmatprep.subr.mxu0 0.0
        %640 = vmatpush1.msra.mxu0 %v610
        %641 = vmatprep.subr.mxu0 0.0
        %642 = vmatpush1.msra.mxu0 %v609
        %643 = vmatprep.subr.mxu0 0.0
        %644 = vmatpush1.msra.mxu0 %v608
        %645 = vmatprep.subr.mxu0 0.0
        %646 = vmatpush1.msra.mxu0 %v607
        %647 = vmatprep.subr.mxu0 0.0
        %648 = vmatpush1.msra.mxu0 %v606
        %649 = vmatprep.subr.mxu0 0.0
        %650 = vmatpush2.msra.mxu0 0.0
        %651 = vmatprep.subr.mxu0 0.0
        %652 = vmatpush2.msra.mxu0 0.0
        %653 = vmatprep.subr.mxu0 0.0
        %654 = vmatpush2.msra.mxu0 0.0
        %655 = vmatprep.subr.mxu0 0.0
        %656 = vmatpush2.msra.mxu0 0.0
        %657 = vmatprep.subr.mxu0 0.0
        %658 = vmatpush2.msra.mxu0 0.0
        %659 = vmatprep.subr.mxu0 0.0
        %660 = vmatpush2.msra.mxu0 0.0
        %661 = vmatprep.subr.mxu0 0.0
        %662 = vmatpush2.msra.mxu0 0.0
        %663 = vmatprep.subr.mxu0 0.0
        %664 = vmatpush2.msra.mxu0 0.0
        %665 = vmatprep.subr.mxu0 0.0
        %666 = vmatpush2.msra.mxu0 0.0
        %667 = vmatprep.subr.mxu0 0.0
        %668 = vmatpush2.msra.mxu0 0.0
        %669 = vmatprep.subr.mxu0 0.0
        %670 = vmatpush2.msra.mxu0 0.0
        %671 = vmatprep.subr.mxu0 0.0
        %672 = vmatpush2.msra.mxu0 0.0
        %673 = vmatprep.subr.mxu0 0.0
        %674 = vmatpush2.msra.mxu0 0.0
        %675 = vmatprep.subr.mxu0 0.0
        %676 = vmatpush2.msra.mxu0 0.0
        %677 = vmatprep.subr.mxu0 0.0
        %678 = vmatpush2.msra.mxu0 0.0
        %679 = vmatprep.subr.mxu0 0.0
        %680 = vmatpush2.msra.mxu0 0.0
        %681 = vmatprep.mubr.f32.mxu0 0.0
        %682 = vmatmul.mubr.f32.gmra.mxu0 %v615
        %v683 = vpop.f32.mrf.mxu0
        %v684 = vadd.f32 0.0, %v683
        %v685 = vpop.f32.mrf.mxu0
        %686 = vdwg.mxu0
        %v687 = vadd.f32 %v603, %v684
        %s688 = sadd.s32 %s173, 1
        %s689 = smul.u32 %s688, 16
        %s690 = scalar_lea.vmem %s165, %s689
        %v691 = vld [vmem:[%s690] sm:$0xff]
        %s692 = scalar_lea.vmem %s1, 384
        %v693 = vld [vmem:[%s692] sm:$0xff]
        %v694 = vld [vmem:[%s692 + $0x8] sm:$0xff]
        %v695 = vld [vmem:[%s692 + $0x10] sm:$0xff]
        %v696 = vld [vmem:[%s692 + $0x18] sm:$0xff]
        %v697 = vld [vmem:[%s692 + $0x20] sm:$0xff]
        %v698 = vld [vmem:[%s692 + $0x28] sm:$0xff]
        %v699 = vld [vmem:[%s692 + $0x30] sm:$0xff]
        %v700 = vld [vmem:[%s692 + $0x38] sm:$0xff]
        %v702 = vsel %vm201, %v691, 0
        %704 = vmatprep.subr.mxu0 0.0
        %705 = vmatpush1.msra.mxu0 0.0
        %706 = vmatprep.subr.mxu0 0.0
        %707 = vmatpush1.msra.mxu0 0.0
        %708 = vmatprep.subr.mxu0 0.0
        %709 = vmatpush1.msra.mxu0 0.0
        %710 = vmatprep.subr.mxu0 0.0
        %711 = vmatpush1.msra.mxu0 0.0
        %712 = vmatprep.subr.mxu0 0.0
        %713 = vmatpush1.msra.mxu0 0.0
        %714 = vmatprep.subr.mxu0 0.0
        %715 = vmatpush1.msra.mxu0 0.0
        %716 = vmatprep.subr.mxu0 0.0
        %717 = vmatpush1.msra.mxu0 0.0
        %718 = vmatprep.subr.mxu0 0.0
        %719 = vmatpush1.msra.mxu0 0.0
        %720 = vmatprep.subr.mxu0 0.0
        %721 = vmatpush1.msra.mxu0 %v700
        %722 = vmatprep.subr.mxu0 0.0
        %723 = vmatpush1.msra.mxu0 %v699
        %724 = vmatprep.subr.mxu0 0.0
        %725 = vmatpush1.msra.mxu0 %v698
        %726 = vmatprep.subr.mxu0 0.0
        %727 = vmatpush1.msra.mxu0 %v697
        %728 = vmatprep.subr.mxu0 0.0
        %729 = vmatpush1.msra.mxu0 %v696
        %730 = vmatprep.subr.mxu0 0.0
        %731 = vmatpush1.msra.mxu0 %v695
        %732 = vmatprep.subr.mxu0 0.0
        %733 = vmatpush1.msra.mxu0 %v694
        %734 = vmatprep.subr.mxu0 0.0
        %735 = vmatpush1.msra.mxu0 %v693
        %736 = vmatprep.subr.mxu0 0.0
        %737 = vmatpush2.msra.mxu0 0.0
        %738 = vmatprep.subr.mxu0 0.0
        %739 = vmatpush2.msra.mxu0 0.0
        %740 = vmatprep.subr.mxu0 0.0
        %741 = vmatpush2.msra.mxu0 0.0
        %742 = vmatprep.subr.mxu0 0.0
        %743 = vmatpush2.msra.mxu0 0.0
        %744 = vmatprep.subr.mxu0 0.0
        %745 = vmatpush2.msra.mxu0 0.0
        %746 = vmatprep.subr.mxu0 0.0
        %747 = vmatpush2.msra.mxu0 0.0
        %748 = vmatprep.subr.mxu0 0.0
        %749 = vmatpush2.msra.mxu0 0.0
        %750 = vmatprep.subr.mxu0 0.0
        %751 = vmatpush2.msra.mxu0 0.0
        %752 = vmatprep.subr.mxu0 0.0
        %753 = vmatpush2.msra.mxu0 0.0
        %754 = vmatprep.subr.mxu0 0.0
        %755 = vmatpush2.msra.mxu0 0.0
        %756 = vmatprep.subr.mxu0 0.0
        %757 = vmatpush2.msra.mxu0 0.0
        %758 = vmatprep.subr.mxu0 0.0
        %759 = vmatpush2.msra.mxu0 0.0
        %760 = vmatprep.subr.mxu0 0.0
        %761 = vmatpush2.msra.mxu0 0.0
        %762 = vmatprep.subr.mxu0 0.0
        %763 = vmatpush2.msra.mxu0 0.0
        %764 = vmatprep.subr.mxu0 0.0
        %765 = vmatpush2.msra.mxu0 0.0
        %766 = vmatprep.subr.mxu0 0.0
        %767 = vmatpush2.msra.mxu0 0.0
        %768 = vmatprep.mubr.f32.mxu0 0.0
        %769 = vmatmul.mubr.f32.gmra.mxu0 %v702
        %v770 = vpop.f32.mrf.mxu0
        %v771 = vadd.f32 0.0, %v770
        %v772 = vpop.f32.mrf.mxu0
        %773 = vdwg.mxu0
        %v774 = vadd.f32 %v687, %v771
        %s775 = sadd.s32 %s689, 144
        %s776 = scalar_lea.vmem %s165, %s775
        %v777 = vld [vmem:[%s776] sm:$0xff]
        %s778 = scalar_lea.vmem %s1, 448
        %v779 = vld [vmem:[%s778] sm:$0xff]
        %v780 = vld [vmem:[%s778 + $0x8] sm:$0xff]
        %v781 = vld [vmem:[%s778 + $0x10] sm:$0xff]
        %v782 = vld [vmem:[%s778 + $0x18] sm:$0xff]
        %v783 = vld [vmem:[%s778 + $0x20] sm:$0xff]
        %v784 = vld [vmem:[%s778 + $0x28] sm:$0xff]
        %v785 = vld [vmem:[%s778 + $0x30] sm:$0xff]
        %v786 = vld [vmem:[%s778 + $0x38] sm:$0xff]
        %v788 = vsel %vm201, %v777, 0
        %790 = vmatprep.subr.mxu0 0.0
        %791 = vmatpush1.msra.mxu0 0.0
        %792 = vmatprep.subr.mxu0 0.0
        %793 = vmatpush1.msra.mxu0 0.0
        %794 = vmatprep.subr.mxu0 0.0
        %795 = vmatpush1.msra.mxu0 0.0
        %796 = vmatprep.subr.mxu0 0.0
        %797 = vmatpush1.msra.mxu0 0.0
        %798 = vmatprep.subr.mxu0 0.0
        %799 = vmatpush1.msra.mxu0 0.0
        %800 = vmatprep.subr.mxu0 0.0
        %801 = vmatpush1.msra.mxu0 0.0
        %802 = vmatprep.subr.mxu0 0.0
        %803 = vmatpush1.msra.mxu0 0.0
        %804 = vmatprep.subr.mxu0 0.0
        %805 = vmatpush1.msra.mxu0 0.0
        %806 = vmatprep.subr.mxu0 0.0
        %807 = vmatpush1.msra.mxu0 %v786
        %808 = vmatprep.subr.mxu0 0.0
        %809 = vmatpush1.msra.mxu0 %v785
        %810 = vmatprep.subr.mxu0 0.0
        %811 = vmatpush1.msra.mxu0 %v784
        %812 = vmatprep.subr.mxu0 0.0
        %813 = vmatpush1.msra.mxu0 %v783
        %814 = vmatprep.subr.mxu0 0.0
        %815 = vmatpush1.msra.mxu0 %v782
        %816 = vmatprep.subr.mxu0 0.0
        %817 = vmatpush1.msra.mxu0 %v781
        %818 = vmatprep.subr.mxu0 0.0
        %819 = vmatpush1.msra.mxu0 %v780
        %820 = vmatprep.subr.mxu0 0.0
        %821 = vmatpush1.msra.mxu0 %v779
        %822 = vmatprep.subr.mxu0 0.0
        %823 = vmatpush2.msra.mxu0 0.0
        %824 = vmatprep.subr.mxu0 0.0
        %825 = vmatpush2.msra.mxu0 0.0
        %826 = vmatprep.subr.mxu0 0.0
        %827 = vmatpush2.msra.mxu0 0.0
        %828 = vmatprep.subr.mxu0 0.0
        %829 = vmatpush2.msra.mxu0 0.0
        %830 = vmatprep.subr.mxu0 0.0
        %831 = vmatpush2.msra.mxu0 0.0
        %832 = vmatprep.subr.mxu0 0.0
        %833 = vmatpush2.msra.mxu0 0.0
        %834 = vmatprep.subr.mxu0 0.0
        %835 = vmatpush2.msra.mxu0 0.0
        %836 = vmatprep.subr.mxu0 0.0
        %837 = vmatpush2.msra.mxu0 0.0
        %838 = vmatprep.subr.mxu0 0.0
        %839 = vmatpush2.msra.mxu0 0.0
        %840 = vmatprep.subr.mxu0 0.0
        %841 = vmatpush2.msra.mxu0 0.0
        %842 = vmatprep.subr.mxu0 0.0
        %843 = vmatpush2.msra.mxu0 0.0
        %844 = vmatprep.subr.mxu0 0.0
        %845 = vmatpush2.msra.mxu0 0.0
        %846 = vmatprep.subr.mxu0 0.0
        %847 = vmatpush2.msra.mxu0 0.0
        %848 = vmatprep.subr.mxu0 0.0
        %849 = vmatpush2.msra.mxu0 0.0
        %850 = vmatprep.subr.mxu0 0.0
        %851 = vmatpush2.msra.mxu0 0.0
        %852 = vmatprep.subr.mxu0 0.0
        %853 = vmatpush2.msra.mxu0 0.0
        %854 = vmatprep.mubr.f32.mxu0 0.0
        %855 = vmatmul.mubr.f32.gmra.mxu0 %v788
        %v856 = vpop.f32.mrf.mxu0
        %v857 = vadd.f32 0.0, %v856
        %v858 = vpop.f32.mrf.mxu0
        %859 = vdwg.mxu0
        %v860 = vadd.f32 %v774, %v857
        %v861 = vld [vmem:[%s690 + $0x1] sm:$0xff]
        %s862 = scalar_lea.vmem %s1, 512
        %v863 = vld [vmem:[%s862] sm:$0xff]
        %v864 = vld [vmem:[%s862 + $0x8] sm:$0xff]
        %v865 = vld [vmem:[%s862 + $0x10] sm:$0xff]
        %v866 = vld [vmem:[%s862 + $0x18] sm:$0xff]
        %v867 = vld [vmem:[%s862 + $0x20] sm:$0xff]
        %v868 = vld [vmem:[%s862 + $0x28] sm:$0xff]
        %v869 = vld [vmem:[%s862 + $0x30] sm:$0xff]
        %v870 = vld [vmem:[%s862 + $0x38] sm:$0xff]
        %v872 = vsel %vm201, %v861, 0
        %874 = vmatprep.subr.mxu0 0.0
        %875 = vmatpush1.msra.mxu0 0.0
        %876 = vmatprep.subr.mxu0 0.0
        %877 = vmatpush1.msra.mxu0 0.0
        %878 = vmatprep.subr.mxu0 0.0
        %879 = vmatpush1.msra.mxu0 0.0
        %880 = vmatprep.subr.mxu0 0.0
        %881 = vmatpush1.msra.mxu0 0.0
        %882 = vmatprep.subr.mxu0 0.0
        %883 = vmatpush1.msra.mxu0 0.0
        %884 = vmatprep.subr.mxu0 0.0
        %885 = vmatpush1.msra.mxu0 0.0
        %886 = vmatprep.subr.mxu0 0.0
        %887 = vmatpush1.msra.mxu0 0.0
        %888 = vmatprep.subr.mxu0 0.0
        %889 = vmatpush1.msra.mxu0 0.0
        %890 = vmatprep.subr.mxu0 0.0
        %891 = vmatpush1.msra.mxu0 %v870
        %892 = vmatprep.subr.mxu0 0.0
        %893 = vmatpush1.msra.mxu0 %v869
        %894 = vmatprep.subr.mxu0 0.0
        %895 = vmatpush1.msra.mxu0 %v868
        %896 = vmatprep.subr.mxu0 0.0
        %897 = vmatpush1.msra.mxu0 %v867
        %898 = vmatprep.subr.mxu0 0.0
        %899 = vmatpush1.msra.mxu0 %v866
        %900 = vmatprep.subr.mxu0 0.0
        %901 = vmatpush1.msra.mxu0 %v865
        %902 = vmatprep.subr.mxu0 0.0
        %903 = vmatpush1.msra.mxu0 %v864
        %904 = vmatprep.subr.mxu0 0.0
        %905 = vmatpush1.msra.mxu0 %v863
        %906 = vmatprep.subr.mxu0 0.0
        %907 = vmatpush2.msra.mxu0 0.0
        %908 = vmatprep.subr.mxu0 0.0
        %909 = vmatpush2.msra.mxu0 0.0
        %910 = vmatprep.subr.mxu0 0.0
        %911 = vmatpush2.msra.mxu0 0.0
        %912 = vmatprep.subr.mxu0 0.0
        %913 = vmatpush2.msra.mxu0 0.0
        %914 = vmatprep.subr.mxu0 0.0
        %915 = vmatpush2.msra.mxu0 0.0
        %916 = vmatprep.subr.mxu0 0.0
        %917 = vmatpush2.msra.mxu0 0.0
        %918 = vmatprep.subr.mxu0 0.0
        %919 = vmatpush2.msra.mxu0 0.0
        %920 = vmatprep.subr.mxu0 0.0
        %921 = vmatpush2.msra.mxu0 0.0
        %922 = vmatprep.subr.mxu0 0.0
        %923 = vmatpush2.msra.mxu0 0.0
        %924 = vmatprep.subr.mxu0 0.0
        %925 = vmatpush2.msra.mxu0 0.0
        %926 = vmatprep.subr.mxu0 0.0
        %927 = vmatpush2.msra.mxu0 0.0
        %928 = vmatprep.subr.mxu0 0.0
        %929 = vmatpush2.msra.mxu0 0.0
        %930 = vmatprep.subr.mxu0 0.0
        %931 = vmatpush2.msra.mxu0 0.0
        %932 = vmatprep.subr.mxu0 0.0
        %933 = vmatpush2.msra.mxu0 0.0
        %934 = vmatprep.subr.mxu0 0.0
        %935 = vmatpush2.msra.mxu0 0.0
        %936 = vmatprep.subr.mxu0 0.0
        %937 = vmatpush2.msra.mxu0 0.0
        %938 = vmatprep.mubr.f32.mxu0 0.0
        %939 = vmatmul.mubr.f32.gmra.mxu0 %v872
        %v940 = vpop.f32.mrf.mxu0
        %v941 = vadd.f32 0.0, %v940
        %v942 = vpop.f32.mrf.mxu0
        %943 = vdwg.mxu0
        %v944 = vadd.f32 %v860, %v941
        %v946 = vlaneseq
        %v947 = vshrl.u32 %v946, 7
        %v948 = vsub.s32 0, %v947
        %v949 = vrot.slane %v171, %v948
        %v951 = vadd.f32 %v944, %v949
        %v952 = vmax.f32 %v951, 0.0
        %s953 = smul.u32 %s173, 8
        %s954 = scalar_lea.vmem %s170, %s953
        %955 = vst [vmem:[%s954] sm:$0xff] %v952
      $region37: #{simple_view_encoder.7} parent=31 // loop_footer
        %s177 = sadd.s32 1, %s173
      $region38: #{simple_view_encoder.7} parent=31 // loop_footer_branch
        %172 = sbr.rel target = $region34
      $region39: #{simple_view_encoder.7} parent=31 // loop_exit
        _
      %p956 = scmp.lt.s32.totalorder %s14, 15
      %s957 = scalar_select %p956, %s14, 15
      %s958 = smul.addr %s957, 8
      %s959 = smul.addr %s958, 8
      %s960 = scalar_lea.vmem %s3, %s959
      // Predicated region
      $region40: #{simple_view_encoder.7} parent=31 // pred_check
        %p961 = pneg %p100
      $region41: #{simple_view_encoder.7} parent=31 // pred_check_branch
        %963 = sbr.rel (%p961) target = $region43
      $region42: #{simple_view_encoder.7} parent=31 // pred_region
        _
      $region43: #{simple_view_encoder.7} parent=31 // pred_fallthru
        _
    $region32: #{simple_view_encoder.7} parent=5 // pred_fallthru
      _
    %p964 = scmp.le.s32.totalorder 2, %s9
    // Predicated region
    $region44: #{simple_view_encoder.7} parent=5 // pred_check
      %p965 = pneg %p964
    $region45: #{simple_view_encoder.7} parent=5 // pred_check_branch
      %967 = sbr.rel (%p965) target = $region47
    $region46: #{simple_view_encoder.7} parent=5 // pred_region
      %s968 = ssub.s32 %s9, 2
      // Predicated region
      $region48: #{simple_view_encoder.7} parent=46 // pred_check
        %p969 = pneg %p106
      $region49: #{simple_view_encoder.7} parent=46 // pred_check_branch
        %971 = sbr.rel (%p969) target = $region51
      $region50: #{simple_view_encoder.7} parent=46 // pred_region
        %p972 = scmp.lt.s32.totalorder %s15, 15
        %s973 = scalar_select %p972, %s15, 15
        %s974 = smul.addr %s973, 8
        %s975 = smul.addr %s974, 8
        %s976 = scalar_lea.vmem %s3, %s975
      $region51: #{simple_view_encoder.7} parent=46 // pred_fallthru
        _
    $region47: #{simple_view_encoder.7} parent=5 // pred_fallthru
      _
  $region6: #{simple_view_encoder.7} parent=0 // loop_footer
    %s13 = sadd.s32 1, %s9
  $region7: #{simple_view_encoder.7} parent=0 // loop_footer_branch
    %8 = sbr.rel target = $region3
  $region8: #{simple_view_encoder.7} parent=0 // loop_exit
    _

// kernel: simple_view_encoder.8
$region0: #{simple_view_encoder.8}
  #allocation0 [shape = 'u32[]', space=smem, size = 0x4, offset = 0x4, fixed_abs, tag = 'smem constant byte address 0x4 - core index']
  #allocation1 [shape = 'u32[144,128]{1,0:T(1,128)}', space=vmem, size = 0x12000, scoped, tag = 'internal scratch']
  %s0 = inlined_call_operand.vmem [shape: f32[16,4,5,5,128], index: 0, kind: input, shape index: {}]
  %s1 = inlined_call_operand.vmem [shape: f32[3,3,128,256], index: 1, kind: input, shape index: {}]
  %s2 = inlined_call_operand.vmem [shape: f32[1,256], index: 2, kind: input, shape index: {}]
  %s3 = inlined_call_operand.vmem [shape: f32[16,4,4,256], index: 3, kind: output, shape index: {}]
  %s4 = sld [smem:[#allocation0]]
  $region52: #{simple_view_encoder.8} parent=0
    _
  %s6 = ssub.s32 1, %s4
  %s7 = scalar_select 0, %s6, %s4
  loop: start=0, step=1, limit=18
  $region2: #{simple_view_encoder.8} parent=0 // loop_pre_header
    _
  $region3: #{simple_view_encoder.8} parent=0 // loop_header
    %s9 = sphi 0, %s13
    %p10 = scmp.ge.s32.totalorder %s9, 18
    %s19 = sphi 0, %s21
    %s22 = sphi 0, %s19
    %s23 = sphi 0, %s22
    %s39 = sphi 0, %s23
    %s43 = sphi 0, %s43
    %s45 = sphi 0, %s43
    %s46 = sphi 0, %s45
    %s60 = sphi 0, %s46
    %s64 = sphi 0, %s64
    %s66 = sphi 0, %s64
    %s67 = sphi 0, %s66
    %s81 = sphi 0, %s67
    %s87 = sphi 0, %s89
    %s90 = sphi 0, %s87
    %s91 = sphi 0, %s90
    %s107 = sphi 0, %s91
  $region4: #{simple_view_encoder.8} parent=0 // loop_header_branch
    %12 = sbr.rel (%p10) target = $region8
  $region5: #{simple_view_encoder.8} parent=0 // loop_body
    %s14 = ssub.s32 %s9, 1
    %s15 = ssub.s32 %s9, 2
    %s16 = sadd.s32 %s9, 1
    %s17 = ssub.s32 %s9, %s16
    %p18 = scmp.eq.s32.totalorder %s17, 0
    %s20 = sadd.s32 %s19, 1
    %s21 = scalar_select %p18, %s19, %s20
    %p24 = pneg %p18
    %p25 = scmp.eq.s32.totalorder %s9, 15
    %p26 = por %p24, %p25
    %p27 = scmp.ne.s32.totalorder %s19, %s22
    %p28 = scmp.eq.s32.totalorder %s9, 0
    %p29 = por %p27, %p28
    %p30 = scmp.ne.s32.totalorder %s19, %s22
    %p31 = scmp.eq.s32.totalorder %s14, 15
    %p32 = por %p30, %p31
    %p33 = scmp.ne.s32.totalorder %s22, %s23
    %p34 = scmp.eq.s32.totalorder %s14, 0
    %p35 = por %p33, %p34
    %p36 = scmp.ne.s32.totalorder %s22, %s23
    %p37 = scmp.eq.s32.totalorder %s15, 15
    %p38 = por %p36, %p37
    %p40 = scmp.ne.s32.totalorder %s23, %s39
    %p41 = scmp.eq.s32.totalorder %s15, 0
    %p42 = por %p40, %p41
    %s44 = sadd.s32 %s43, 1
    %p47 = scmp.eq.s32.totalorder %s9, 15
    %p48 = scmp.ne.s32.totalorder %s43, %s45
    %p49 = scmp.eq.s32.totalorder %s9, 0
    %p50 = por %p48, %p49
    %p51 = scmp.ne.s32.totalorder %s43, %s45
    %p52 = scmp.eq.s32.totalorder %s14, 15
    %p53 = por %p51, %p52
    %p54 = scmp.ne.s32.totalorder %s45, %s46
    %p55 = scmp.eq.s32.totalorder %s14, 0
    %p56 = por %p54, %p55
    %p57 = scmp.ne.s32.totalorder %s45, %s46
    %p58 = scmp.eq.s32.totalorder %s15, 15
    %p59 = por %p57, %p58
    %p61 = scmp.ne.s32.totalorder %s46, %s60
    %p62 = scmp.eq.s32.totalorder %s15, 0
    %p63 = por %p61, %p62
    %s65 = sadd.s32 %s64, 1
    %p68 = scmp.eq.s32.totalorder %s9, 15
    %p69 = scmp.ne.s32.totalorder %s64, %s66
    %p70 = scmp.eq.s32.totalorder %s9, 0
    %p71 = por %p69, %p70
    %p72 = scmp.ne.s32.totalorder %s64, %s66
    %p73 = scmp.eq.s32.totalorder %s14, 15
    %p74 = por %p72, %p73
    %p75 = scmp.ne.s32.totalorder %s66, %s67
    %p76 = scmp.eq.s32.totalorder %s14, 0
    %p77 = por %p75, %p76
    %p78 = scmp.ne.s32.totalorder %s66, %s67
    %p79 = scmp.eq.s32.totalorder %s15, 15
    %p80 = por %p78, %p79
    %p82 = scmp.ne.s32.totalorder %s67, %s81
    %p83 = scmp.eq.s32.totalorder %s15, 0
    %p84 = por %p82, %p83
    %s85 = ssub.s32 %s9, %s16
    %p86 = scmp.eq.s32.totalorder %s85, 0
    %s88 = sadd.s32 %s87, 1
    %s89 = scalar_select %p86, %s87, %s88
    %p92 = pneg %p86
    %p93 = scmp.eq.s32.totalorder %s9, 15
    %p94 = por %p92, %p93
    %p95 = scmp.ne.s32.totalorder %s87, %s90
    %p96 = scmp.eq.s32.totalorder %s9, 0
    %p97 = por %p95, %p96
    %p98 = scmp.ne.s32.totalorder %s87, %s90
    %p99 = scmp.eq.s32.totalorder %s14, 15
    %p100 = por %p98, %p99
    %p101 = scmp.ne.s32.totalorder %s90, %s91
    %p102 = scmp.eq.s32.totalorder %s14, 0
    %p103 = por %p101, %p102
    %p104 = scmp.ne.s32.totalorder %s90, %s91
    %p105 = scmp.eq.s32.totalorder %s15, 15
    %p106 = por %p104, %p105
    %p108 = scmp.ne.s32.totalorder %s91, %s107
    %p109 = scmp.eq.s32.totalorder %s15, 0
    %p110 = por %p108, %p109
    %p111 = scmp.le.s32.totalorder 1, %s9
    %p112 = scmp.lt.s32.totalorder %s9, 17
    %p113 = pnand %p111, %p112
    %p114 = pneg %p113
    // Predicated region
    $region9: #{simple_view_encoder.8} parent=5 // pred_check
      _
    $region10: #{simple_view_encoder.8} parent=5 // pred_check_branch
      %116 = sbr.rel (%p113) target = $region12
    $region11: #{simple_view_encoder.8} parent=5 // pred_region
      %s117 = ssub.s32 %s9, 1
      // Predicated region
      $region13: #{simple_view_encoder.8} parent=11 // pred_check
        %p118 = pneg %p56
      $region14: #{simple_view_encoder.8} parent=11 // pred_check_branch
        %120 = sbr.rel (%p118) target = $region16
      $region15: #{simple_view_encoder.8} parent=11 // pred_region
        _
      $region16: #{simple_view_encoder.8} parent=11 // pred_fallthru
        _
      // Predicated region
      $region17: #{simple_view_encoder.8} parent=11 // pred_check
        %p121 = pneg %p77
      $region18: #{simple_view_encoder.8} parent=11 // pred_check_branch
        %123 = sbr.rel (%p121) target = $region20
      $region19: #{simple_view_encoder.8} parent=11 // pred_region
        _
      $region20: #{simple_view_encoder.8} parent=11 // pred_fallthru
        _
    $region12: #{simple_view_encoder.8} parent=5 // pred_fallthru
      _
    %p124 = scmp.lt.s32.totalorder %s9, 16
    // Predicated region
    $region21: #{simple_view_encoder.8} parent=5 // pred_check
      %p125 = pneg %p124
    $region22: #{simple_view_encoder.8} parent=5 // pred_check_branch
      %127 = sbr.rel (%p125) target = $region24
    $region23: #{simple_view_encoder.8} parent=5 // pred_region
      // Predicated region
      $region25: #{simple_view_encoder.8} parent=23 // pred_check
        %p128 = pneg %p29
      $region26: #{simple_view_encoder.8} parent=23 // pred_check_branch
        %130 = sbr.rel (%p128) target = $region28
      $region27: #{simple_view_encoder.8} parent=23 // pred_region
        %p131 = scmp.lt.s32.totalorder %s9, 15
        %s132 = scalar_select %p131, %s9, 15
        %s133 = smul.addr %s132, 20
        %s134 = smul.addr %s133, 8
        %s135 = scalar_lea.vmem %s0, %s134
      $region28: #{simple_view_encoder.8} parent=23 // pred_fallthru
        _
    $region24: #{simple_view_encoder.8} parent=5 // pred_fallthru
      _
    %p136 = scmp.le.s32.totalorder 1, %s9
    %p137 = scmp.lt.s32.totalorder %s9, 17
    %p138 = pnand %p136, %p137
    %p139 = pneg %p138
    // Predicated region
    $region29: #{simple_view_encoder.8} parent=5 // pred_check
      _
    $region30: #{simple_view_encoder.8} parent=5 // pred_check_branch
      %141 = sbr.rel (%p138) target = $region32
    $region31: #{simple_view_encoder.8} parent=5 // pred_region
      %s142 = ssub.s32 %s9, 1
      %p143 = scmp.lt.s32.totalorder %s14, 15
      %s144 = scalar_select %p143, %s14, 15
      %s145 = smul.addr %s144, 20
      %s146 = smul.addr %s145, 8
      %s147 = scalar_lea.vmem %s0, %s146
      %p148 = pneg %p35
      %p149 = pneg %p32
      %p150 = pneg %p56
      %p151 = pneg %p53
      %p152 = pneg %p77
      %p153 = pneg %p74
      %p154 = pneg %p103
      %p155 = pneg %p100
      %p156 = scmp.lt.s32.totalorder %s14, 15
      %s157 = scalar_select %p156, %s14, 15
      %s158 = smul.addr %s157, 8
      %s159 = smul.addr %s158, 4
      %s160 = scalar_lea.vmem %s3, %s159
      %p161 = scmp.lt.s32.totalorder %s14, 15
      %s162 = scalar_select %p161, %s14, 15
      %s163 = smul.addr %s162, 20
      %s164 = smul.addr %s163, 8
      %s165 = scalar_lea.vmem %s0, %s164
      %p166 = scmp.lt.s32.totalorder %s14, 15
      %s167 = scalar_select %p166, %s14, 15
      %s168 = smul.addr %s167, 8
      %s169 = smul.addr %s168, 4
      %s170 = scalar_lea.vmem %s3, %s169
      %v171 = vld [vmem:[%s2] sm:$0x3]
      loop: start=0, step=1, limit=4
      $region33: #{simple_view_encoder.8} parent=31 // loop_pre_header
        _
      $region34: #{simple_view_encoder.8} parent=31 // loop_header
        %s173 = sphi 0, %s177
        %p174 = scmp.ge.s32.totalorder %s173, 4
      $region35: #{simple_view_encoder.8} parent=31 // loop_header_branch
        %176 = sbr.rel (%p174) target = $region39
      $region36: #{simple_view_encoder.8} parent=31 // loop_body
        %s178 = smul.u32 %s173, 8
        %s179 = scalar_lea.vmem %s165, %s178
        %v180 = vld [vmem:[%s179] sm:$0xf]
        %v181 = vld [vmem:[%s1] sm:$0xff]
        %v182 = vld [vmem:[%s1 + $0x8] sm:$0xff]
        %v183 = vld [vmem:[%s1 + $0x10] sm:$0xff]
        %v184 = vld [vmem:[%s1 + $0x18] sm:$0xff]
        %v185 = vld [vmem:[%s1 + $0x20] sm:$0xff]
        %v186 = vld [vmem:[%s1 + $0x28] sm:$0xff]
        %v187 = vld [vmem:[%s1 + $0x30] sm:$0xff]
        %v188 = vld [vmem:[%s1 + $0x38] sm:$0xff]
        %v189 = vld [vmem:[%s1 + $0x40] sm:$0xff]
        %v190 = vld [vmem:[%s1 + $0x48] sm:$0xff]
        %v191 = vld [vmem:[%s1 + $0x50] sm:$0xff]
        %v192 = vld [vmem:[%s1 + $0x58] sm:$0xff]
        %v193 = vld [vmem:[%s1 + $0x60] sm:$0xff]
        %v194 = vld [vmem:[%s1 + $0x68] sm:$0xff]
        %v195 = vld [vmem:[%s1 + $0x70] sm:$0xff]
        %v196 = vld [vmem:[%s1 + $0x78] sm:$0xff]
        %v197 = vld [vmem:[%s1 + $0x80] sm:$0xff]
        %v198 = vld [vmem:[%s1 + $0x88] sm:$0xff]
        %v199 = vld [vmem:[%s1 + $0x90] sm:$0xff]
        %v200 = vld [vmem:[%s1 + $0x98] sm:$0xff]
        %v201 = vld [vmem:[%s1 + $0xa0] sm:$0xff]
        %v202 = vld [vmem:[%s1 + $0xa8] sm:$0xff]
        %v203 = vld [vmem:[%s1 + $0xb0] sm:$0xff]
        %v204 = vld [vmem:[%s1 + $0xb8] sm:$0xff]
        %v205 = vld [vmem:[%s1 + $0xc0] sm:$0xff]
        %v206 = vld [vmem:[%s1 + $0xc8] sm:$0xff]
        %v207 = vld [vmem:[%s1 + $0xd0] sm:$0xff]
        %v208 = vld [vmem:[%s1 + $0xd8] sm:$0xff]
        %v209 = vld [vmem:[%s1 + $0xe0] sm:$0xff]
        %v210 = vld [vmem:[%s1 + $0xe8] sm:$0xff]
        %v211 = vld [vmem:[%s1 + $0xf0] sm:$0xff]
        %v212 = vld [vmem:[%s1 + $0xf8] sm:$0xff]
        %s213 = sadd.s32 %s178, 40
        %s214 = scalar_lea.vmem %s165, %s213
        %v215 = vld [vmem:[%s214] sm:$0xf]
        %s216 = scalar_lea.vmem %s1, 256
        %v217 = vld [vmem:[%s216] sm:$0xff]
        %v218 = vld [vmem:[%s216 + $0x8] sm:$0xff]
        %v219 = vld [vmem:[%s216 + $0x10] sm:$0xff]
        %v220 = vld [vmem:[%s216 + $0x18] sm:$0xff]
        %v221 = vld [vmem:[%s216 + $0x20] sm:$0xff]
        %v222 = vld [vmem:[%s216 + $0x28] sm:$0xff]
        %v223 = vld [vmem:[%s216 + $0x30] sm:$0xff]
        %v224 = vld [vmem:[%s216 + $0x38] sm:$0xff]
        %v225 = vld [vmem:[%s216 + $0x40] sm:$0xff]
        %v226 = vld [vmem:[%s216 + $0x48] sm:$0xff]
        %v227 = vld [vmem:[%s216 + $0x50] sm:$0xff]
        %v228 = vld [vmem:[%s216 + $0x58] sm:$0xff]
        %v229 = vld [vmem:[%s216 + $0x60] sm:$0xff]
        %v230 = vld [vmem:[%s216 + $0x68] sm:$0xff]
        %v231 = vld [vmem:[%s216 + $0x70] sm:$0xff]
        %v232 = vld [vmem:[%s216 + $0x78] sm:$0xff]
        %v233 = vld [vmem:[%s216 + $0x80] sm:$0xff]
        %v234 = vld [vmem:[%s216 + $0x88] sm:$0xff]
        %v235 = vld [vmem:[%s216 + $0x90] sm:$0xff]
        %v236 = vld [vmem:[%s216 + $0x98] sm:$0xff]
        %v237 = vld [vmem:[%s216 + $0xa0] sm:$0xff]
        %v238 = vld [vmem:[%s216 + $0xa8] sm:$0xff]
        %v239 = vld [vmem:[%s216 + $0xb0] sm:$0xff]
        %v240 = vld [vmem:[%s216 + $0xb8] sm:$0xff]
        %v241 = vld [vmem:[%s216 + $0xc0] sm:$0xff]
        %v242 = vld [vmem:[%s216 + $0xc8] sm:$0xff]
        %v243 = vld [vmem:[%s216 + $0xd0] sm:$0xff]
        %v244 = vld [vmem:[%s216 + $0xd8] sm:$0xff]
        %v245 = vld [vmem:[%s216 + $0xe0] sm:$0xff]
        %v246 = vld [vmem:[%s216 + $0xe8] sm:$0xff]
        %v247 = vld [vmem:[%s216 + $0xf0] sm:$0xff]
        %v248 = vld [vmem:[%s216 + $0xf8] sm:$0xff]
        %249 = vmatprep.subr.mxu0 %v248
        %250 = vmatpush1.msra.mxu0 %v247
        %251 = vmatprep.subr.mxu0 %v246
        %252 = vmatpush1.msra.mxu0 %v245
        %253 = vmatprep.subr.mxu0 %v244
        %254 = vmatpush1.msra.mxu0 %v243
        %255 = vmatprep.subr.mxu0 %v242
        %256 = vmatpush1.msra.mxu0 %v241
        %257 = vmatprep.subr.mxu0 %v240
        %258 = vmatpush1.msra.mxu0 %v239
        %259 = vmatprep.subr.mxu0 %v238
        %260 = vmatpush1.msra.mxu0 %v237
        %261 = vmatprep.subr.mxu0 %v236
        %262 = vmatpush1.msra.mxu0 %v235
        %263 = vmatprep.subr.mxu0 %v234
        %264 = vmatpush1.msra.mxu0 %v233
        %265 = vmatprep.subr.mxu0 %v232
        %266 = vmatpush1.msra.mxu0 %v231
        %267 = vmatprep.subr.mxu0 %v230
        %268 = vmatpush1.msra.mxu0 %v229
        %269 = vmatprep.subr.mxu0 %v228
        %270 = vmatpush1.msra.mxu0 %v227
        %271 = vmatprep.subr.mxu0 %v226
        %272 = vmatpush1.msra.mxu0 %v225
        %273 = vmatprep.subr.mxu0 %v224
        %274 = vmatpush1.msra.mxu0 %v223
        %275 = vmatprep.subr.mxu0 %v222
        %276 = vmatpush1.msra.mxu0 %v221
        %277 = vmatprep.subr.mxu0 %v220
        %278 = vmatpush1.msra.mxu0 %v219
        %279 = vmatprep.subr.mxu0 %v218
        %280 = vmatpush1.msra.mxu0 %v217
        %281 = vmatprep.subr.mxu0 0.0
        %282 = vmatpush2.msra.mxu0 0.0
        %283 = vmatprep.subr.mxu0 0.0
        %284 = vmatpush2.msra.mxu0 0.0
        %285 = vmatprep.subr.mxu0 0.0
        %286 = vmatpush2.msra.mxu0 0.0
        %287 = vmatprep.subr.mxu0 0.0
        %288 = vmatpush2.msra.mxu0 0.0
        %289 = vmatprep.subr.mxu0 0.0
        %290 = vmatpush2.msra.mxu0 0.0
        %291 = vmatprep.subr.mxu0 0.0
        %292 = vmatpush2.msra.mxu0 0.0
        %293 = vmatprep.subr.mxu0 0.0
        %294 = vmatpush2.msra.mxu0 0.0
        %295 = vmatprep.subr.mxu0 0.0
        %296 = vmatpush2.msra.mxu0 0.0
        %297 = vmatprep.subr.mxu0 0.0
        %298 = vmatpush2.msra.mxu0 0.0
        %299 = vmatprep.subr.mxu0 0.0
        %300 = vmatpush2.msra.mxu0 0.0
        %301 = vmatprep.subr.mxu0 0.0
        %302 = vmatpush2.msra.mxu0 0.0
        %303 = vmatprep.subr.mxu0 0.0
        %304 = vmatpush2.msra.mxu0 0.0
        %305 = vmatprep.subr.mxu0 0.0
        %306 = vmatpush2.msra.mxu0 0.0
        %307 = vmatprep.subr.mxu0 0.0
        %308 = vmatpush2.msra.mxu0 0.0
        %309 = vmatprep.subr.mxu0 0.0
        %310 = vmatpush2.msra.mxu0 0.0
        %311 = vmatprep.subr.mxu0 0.0
        %312 = vmatpush2.msra.mxu0 0.0
        %313 = vmatprep.mubr.f32.mxu0 0.0
        %314 = vmatmul.mubr.f32.gmra.mxu0 %v215
        %v315 = vpop.f32.mrf.mxu0
        %v316 = vadd.f32 0.0, %v315
        %v317 = vpop.f32.mrf.mxu0
        %v318 = vadd.f32 0.0, %v317
        %319 = vdwg.mxu0
        %320 = vmatprep.subr.mxu0 %v212
        %321 = vmatpush1.msra.mxu0 %v211
        %322 = vmatprep.subr.mxu0 %v210
        %323 = vmatpush1.msra.mxu0 %v209
        %324 = vmatprep.subr.mxu0 %v208
        %325 = vmatpush1.msra.mxu0 %v207
        %326 = vmatprep.subr.mxu0 %v206
        %327 = vmatpush1.msra.mxu0 %v205
        %328 = vmatprep.subr.mxu0 %v204
        %329 = vmatpush1.msra.mxu0 %v203
        %330 = vmatprep.subr.mxu0 %v202
        %331 = vmatpush1.msra.mxu0 %v201
        %332 = vmatprep.subr.mxu0 %v200
        %333 = vmatpush1.msra.mxu0 %v199
        %334 = vmatprep.subr.mxu0 %v198
        %335 = vmatpush1.msra.mxu0 %v197
        %336 = vmatprep.subr.mxu0 %v196
        %337 = vmatpush1.msra.mxu0 %v195
        %338 = vmatprep.subr.mxu0 %v194
        %339 = vmatpush1.msra.mxu0 %v193
        %340 = vmatprep.subr.mxu0 %v192
        %341 = vmatpush1.msra.mxu0 %v191
        %342 = vmatprep.subr.mxu0 %v190
        %343 = vmatpush1.msra.mxu0 %v189
        %344 = vmatprep.subr.mxu0 %v188
        %345 = vmatpush1.msra.mxu0 %v187
        %346 = vmatprep.subr.mxu0 %v186
        %347 = vmatpush1.msra.mxu0 %v185
        %348 = vmatprep.subr.mxu0 %v184
        %349 = vmatpush1.msra.mxu0 %v183
        %350 = vmatprep.subr.mxu0 %v182
        %351 = vmatpush1.msra.mxu0 %v181
        %352 = vmatprep.subr.mxu0 0.0
        %353 = vmatpush2.msra.mxu0 0.0
        %354 = vmatprep.subr.mxu0 0.0
        %355 = vmatpush2.msra.mxu0 0.0
        %356 = vmatprep.subr.mxu0 0.0
        %357 = vmatpush2.msra.mxu0 0.0
        %358 = vmatprep.subr.mxu0 0.0
        %359 = vmatpush2.msra.mxu0 0.0
        %360 = vmatprep.subr.mxu0 0.0
        %361 = vmatpush2.msra.mxu0 0.0
        %362 = vmatprep.subr.mxu0 0.0
        %363 = vmatpush2.msra.mxu0 0.0
        %364 = vmatprep.subr.mxu0 0.0
        %365 = vmatpush2.msra.mxu0 0.0
        %366 = vmatprep.subr.mxu0 0.0
        %367 = vmatpush2.msra.mxu0 0.0
        %368 = vmatprep.subr.mxu0 0.0
        %369 = vmatpush2.msra.mxu0 0.0
        %370 = vmatprep.subr.mxu0 0.0
        %371 = vmatpush2.msra.mxu0 0.0
        %372 = vmatprep.subr.mxu0 0.0
        %373 = vmatpush2.msra.mxu0 0.0
        %374 = vmatprep.subr.mxu0 0.0
        %375 = vmatpush2.msra.mxu0 0.0
        %376 = vmatprep.subr.mxu0 0.0
        %377 = vmatpush2.msra.mxu0 0.0
        %378 = vmatprep.subr.mxu0 0.0
        %379 = vmatpush2.msra.mxu0 0.0
        %380 = vmatprep.subr.mxu0 0.0
        %381 = vmatpush2.msra.mxu0 0.0
        %382 = vmatprep.subr.mxu0 0.0
        %383 = vmatpush2.msra.mxu0 0.0
        %384 = vmatprep.mubr.f32.mxu0 0.0
        %385 = vmatmul.mubr.f32.gmra.mxu0 %v180
        %v386 = vpop.f32.mrf.mxu0
        %v387 = vadd.f32 %v316, %v386
        %v388 = vpop.f32.mrf.mxu0
        %v389 = vadd.f32 %v318, %v388
        %390 = vdwg.mxu0
        %v391 = vld [vmem:[%s179 + $0x1] sm:$0xf]
        %s392 = scalar_lea.vmem %s1, 512
        %v393 = vld [vmem:[%s392] sm:$0xff]
        %v394 = vld [vmem:[%s392 + $0x8] sm:$0xff]
        %v395 = vld [vmem:[%s392 + $0x10] sm:$0xff]
        %v396 = vld [vmem:[%s392 + $0x18] sm:$0xff]
        %v397 = vld [vmem:[%s392 + $0x20] sm:$0xff]
        %v398 = vld [vmem:[%s392 + $0x28] sm:$0xff]
        %v399 = vld [vmem:[%s392 + $0x30] sm:$0xff]
        %v400 = vld [vmem:[%s392 + $0x38] sm:$0xff]
        %v401 = vld [vmem:[%s392 + $0x40] sm:$0xff]
        %v402 = vld [vmem:[%s392 + $0x48] sm:$0xff]
        %v403 = vld [vmem:[%s392 + $0x50] sm:$0xff]
        %v404 = vld [vmem:[%s392 + $0x58] sm:$0xff]
        %v405 = vld [vmem:[%s392 + $0x60] sm:$0xff]
        %v406 = vld [vmem:[%s392 + $0x68] sm:$0xff]
        %v407 = vld [vmem:[%s392 + $0x70] sm:$0xff]
        %v408 = vld [vmem:[%s392 + $0x78] sm:$0xff]
        %v409 = vld [vmem:[%s392 + $0x80] sm:$0xff]
        %v410 = vld [vmem:[%s392 + $0x88] sm:$0xff]
        %v411 = vld [vmem:[%s392 + $0x90] sm:$0xff]
        %v412 = vld [vmem:[%s392 + $0x98] sm:$0xff]
        %v413 = vld [vmem:[%s392 + $0xa0] sm:$0xff]
        %v414 = vld [vmem:[%s392 + $0xa8] sm:$0xff]
        %v415 = vld [vmem:[%s392 + $0xb0] sm:$0xff]
        %v416 = vld [vmem:[%s392 + $0xb8] sm:$0xff]
        %v417 = vld [vmem:[%s392 + $0xc0] sm:$0xff]
        %v418 = vld [vmem:[%s392 + $0xc8] sm:$0xff]
        %v419 = vld [vmem:[%s392 + $0xd0] sm:$0xff]
        %v420 = vld [vmem:[%s392 + $0xd8] sm:$0xff]
        %v421 = vld [vmem:[%s392 + $0xe0] sm:$0xff]
        %v422 = vld [vmem:[%s392 + $0xe8] sm:$0xff]
        %v423 = vld [vmem:[%s392 + $0xf0] sm:$0xff]
        %v424 = vld [vmem:[%s392 + $0xf8] sm:$0xff]
        %425 = vmatprep.subr.mxu0 %v424
        %426 = vmatpush1.msra.mxu0 %v423
        %427 = vmatprep.subr.mxu0 %v422
        %428 = vmatpush1.msra.mxu0 %v421
        %429 = vmatprep.subr.mxu0 %v420
        %430 = vmatpush1.msra.mxu0 %v419
        %431 = vmatprep.subr.mxu0 %v418
        %432 = vmatpush1.msra.mxu0 %v417
        %433 = vmatprep.subr.mxu0 %v416
        %434 = vmatpush1.msra.mxu0 %v415
        %435 = vmatprep.subr.mxu0 %v414
        %436 = vmatpush1.msra.mxu0 %v413
        %437 = vmatprep.subr.mxu0 %v412
        %438 = vmatpush1.msra.mxu0 %v411
        %439 = vmatprep.subr.mxu0 %v410
        %440 = vmatpush1.msra.mxu0 %v409
        %441 = vmatprep.subr.mxu0 %v408
        %442 = vmatpush1.msra.mxu0 %v407
        %443 = vmatprep.subr.mxu0 %v406
        %444 = vmatpush1.msra.mxu0 %v405
        %445 = vmatprep.subr.mxu0 %v404
        %446 = vmatpush1.msra.mxu0 %v403
        %447 = vmatprep.subr.mxu0 %v402
        %448 = vmatpush1.msra.mxu0 %v401
        %449 = vmatprep.subr.mxu0 %v400
        %450 = vmatpush1.msra.mxu0 %v399
        %451 = vmatprep.subr.mxu0 %v398
        %452 = vmatpush1.msra.mxu0 %v397
        %453 = vmatprep.subr.mxu0 %v396
        %454 = vmatpush1.msra.mxu0 %v395
        %455 = vmatprep.subr.mxu0 %v394
        %456 = vmatpush1.msra.mxu0 %v393
        %457 = vmatprep.subr.mxu0 0.0
        %458 = vmatpush2.msra.mxu0 0.0
        %459 = vmatprep.subr.mxu0 0.0
        %460 = vmatpush2.msra.mxu0 0.0
        %461 = vmatprep.subr.mxu0 0.0
        %462 = vmatpush2.msra.mxu0 0.0
        %463 = vmatprep.subr.mxu0 0.0
        %464 = vmatpush2.msra.mxu0 0.0
        %465 = vmatprep.subr.mxu0 0.0
        %466 = vmatpush2.msra.mxu0 0.0
        %467 = vmatprep.subr.mxu0 0.0
        %468 = vmatpush2.msra.mxu0 0.0
        %469 = vmatprep.subr.mxu0 0.0
        %470 = vmatpush2.msra.mxu0 0.0
        %471 = vmatprep.subr.mxu0 0.0
        %472 = vmatpush2.msra.mxu0 0.0
        %473 = vmatprep.subr.mxu0 0.0
        %474 = vmatpush2.msra.mxu0 0.0
        %475 = vmatprep.subr.mxu0 0.0
        %476 = vmatpush2.msra.mxu0 0.0
        %477 = vmatprep.subr.mxu0 0.0
        %478 = vmatpush2.msra.mxu0 0.0
        %479 = vmatprep.subr.mxu0 0.0
        %480 = vmatpush2.msra.mxu0 0.0
        %481 = vmatprep.subr.mxu0 0.0
        %482 = vmatpush2.msra.mxu0 0.0
        %483 = vmatprep.subr.mxu0 0.0
        %484 = vmatpush2.msra.mxu0 0.0
        %485 = vmatprep.subr.mxu0 0.0
        %486 = vmatpush2.msra.mxu0 0.0
        %487 = vmatprep.subr.mxu0 0.0
        %488 = vmatpush2.msra.mxu0 0.0
        %489 = vmatprep.mubr.f32.mxu0 0.0
        %490 = vmatmul.mubr.f32.gmra.mxu0 %v391
        %v491 = vpop.f32.mrf.mxu0
        %v492 = vadd.f32 0.0, %v491
        %v493 = vpop.f32.mrf.mxu0
        %v494 = vadd.f32 0.0, %v493
        %495 = vdwg.mxu0
        %v496 = vadd.f32 %v387, %v492
        %v497 = vadd.f32 %v389, %v494
        %s498 = sadd.s32 %s178, 80
        %s499 = scalar_lea.vmem %s165, %s498
        %v500 = vld [vmem:[%s499] sm:$0xf]
        %s501 = scalar_lea.vmem %s1, 768
        %v502 = vld [vmem:[%s501] sm:$0xff]
        %v503 = vld [vmem:[%s501 + $0x8] sm:$0xff]
        %v504 = vld [vmem:[%s501 + $0x10] sm:$0xff]
        %v505 = vld [vmem:[%s501 + $0x18] sm:$0xff]
        %v506 = vld [vmem:[%s501 + $0x20] sm:$0xff]
        %v507 = vld [vmem:[%s501 + $0x28] sm:$0xff]
        %v508 = vld [vmem:[%s501 + $0x30] sm:$0xff]
        %v509 = vld [vmem:[%s501 + $0x38] sm:$0xff]
        %v510 = vld [vmem:[%s501 + $0x40] sm:$0xff]
        %v511 = vld [vmem:[%s501 + $0x48] sm:$0xff]
        %v512 = vld [vmem:[%s501 + $0x50] sm:$0xff]
        %v513 = vld [vmem:[%s501 + $0x58] sm:$0xff]
        %v514 = vld [vmem:[%s501 + $0x60] sm:$0xff]
        %v515 = vld [vmem:[%s501 + $0x68] sm:$0xff]
        %v516 = vld [vmem:[%s501 + $0x70] sm:$0xff]
        %v517 = vld [vmem:[%s501 + $0x78] sm:$0xff]
        %v518 = vld [vmem:[%s501 + $0x80] sm:$0xff]
        %v519 = vld [vmem:[%s501 + $0x88] sm:$0xff]
        %v520 = vld [vmem:[%s501 + $0x90] sm:$0xff]
        %v521 = vld [vmem:[%s501 + $0x98] sm:$0xff]
        %v522 = vld [vmem:[%s501 + $0xa0] sm:$0xff]
        %v523 = vld [vmem:[%s501 + $0xa8] sm:$0xff]
        %v524 = vld [vmem:[%s501 + $0xb0] sm:$0xff]
        %v525 = vld [vmem:[%s501 + $0xb8] sm:$0xff]
        %v526 = vld [vmem:[%s501 + $0xc0] sm:$0xff]
        %v527 = vld [vmem:[%s501 + $0xc8] sm:$0xff]
        %v528 = vld [vmem:[%s501 + $0xd0] sm:$0xff]
        %v529 = vld [vmem:[%s501 + $0xd8] sm:$0xff]
        %v530 = vld [vmem:[%s501 + $0xe0] sm:$0xff]
        %v531 = vld [vmem:[%s501 + $0xe8] sm:$0xff]
        %v532 = vld [vmem:[%s501 + $0xf0] sm:$0xff]
        %v533 = vld [vmem:[%s501 + $0xf8] sm:$0xff]
        %534 = vmatprep.subr.mxu0 %v533
        %535 = vmatpush1.msra.mxu0 %v532
        %536 = vmatprep.subr.mxu0 %v531
        %537 = vmatpush1.msra.mxu0 %v530
        %538 = vmatprep.subr.mxu0 %v529
        %539 = vmatpush1.msra.mxu0 %v528
        %540 = vmatprep.subr.mxu0 %v527
        %541 = vmatpush1.msra.mxu0 %v526
        %542 = vmatprep.subr.mxu0 %v525
        %543 = vmatpush1.msra.mxu0 %v524
        %544 = vmatprep.subr.mxu0 %v523
        %545 = vmatpush1.msra.mxu0 %v522
        %546 = vmatprep.subr.mxu0 %v521
        %547 = vmatpush1.msra.mxu0 %v520
        %548 = vmatprep.subr.mxu0 %v519
        %549 = vmatpush1.msra.mxu0 %v518
        %550 = vmatprep.subr.mxu0 %v517
        %551 = vmatpush1.msra.mxu0 %v516
        %552 = vmatprep.subr.mxu0 %v515
        %553 = vmatpush1.msra.mxu0 %v514
        %554 = vmatprep.subr.mxu0 %v513
        %555 = vmatpush1.msra.mxu0 %v512
        %556 = vmatprep.subr.mxu0 %v511
        %557 = vmatpush1.msra.mxu0 %v510
        %558 = vmatprep.subr.mxu0 %v509
        %559 = vmatpush1.msra.mxu0 %v508
        %560 = vmatprep.subr.mxu0 %v507
        %561 = vmatpush1.msra.mxu0 %v506
        %562 = vmatprep.subr.mxu0 %v505
        %563 = vmatpush1.msra.mxu0 %v504
        %564 = vmatprep.subr.mxu0 %v503
        %565 = vmatpush1.msra.mxu0 %v502
        %566 = vmatprep.subr.mxu0 0.0
        %567 = vmatpush2.msra.mxu0 0.0
        %568 = vmatprep.subr.mxu0 0.0
        %569 = vmatpush2.msra.mxu0 0.0
        %570 = vmatprep.subr.mxu0 0.0
        %571 = vmatpush2.msra.mxu0 0.0
        %572 = vmatprep.subr.mxu0 0.0
        %573 = vmatpush2.msra.mxu0 0.0
        %574 = vmatprep.subr.mxu0 0.0
        %575 = vmatpush2.msra.mxu0 0.0
        %576 = vmatprep.subr.mxu0 0.0
        %577 = vmatpush2.msra.mxu0 0.0
        %578 = vmatprep.subr.mxu0 0.0
        %579 = vmatpush2.msra.mxu0 0.0
        %580 = vmatprep.subr.mxu0 0.0
        %581 = vmatpush2.msra.mxu0 0.0
        %582 = vmatprep.subr.mxu0 0.0
        %583 = vmatpush2.msra.mxu0 0.0
        %584 = vmatprep.subr.mxu0 0.0
        %585 = vmatpush2.msra.mxu0 0.0
        %586 = vmatprep.subr.mxu0 0.0
        %587 = vmatpush2.msra.mxu0 0.0
        %588 = vmatprep.subr.mxu0 0.0
        %589 = vmatpush2.msra.mxu0 0.0
        %590 = vmatprep.subr.mxu0 0.0
        %591 = vmatpush2.msra.mxu0 0.0
        %592 = vmatprep.subr.mxu0 0.0
        %593 = vmatpush2.msra.mxu0 0.0
        %594 = vmatprep.subr.mxu0 0.0
        %595 = vmatpush2.msra.mxu0 0.0
        %596 = vmatprep.subr.mxu0 0.0
        %597 = vmatpush2.msra.mxu0 0.0
        %598 = vmatprep.mubr.f32.mxu0 0.0
        %599 = vmatmul.mubr.f32.gmra.mxu0 %v500
        %v600 = vpop.f32.mrf.mxu0
        %v601 = vadd.f32 0.0, %v600
        %v602 = vpop.f32.mrf.mxu0
        %v603 = vadd.f32 0.0, %v602
        %604 = vdwg.mxu0
        %v605 = vadd.f32 %v496, %v601
        %v606 = vadd.f32 %v497, %v603
        %s607 = sadd.s32 %s178, 120
        %s608 = scalar_lea.vmem %s165, %s607
        %v609 = vld [vmem:[%s608] sm:$0xf]
        %s610 = scalar_lea.vmem %s1, 1024
        %v611 = vld [vmem:[%s610] sm:$0xff]
        %v612 = vld [vmem:[%s610 + $0x8] sm:$0xff]
        %v613 = vld [vmem:[%s610 + $0x10] sm:$0xff]
        %v614 = vld [vmem:[%s610 + $0x18] sm:$0xff]
        %v615 = vld [vmem:[%s610 + $0x20] sm:$0xff]
        %v616 = vld [vmem:[%s610 + $0x28] sm:$0xff]
        %v617 = vld [vmem:[%s610 + $0x30] sm:$0xff]
        %v618 = vld [vmem:[%s610 + $0x38] sm:$0xff]
        %v619 = vld [vmem:[%s610 + $0x40] sm:$0xff]
        %v620 = vld [vmem:[%s610 + $0x48] sm:$0xff]
        %v621 = vld [vmem:[%s610 + $0x50] sm:$0xff]
        %v622 = vld [vmem:[%s610 + $0x58] sm:$0xff]
        %v623 = vld [vmem:[%s610 + $0x60] sm:$0xff]
        %v624 = vld [vmem:[%s610 + $0x68] sm:$0xff]
        %v625 = vld [vmem:[%s610 + $0x70] sm:$0xff]
        %v626 = vld [vmem:[%s610 + $0x78] sm:$0xff]
        %v627 = vld [vmem:[%s610 + $0x80] sm:$0xff]
        %v628 = vld [vmem:[%s610 + $0x88] sm:$0xff]
        %v629 = vld [vmem:[%s610 + $0x90] sm:$0xff]
        %v630 = vld [vmem:[%s610 + $0x98] sm:$0xff]
        %v631 = vld [vmem:[%s610 + $0xa0] sm:$0xff]
        %v632 = vld [vmem:[%s610 + $0xa8] sm:$0xff]
        %v633 = vld [vmem:[%s610 + $0xb0] sm:$0xff]
        %v634 = vld [vmem:[%s610 + $0xb8] sm:$0xff]
        %v635 = vld [vmem:[%s610 + $0xc0] sm:$0xff]
        %v636 = vld [vmem:[%s610 + $0xc8] sm:$0xff]
        %v637 = vld [vmem:[%s610 + $0xd0] sm:$0xff]
        %v638 = vld [vmem:[%s610 + $0xd8] sm:$0xff]
        %v639 = vld [vmem:[%s610 + $0xe0] sm:$0xff]
        %v640 = vld [vmem:[%s610 + $0xe8] sm:$0xff]
        %v641 = vld [vmem:[%s610 + $0xf0] sm:$0xff]
        %v642 = vld [vmem:[%s610 + $0xf8] sm:$0xff]
        %643 = vmatprep.subr.mxu0 %v642
        %644 = vmatpush1.msra.mxu0 %v641
        %645 = vmatprep.subr.mxu0 %v640
        %646 = vmatpush1.msra.mxu0 %v639
        %647 = vmatprep.subr.mxu0 %v638
        %648 = vmatpush1.msra.mxu0 %v637
        %649 = vmatprep.subr.mxu0 %v636
        %650 = vmatpush1.msra.mxu0 %v635
        %651 = vmatprep.subr.mxu0 %v634
        %652 = vmatpush1.msra.mxu0 %v633
        %653 = vmatprep.subr.mxu0 %v632
        %654 = vmatpush1.msra.mxu0 %v631
        %655 = vmatprep.subr.mxu0 %v630
        %656 = vmatpush1.msra.mxu0 %v629
        %657 = vmatprep.subr.mxu0 %v628
        %658 = vmatpush1.msra.mxu0 %v627
        %659 = vmatprep.subr.mxu0 %v626
        %660 = vmatpush1.msra.mxu0 %v625
        %661 = vmatprep.subr.mxu0 %v624
        %662 = vmatpush1.msra.mxu0 %v623
        %663 = vmatprep.subr.mxu0 %v622
        %664 = vmatpush1.msra.mxu0 %v621
        %665 = vmatprep.subr.mxu0 %v620
        %666 = vmatpush1.msra.mxu0 %v619
        %667 = vmatprep.subr.mxu0 %v618
        %668 = vmatpush1.msra.mxu0 %v617
        %669 = vmatprep.subr.mxu0 %v616
        %670 = vmatpush1.msra.mxu0 %v615
        %671 = vmatprep.subr.mxu0 %v614
        %672 = vmatpush1.msra.mxu0 %v613
        %673 = vmatprep.subr.mxu0 %v612
        %674 = vmatpush1.msra.mxu0 %v611
        %675 = vmatprep.subr.mxu0 0.0
        %676 = vmatpush2.msra.mxu0 0.0
        %677 = vmatprep.subr.mxu0 0.0
        %678 = vmatpush2.msra.mxu0 0.0
        %679 = vmatprep.subr.mxu0 0.0
        %680 = vmatpush2.msra.mxu0 0.0
        %681 = vmatprep.subr.mxu0 0.0
        %682 = vmatpush2.msra.mxu0 0.0
        %683 = vmatprep.subr.mxu0 0.0
        %684 = vmatpush2.msra.mxu0 0.0
        %685 = vmatprep.subr.mxu0 0.0
        %686 = vmatpush2.msra.mxu0 0.0
        %687 = vmatprep.subr.mxu0 0.0
        %688 = vmatpush2.msra.mxu0 0.0
        %689 = vmatprep.subr.mxu0 0.0
        %690 = vmatpush2.msra.mxu0 0.0
        %691 = vmatprep.subr.mxu0 0.0
        %692 = vmatpush2.msra.mxu0 0.0
        %693 = vmatprep.subr.mxu0 0.0
        %694 = vmatpush2.msra.mxu0 0.0
        %695 = vmatprep.subr.mxu0 0.0
        %696 = vmatpush2.msra.mxu0 0.0
        %697 = vmatprep.subr.mxu0 0.0
        %698 = vmatpush2.msra.mxu0 0.0
        %699 = vmatprep.subr.mxu0 0.0
        %700 = vmatpush2.msra.mxu0 0.0
        %701 = vmatprep.subr.mxu0 0.0
        %702 = vmatpush2.msra.mxu0 0.0
        %703 = vmatprep.subr.mxu0 0.0
        %704 = vmatpush2.msra.mxu0 0.0
        %705 = vmatprep.subr.mxu0 0.0
        %706 = vmatpush2.msra.mxu0 0.0
        %707 = vmatprep.mubr.f32.mxu0 0.0
        %708 = vmatmul.mubr.f32.gmra.mxu0 %v609
        %v709 = vpop.f32.mrf.mxu0
        %v710 = vadd.f32 0.0, %v709
        %v711 = vpop.f32.mrf.mxu0
        %v712 = vadd.f32 0.0, %v711
        %713 = vdwg.mxu0
        %v714 = vadd.f32 %v605, %v710
        %v715 = vadd.f32 %v606, %v712
        %v716 = vld [vmem:[%s499 + $0x1] sm:$0xf]
        %s717 = scalar_lea.vmem %s1, 1280
        %v718 = vld [vmem:[%s717] sm:$0xff]
        %v719 = vld [vmem:[%s717 + $0x8] sm:$0xff]
        %v720 = vld [vmem:[%s717 + $0x10] sm:$0xff]
        %v721 = vld [vmem:[%s717 + $0x18] sm:$0xff]
        %v722 = vld [vmem:[%s717 + $0x20] sm:$0xff]
        %v723 = vld [vmem:[%s717 + $0x28] sm:$0xff]
        %v724 = vld [vmem:[%s717 + $0x30] sm:$0xff]
        %v725 = vld [vmem:[%s717 + $0x38] sm:$0xff]
        %v726 = vld [vmem:[%s717 + $0x40] sm:$0xff]
        %v727 = vld [vmem:[%s717 + $0x48] sm:$0xff]
        %v728 = vld [vmem:[%s717 + $0x50] sm:$0xff]
        %v729 = vld [vmem:[%s717 + $0x58] sm:$0xff]
        %v730 = vld [vmem:[%s717 + $0x60] sm:$0xff]
        %v731 = vld [vmem:[%s717 + $0x68] sm:$0xff]
        %v732 = vld [vmem:[%s717 + $0x70] sm:$0xff]
        %v733 = vld [vmem:[%s717 + $0x78] sm:$0xff]
        %v734 = vld [vmem:[%s717 + $0x80] sm:$0xff]
        %v735 = vld [vmem:[%s717 + $0x88] sm:$0xff]
        %v736 = vld [vmem:[%s717 + $0x90] sm:$0xff]
        %v737 = vld [vmem:[%s717 + $0x98] sm:$0xff]
        %v738 = vld [vmem:[%s717 + $0xa0] sm:$0xff]
        %v739 = vld [vmem:[%s717 + $0xa8] sm:$0xff]
        %v740 = vld [vmem:[%s717 + $0xb0] sm:$0xff]
        %v741 = vld [vmem:[%s717 + $0xb8] sm:$0xff]
        %v742 = vld [vmem:[%s717 + $0xc0] sm:$0xff]
        %v743 = vld [vmem:[%s717 + $0xc8] sm:$0xff]
        %v744 = vld [vmem:[%s717 + $0xd0] sm:$0xff]
        %v745 = vld [vmem:[%s717 + $0xd8] sm:$0xff]
        %v746 = vld [vmem:[%s717 + $0xe0] sm:$0xff]
        %v747 = vld [vmem:[%s717 + $0xe8] sm:$0xff]
        %v748 = vld [vmem:[%s717 + $0xf0] sm:$0xff]
        %v749 = vld [vmem:[%s717 + $0xf8] sm:$0xff]
        %750 = vmatprep.subr.mxu0 %v749
        %751 = vmatpush1.msra.mxu0 %v748
        %752 = vmatprep.subr.mxu0 %v747
        %753 = vmatpush1.msra.mxu0 %v746
        %754 = vmatprep.subr.mxu0 %v745
        %755 = vmatpush1.msra.mxu0 %v744
        %756 = vmatprep.subr.mxu0 %v743
        %757 = vmatpush1.msra.mxu0 %v742
        %758 = vmatprep.subr.mxu0 %v741
        %759 = vmatpush1.msra.mxu0 %v740
        %760 = vmatprep.subr.mxu0 %v739
        %761 = vmatpush1.msra.mxu0 %v738
        %762 = vmatprep.subr.mxu0 %v737
        %763 = vmatpush1.msra.mxu0 %v736
        %764 = vmatprep.subr.mxu0 %v735
        %765 = vmatpush1.msra.mxu0 %v734
        %766 = vmatprep.subr.mxu0 %v733
        %767 = vmatpush1.msra.mxu0 %v732
        %768 = vmatprep.subr.mxu0 %v731
        %769 = vmatpush1.msra.mxu0 %v730
        %770 = vmatprep.subr.mxu0 %v729
        %771 = vmatpush1.msra.mxu0 %v728
        %772 = vmatprep.subr.mxu0 %v727
        %773 = vmatpush1.msra.mxu0 %v726
        %774 = vmatprep.subr.mxu0 %v725
        %775 = vmatpush1.msra.mxu0 %v724
        %776 = vmatprep.subr.mxu0 %v723
        %777 = vmatpush1.msra.mxu0 %v722
        %778 = vmatprep.subr.mxu0 %v721
        %779 = vmatpush1.msra.mxu0 %v720
        %780 = vmatprep.subr.mxu0 %v719
        %781 = vmatpush1.msra.mxu0 %v718
        %782 = vmatprep.subr.mxu0 0.0
        %783 = vmatpush2.msra.mxu0 0.0
        %784 = vmatprep.subr.mxu0 0.0
        %785 = vmatpush2.msra.mxu0 0.0
        %786 = vmatprep.subr.mxu0 0.0
        %787 = vmatpush2.msra.mxu0 0.0
        %788 = vmatprep.subr.mxu0 0.0
        %789 = vmatpush2.msra.mxu0 0.0
        %790 = vmatprep.subr.mxu0 0.0
        %791 = vmatpush2.msra.mxu0 0.0
        %792 = vmatprep.subr.mxu0 0.0
        %793 = vmatpush2.msra.mxu0 0.0
        %794 = vmatprep.subr.mxu0 0.0
        %795 = vmatpush2.msra.mxu0 0.0
        %796 = vmatprep.subr.mxu0 0.0
        %797 = vmatpush2.msra.mxu0 0.0
        %798 = vmatprep.subr.mxu0 0.0
        %799 = vmatpush2.msra.mxu0 0.0
        %800 = vmatprep.subr.mxu0 0.0
        %801 = vmatpush2.msra.mxu0 0.0
        %802 = vmatprep.subr.mxu0 0.0
        %803 = vmatpush2.msra.mxu0 0.0
        %804 = vmatprep.subr.mxu0 0.0
        %805 = vmatpush2.msra.mxu0 0.0
        %806 = vmatprep.subr.mxu0 0.0
        %807 = vmatpush2.msra.mxu0 0.0
        %808 = vmatprep.subr.mxu0 0.0
        %809 = vmatpush2.msra.mxu0 0.0
        %810 = vmatprep.subr.mxu0 0.0
        %811 = vmatpush2.msra.mxu0 0.0
        %812 = vmatprep.subr.mxu0 0.0
        %813 = vmatpush2.msra.mxu0 0.0
        %814 = vmatprep.mubr.f32.mxu0 0.0
        %815 = vmatmul.mubr.f32.gmra.mxu0 %v716
        %v816 = vpop.f32.mrf.mxu0
        %v817 = vadd.f32 0.0, %v816
        %v818 = vpop.f32.mrf.mxu0
        %v819 = vadd.f32 0.0, %v818
        %820 = vdwg.mxu0
        %v821 = vadd.f32 %v714, %v817
        %v822 = vadd.f32 %v715, %v819
        %s823 = sadd.s32 %s173, 1
        %s824 = smul.u32 %s823, 8
        %s825 = scalar_lea.vmem %s165, %s824
        %v826 = vld [vmem:[%s825] sm:$0xf]
        %s827 = scalar_lea.vmem %s1, 1536
        %v828 = vld [vmem:[%s827] sm:$0xff]
        %v829 = vld [vmem:[%s827 + $0x8] sm:$0xff]
        %v830 = vld [vmem:[%s827 + $0x10] sm:$0xff]
        %v831 = vld [vmem:[%s827 + $0x18] sm:$0xff]
        %v832 = vld [vmem:[%s827 + $0x20] sm:$0xff]
        %v833 = vld [vmem:[%s827 + $0x28] sm:$0xff]
        %v834 = vld [vmem:[%s827 + $0x30] sm:$0xff]
        %v835 = vld [vmem:[%s827 + $0x38] sm:$0xff]
        %v836 = vld [vmem:[%s827 + $0x40] sm:$0xff]
        %v837 = vld [vmem:[%s827 + $0x48] sm:$0xff]
        %v838 = vld [vmem:[%s827 + $0x50] sm:$0xff]
        %v839 = vld [vmem:[%s827 + $0x58] sm:$0xff]
        %v840 = vld [vmem:[%s827 + $0x60] sm:$0xff]
        %v841 = vld [vmem:[%s827 + $0x68] sm:$0xff]
        %v842 = vld [vmem:[%s827 + $0x70] sm:$0xff]
        %v843 = vld [vmem:[%s827 + $0x78] sm:$0xff]
        %v844 = vld [vmem:[%s827 + $0x80] sm:$0xff]
        %v845 = vld [vmem:[%s827 + $0x88] sm:$0xff]
        %v846 = vld [vmem:[%s827 + $0x90] sm:$0xff]
        %v847 = vld [vmem:[%s827 + $0x98] sm:$0xff]
        %v848 = vld [vmem:[%s827 + $0xa0] sm:$0xff]
        %v849 = vld [vmem:[%s827 + $0xa8] sm:$0xff]
        %v850 = vld [vmem:[%s827 + $0xb0] sm:$0xff]
        %v851 = vld [vmem:[%s827 + $0xb8] sm:$0xff]
        %v852 = vld [vmem:[%s827 + $0xc0] sm:$0xff]
        %v853 = vld [vmem:[%s827 + $0xc8] sm:$0xff]
        %v854 = vld [vmem:[%s827 + $0xd0] sm:$0xff]
        %v855 = vld [vmem:[%s827 + $0xd8] sm:$0xff]
        %v856 = vld [vmem:[%s827 + $0xe0] sm:$0xff]
        %v857 = vld [vmem:[%s827 + $0xe8] sm:$0xff]
        %v858 = vld [vmem:[%s827 + $0xf0] sm:$0xff]
        %v859 = vld [vmem:[%s827 + $0xf8] sm:$0xff]
        %860 = vmatprep.subr.mxu0 %v859
        %861 = vmatpush1.msra.mxu0 %v858
        %862 = vmatprep.subr.mxu0 %v857
        %863 = vmatpush1.msra.mxu0 %v856
        %864 = vmatprep.subr.mxu0 %v855
        %865 = vmatpush1.msra.mxu0 %v854
        %866 = vmatprep.subr.mxu0 %v853
        %867 = vmatpush1.msra.mxu0 %v852
        %868 = vmatprep.subr.mxu0 %v851
        %869 = vmatpush1.msra.mxu0 %v850
        %870 = vmatprep.subr.mxu0 %v849
        %871 = vmatpush1.msra.mxu0 %v848
        %872 = vmatprep.subr.mxu0 %v847
        %873 = vmatpush1.msra.mxu0 %v846
        %874 = vmatprep.subr.mxu0 %v845
        %875 = vmatpush1.msra.mxu0 %v844
        %876 = vmatprep.subr.mxu0 %v843
        %877 = vmatpush1.msra.mxu0 %v842
        %878 = vmatprep.subr.mxu0 %v841
        %879 = vmatpush1.msra.mxu0 %v840
        %880 = vmatprep.subr.mxu0 %v839
        %881 = vmatpush1.msra.mxu0 %v838
        %882 = vmatprep.subr.mxu0 %v837
        %883 = vmatpush1.msra.mxu0 %v836
        %884 = vmatprep.subr.mxu0 %v835
        %885 = vmatpush1.msra.mxu0 %v834
        %886 = vmatprep.subr.mxu0 %v833
        %887 = vmatpush1.msra.mxu0 %v832
        %888 = vmatprep.subr.mxu0 %v831
        %889 = vmatpush1.msra.mxu0 %v830
        %890 = vmatprep.subr.mxu0 %v829
        %891 = vmatpush1.msra.mxu0 %v828
        %892 = vmatprep.subr.mxu0 0.0
        %893 = vmatpush2.msra.mxu0 0.0
        %894 = vmatprep.subr.mxu0 0.0
        %895 = vmatpush2.msra.mxu0 0.0
        %896 = vmatprep.subr.mxu0 0.0
        %897 = vmatpush2.msra.mxu0 0.0
        %898 = vmatprep.subr.mxu0 0.0
        %899 = vmatpush2.msra.mxu0 0.0
        %900 = vmatprep.subr.mxu0 0.0
        %901 = vmatpush2.msra.mxu0 0.0
        %902 = vmatprep.subr.mxu0 0.0
        %903 = vmatpush2.msra.mxu0 0.0
        %904 = vmatprep.subr.mxu0 0.0
        %905 = vmatpush2.msra.mxu0 0.0
        %906 = vmatprep.subr.mxu0 0.0
        %907 = vmatpush2.msra.mxu0 0.0
        %908 = vmatprep.subr.mxu0 0.0
        %909 = vmatpush2.msra.mxu0 0.0
        %910 = vmatprep.subr.mxu0 0.0
        %911 = vmatpush2.msra.mxu0 0.0
        %912 = vmatprep.subr.mxu0 0.0
        %913 = vmatpush2.msra.mxu0 0.0
        %914 = vmatprep.subr.mxu0 0.0
        %915 = vmatpush2.msra.mxu0 0.0
        %916 = vmatprep.subr.mxu0 0.0
        %917 = vmatpush2.msra.mxu0 0.0
        %918 = vmatprep.subr.mxu0 0.0
        %919 = vmatpush2.msra.mxu0 0.0
        %920 = vmatprep.subr.mxu0 0.0
        %921 = vmatpush2.msra.mxu0 0.0
        %922 = vmatprep.subr.mxu0 0.0
        %923 = vmatpush2.msra.mxu0 0.0
        %924 = vmatprep.mubr.f32.mxu0 0.0
        %925 = vmatmul.mubr.f32.gmra.mxu0 %v826
        %v926 = vpop.f32.mrf.mxu0
        %v927 = vadd.f32 0.0, %v926
        %v928 = vpop.f32.mrf.mxu0
        %v929 = vadd.f32 0.0, %v928
        %930 = vdwg.mxu0
        %v931 = vadd.f32 %v821, %v927
        %v932 = vadd.f32 %v822, %v929
        %s933 = sadd.s32 %s824, 40
        %s934 = scalar_lea.vmem %s165, %s933
        %v935 = vld [vmem:[%s934] sm:$0xf]
        %s936 = scalar_lea.vmem %s1, 1792
        %v937 = vld [vmem:[%s936] sm:$0xff]
        %v938 = vld [vmem:[%s936 + $0x8] sm:$0xff]
        %v939 = vld [vmem:[%s936 + $0x10] sm:$0xff]
        %v940 = vld [vmem:[%s936 + $0x18] sm:$0xff]
        %v941 = vld [vmem:[%s936 + $0x20] sm:$0xff]
        %v942 = vld [vmem:[%s936 + $0x28] sm:$0xff]
        %v943 = vld [vmem:[%s936 + $0x30] sm:$0xff]
        %v944 = vld [vmem:[%s936 + $0x38] sm:$0xff]
        %v945 = vld [vmem:[%s936 + $0x40] sm:$0xff]
        %v946 = vld [vmem:[%s936 + $0x48] sm:$0xff]
        %v947 = vld [vmem:[%s936 + $0x50] sm:$0xff]
        %v948 = vld [vmem:[%s936 + $0x58] sm:$0xff]
        %v949 = vld [vmem:[%s936 + $0x60] sm:$0xff]
        %v950 = vld [vmem:[%s936 + $0x68] sm:$0xff]
        %v951 = vld [vmem:[%s936 + $0x70] sm:$0xff]
        %v952 = vld [vmem:[%s936 + $0x78] sm:$0xff]
        %v953 = vld [vmem:[%s936 + $0x80] sm:$0xff]
        %v954 = vld [vmem:[%s936 + $0x88] sm:$0xff]
        %v955 = vld [vmem:[%s936 + $0x90] sm:$0xff]
        %v956 = vld [vmem:[%s936 + $0x98] sm:$0xff]
        %v957 = vld [vmem:[%s936 + $0xa0] sm:$0xff]
        %v958 = vld [vmem:[%s936 + $0xa8] sm:$0xff]
        %v959 = vld [vmem:[%s936 + $0xb0] sm:$0xff]
        %v960 = vld [vmem:[%s936 + $0xb8] sm:$0xff]
        %v961 = vld [vmem:[%s936 + $0xc0] sm:$0xff]
        %v962 = vld [vmem:[%s936 + $0xc8] sm:$0xff]
        %v963 = vld [vmem:[%s936 + $0xd0] sm:$0xff]
        %v964 = vld [vmem:[%s936 + $0xd8] sm:$0xff]
        %v965 = vld [vmem:[%s936 + $0xe0] sm:$0xff]
        %v966 = vld [vmem:[%s936 + $0xe8] sm:$0xff]
        %v967 = vld [vmem:[%s936 + $0xf0] sm:$0xff]
        %v968 = vld [vmem:[%s936 + $0xf8] sm:$0xff]
        %969 = vmatprep.subr.mxu0 %v968
        %970 = vmatpush1.msra.mxu0 %v967
        %971 = vmatprep.subr.mxu0 %v966
        %972 = vmatpush1.msra.mxu0 %v965
        %973 = vmatprep.subr.mxu0 %v964
        %974 = vmatpush1.msra.mxu0 %v963
        %975 = vmatprep.subr.mxu0 %v962
        %976 = vmatpush1.msra.mxu0 %v961
        %977 = vmatprep.subr.mxu0 %v960
        %978 = vmatpush1.msra.mxu0 %v959
        %979 = vmatprep.subr.mxu0 %v958
        %980 = vmatpush1.msra.mxu0 %v957
        %981 = vmatprep.subr.mxu0 %v956
        %982 = vmatpush1.msra.mxu0 %v955
        %983 = vmatprep.subr.mxu0 %v954
        %984 = vmatpush1.msra.mxu0 %v953
        %985 = vmatprep.subr.mxu0 %v952
        %986 = vmatpush1.msra.mxu0 %v951
        %987 = vmatprep.subr.mxu0 %v950
        %988 = vmatpush1.msra.mxu0 %v949
        %989 = vmatprep.subr.mxu0 %v948
        %990 = vmatpush1.msra.mxu0 %v947
        %991 = vmatprep.subr.mxu0 %v946
        %992 = vmatpush1.msra.mxu0 %v945
        %993 = vmatprep.subr.mxu0 %v944
        %994 = vmatpush1.msra.mxu0 %v943
        %995 = vmatprep.subr.mxu0 %v942
        %996 = vmatpush1.msra.mxu0 %v941
        %997 = vmatprep.subr.mxu0 %v940
        %998 = vmatpush1.msra.mxu0 %v939
        %999 = vmatprep.subr.mxu0 %v938
        %1000 = vmatpush1.msra.mxu0 %v937
        %1001 = vmatprep.subr.mxu0 0.0
        %1002 = vmatpush2.msra.mxu0 0.0
        %1003 = vmatprep.subr.mxu0 0.0
        %1004 = vmatpush2.msra.mxu0 0.0
        %1005 = vmatprep.subr.mxu0 0.0
        %1006 = vmatpush2.msra.mxu0 0.0
        %1007 = vmatprep.subr.mxu0 0.0
        %1008 = vmatpush2.msra.mxu0 0.0
        %1009 = vmatprep.subr.mxu0 0.0
        %1010 = vmatpush2.msra.mxu0 0.0
        %1011 = vmatprep.subr.mxu0 0.0
        %1012 = vmatpush2.msra.mxu0 0.0
        %1013 = vmatprep.subr.mxu0 0.0
        %1014 = vmatpush2.msra.mxu0 0.0
        %1015 = vmatprep.subr.mxu0 0.0
        %1016 = vmatpush2.msra.mxu0 0.0
        %1017 = vmatprep.subr.mxu0 0.0
        %1018 = vmatpush2.msra.mxu0 0.0
        %1019 = vmatprep.subr.mxu0 0.0
        %1020 = vmatpush2.msra.mxu0 0.0
        %1021 = vmatprep.subr.mxu0 0.0
        %1022 = vmatpush2.msra.mxu0 0.0
        %1023 = vmatprep.subr.mxu0 0.0
        %1024 = vmatpush2.msra.mxu0 0.0
        %1025 = vmatprep.subr.mxu0 0.0
        %1026 = vmatpush2.msra.mxu0 0.0
        %1027 = vmatprep.subr.mxu0 0.0
        %1028 = vmatpush2.msra.mxu0 0.0
        %1029 = vmatprep.subr.mxu0 0.0
        %1030 = vmatpush2.msra.mxu0 0.0
        %1031 = vmatprep.subr.mxu0 0.0
        %1032 = vmatpush2.msra.mxu0 0.0
        %1033 = vmatprep.mubr.f32.mxu0 0.0
        %1034 = vmatmul.mubr.f32.gmra.mxu0 %v935
        %v1035 = vpop.f32.mrf.mxu0
        %v1036 = vadd.f32 0.0, %v1035
        %v1037 = vpop.f32.mrf.mxu0
        %v1038 = vadd.f32 0.0, %v1037
        %1039 = vdwg.mxu0
        %v1040 = vadd.f32 %v931, %v1036
        %v1041 = vadd.f32 %v932, %v1038
        %v1042 = vld [vmem:[%s825 + $0x1] sm:$0xf]
        %s1043 = scalar_lea.vmem %s1, 2048
        %v1044 = vld [vmem:[%s1043] sm:$0xff]
        %v1045 = vld [vmem:[%s1043 + $0x8] sm:$0xff]
        %v1046 = vld [vmem:[%s1043 + $0x10] sm:$0xff]
        %v1047 = vld [vmem:[%s1043 + $0x18] sm:$0xff]
        %v1048 = vld [vmem:[%s1043 + $0x20] sm:$0xff]
        %v1049 = vld [vmem:[%s1043 + $0x28] sm:$0xff]
        %v1050 = vld [vmem:[%s1043 + $0x30] sm:$0xff]
        %v1051 = vld [vmem:[%s1043 + $0x38] sm:$0xff]
        %v1052 = vld [vmem:[%s1043 + $0x40] sm:$0xff]
        %v1053 = vld [vmem:[%s1043 + $0x48] sm:$0xff]
        %v1054 = vld [vmem:[%s1043 + $0x50] sm:$0xff]
        %v1055 = vld [vmem:[%s1043 + $0x58] sm:$0xff]
        %v1056 = vld [vmem:[%s1043 + $0x60] sm:$0xff]
        %v1057 = vld [vmem:[%s1043 + $0x68] sm:$0xff]
        %v1058 = vld [vmem:[%s1043 + $0x70] sm:$0xff]
        %v1059 = vld [vmem:[%s1043 + $0x78] sm:$0xff]
        %v1060 = vld [vmem:[%s1043 + $0x80] sm:$0xff]
        %v1061 = vld [vmem:[%s1043 + $0x88] sm:$0xff]
        %v1062 = vld [vmem:[%s1043 + $0x90] sm:$0xff]
        %v1063 = vld [vmem:[%s1043 + $0x98] sm:$0xff]
        %v1064 = vld [vmem:[%s1043 + $0xa0] sm:$0xff]
        %v1065 = vld [vmem:[%s1043 + $0xa8] sm:$0xff]
        %v1066 = vld [vmem:[%s1043 + $0xb0] sm:$0xff]
        %v1067 = vld [vmem:[%s1043 + $0xb8] sm:$0xff]
        %v1068 = vld [vmem:[%s1043 + $0xc0] sm:$0xff]
        %v1069 = vld [vmem:[%s1043 + $0xc8] sm:$0xff]
        %v1070 = vld [vmem:[%s1043 + $0xd0] sm:$0xff]
        %v1071 = vld [vmem:[%s1043 + $0xd8] sm:$0xff]
        %v1072 = vld [vmem:[%s1043 + $0xe0] sm:$0xff]
        %v1073 = vld [vmem:[%s1043 + $0xe8] sm:$0xff]
        %v1074 = vld [vmem:[%s1043 + $0xf0] sm:$0xff]
        %v1075 = vld [vmem:[%s1043 + $0xf8] sm:$0xff]
        %1076 = vmatprep.subr.mxu0 %v1075
        %1077 = vmatpush1.msra.mxu0 %v1074
        %1078 = vmatprep.subr.mxu0 %v1073
        %1079 = vmatpush1.msra.mxu0 %v1072
        %1080 = vmatprep.subr.mxu0 %v1071
        %1081 = vmatpush1.msra.mxu0 %v1070
        %1082 = vmatprep.subr.mxu0 %v1069
        %1083 = vmatpush1.msra.mxu0 %v1068
        %1084 = vmatprep.subr.mxu0 %v1067
        %1085 = vmatpush1.msra.mxu0 %v1066
        %1086 = vmatprep.subr.mxu0 %v1065
        %1087 = vmatpush1.msra.mxu0 %v1064
        %1088 = vmatprep.subr.mxu0 %v1063
        %1089 = vmatpush1.msra.mxu0 %v1062
        %1090 = vmatprep.subr.mxu0 %v1061
        %1091 = vmatpush1.msra.mxu0 %v1060
        %1092 = vmatprep.subr.mxu0 %v1059
        %1093 = vmatpush1.msra.mxu0 %v1058
        %1094 = vmatprep.subr.mxu0 %v1057
        %1095 = vmatpush1.msra.mxu0 %v1056
        %1096 = vmatprep.subr.mxu0 %v1055
        %1097 = vmatpush1.msra.mxu0 %v1054
        %1098 = vmatprep.subr.mxu0 %v1053
        %1099 = vmatpush1.msra.mxu0 %v1052
        %1100 = vmatprep.subr.mxu0 %v1051
        %1101 = vmatpush1.msra.mxu0 %v1050
        %1102 = vmatprep.subr.mxu0 %v1049
        %1103 = vmatpush1.msra.mxu0 %v1048
        %1104 = vmatprep.subr.mxu0 %v1047
        %1105 = vmatpush1.msra.mxu0 %v1046
        %1106 = vmatprep.subr.mxu0 %v1045
        %1107 = vmatpush1.msra.mxu0 %v1044
        %1108 = vmatprep.subr.mxu0 0.0
        %1109 = vmatpush2.msra.mxu0 0.0
        %1110 = vmatprep.subr.mxu0 0.0
        %1111 = vmatpush2.msra.mxu0 0.0
        %1112 = vmatprep.subr.mxu0 0.0
        %1113 = vmatpush2.msra.mxu0 0.0
        %1114 = vmatprep.subr.mxu0 0.0
        %1115 = vmatpush2.msra.mxu0 0.0
        %1116 = vmatprep.subr.mxu0 0.0
        %1117 = vmatpush2.msra.mxu0 0.0
        %1118 = vmatprep.subr.mxu0 0.0
        %1119 = vmatpush2.msra.mxu0 0.0
        %1120 = vmatprep.subr.mxu0 0.0
        %1121 = vmatpush2.msra.mxu0 0.0
        %1122 = vmatprep.subr.mxu0 0.0
        %1123 = vmatpush2.msra.mxu0 0.0
        %1124 = vmatprep.subr.mxu0 0.0
        %1125 = vmatpush2.msra.mxu0 0.0
        %1126 = vmatprep.subr.mxu0 0.0
        %1127 = vmatpush2.msra.mxu0 0.0
        %1128 = vmatprep.subr.mxu0 0.0
        %1129 = vmatpush2.msra.mxu0 0.0
        %1130 = vmatprep.subr.mxu0 0.0
        %1131 = vmatpush2.msra.mxu0 0.0
        %1132 = vmatprep.subr.mxu0 0.0
        %1133 = vmatpush2.msra.mxu0 0.0
        %1134 = vmatprep.subr.mxu0 0.0
        %1135 = vmatpush2.msra.mxu0 0.0
        %1136 = vmatprep.subr.mxu0 0.0
        %1137 = vmatpush2.msra.mxu0 0.0
        %1138 = vmatprep.subr.mxu0 0.0
        %1139 = vmatpush2.msra.mxu0 0.0
        %1140 = vmatprep.mubr.f32.mxu0 0.0
        %1141 = vmatmul.mubr.f32.gmra.mxu0 %v1042
        %v1142 = vpop.f32.mrf.mxu0
        %v1143 = vadd.f32 0.0, %v1142
        %v1144 = vpop.f32.mrf.mxu0
        %v1145 = vadd.f32 0.0, %v1144
        %1146 = vdwg.mxu0
        %v1147 = vadd.f32 %v1040, %v1143
        %v1148 = vadd.f32 %v1041, %v1145
        %v1150 = vlaneseq
        %v1151 = vshrl.u32 %v1150, 7
        %v1152 = vsub.s32 0, %v1151
        %v1153 = vrot.slane %v171, %v1152
        %v1154 = vlaneseq
        %v1155 = vshrl.u32 %v1154, 7
        %v1156 = vsub.s32 1, %v1155
        %v1157 = vrot.slane %v171, %v1156
        %v1160 = vadd.f32 %v1147, %v1153
        %v1161 = vadd.f32 %v1148, %v1157
        %v1162 = vmax.f32 %v1160, 0.0
        %v1163 = vmax.f32 %v1161, 0.0
        %v1166 = vcombine.low %v1162, %v1163
        %s1168 = smul.u32 %s173, 2
        %s1169 = smul.addr %s1168, 4
        %s1170 = scalar_lea.vmem %s170, %s1169
        %1171 = vst [vmem:[%s1170] sm:$0xff] %v1166
      $region37: #{simple_view_encoder.8} parent=31 // loop_footer
        %s177 = sadd.s32 1, %s173
      $region38: #{simple_view_encoder.8} parent=31 // loop_footer_branch
        %172 = sbr.rel target = $region34
      $region39: #{simple_view_encoder.8} parent=31 // loop_exit
        _
      %p1172 = scmp.lt.s32.totalorder %s14, 15
      %s1173 = scalar_select %p1172, %s14, 15
      %s1174 = smul.addr %s1173, 8
      %s1175 = smul.addr %s1174, 4
      %s1176 = scalar_lea.vmem %s3, %s1175
      // Predicated region
      $region40: #{simple_view_encoder.8} parent=31 // pred_check
        %p1177 = pneg %p100
      $region41: #{simple_view_encoder.8} parent=31 // pred_check_branch
        %1179 = sbr.rel (%p1177) target = $region43
      $region42: #{simple_view_encoder.8} parent=31 // pred_region
        _
      $region43: #{simple_view_encoder.8} parent=31 // pred_fallthru
        _
    $region32: #{simple_view_encoder.8} parent=5 // pred_fallthru
      _
    %p1180 = scmp.le.s32.totalorder 2, %s9
    // Predicated region
    $region44: #{simple_view_encoder.8} parent=5 // pred_check
      %p1181 = pneg %p1180
    $region45: #{simple_view_encoder.8} parent=5 // pred_check_branch
      %1183 = sbr.rel (%p1181) target = $region47
    $region46: #{simple_view_encoder.8} parent=5 // pred_region
      %s1184 = ssub.s32 %s9, 2
      // Predicated region
      $region48: #{simple_view_encoder.8} parent=46 // pred_check
        %p1185 = pneg %p106
      $region49: #{simple_view_encoder.8} parent=46 // pred_check_branch
        %1187 = sbr.rel (%p1185) target = $region51
      $region50: #{simple_view_encoder.8} parent=46 // pred_region
        %p1188 = scmp.lt.s32.totalorder %s15, 15
        %s1189 = scalar_select %p1188, %s15, 15
        %s1190 = smul.addr %s1189, 8
        %s1191 = smul.addr %s1190, 4
        %s1192 = scalar_lea.vmem %s3, %s1191
      $region51: #{simple_view_encoder.8} parent=46 // pred_fallthru
        _
    $region47: #{simple_view_encoder.8} parent=5 // pred_fallthru
      _
  $region6: #{simple_view_encoder.8} parent=0 // loop_footer
    %s13 = sadd.s32 1, %s9
  $region7: #{simple_view_encoder.8} parent=0 // loop_footer_branch
    %8 = sbr.rel target = $region3
  $region8: #{simple_view_encoder.8} parent=0 // loop_exit
    _

// kernel: simple_view_encoder.9
$region0: #{simple_view_encoder.9}
  #allocation0 [shape = 'u32[]', space=smem, size = 0x4, offset = 0x4, fixed_abs, tag = 'smem constant byte address 0x4 - core index']
  #allocation1 [shape = 'u32[144,128]{1,0:T(1,128)}', space=vmem, size = 0x12000, scoped, tag = 'internal scratch']
  %s0 = inlined_call_operand.vmem [shape: f32[16,4,4,256], index: 0, kind: input, shape index: {}]
  %s1 = inlined_call_operand.hbm [shape: f32[16,4,256], index: 1, kind: output, shape index: {}]
  %s2 = sld [smem:[#allocation0]]
  $region37: #{simple_view_encoder.9} parent=0
    _
  %s4 = ssub.s32 1, %s2
  %s5 = scalar_select 0, %s4, %s2
  $region1: #{simple_view_encoder.9} parent=0
    #allocation2 [shape = 'u8[8192]{0}', space=vmem, size = 0x2000, scoped, tag = 'output window, operand 0']
    #allocation3 [shape = 's32[2]{0}', space=sflag, size = 0x8, scoped, tag = 'scoped memory for simple_view_encoder.9']
    %6 = vsyncpa [#allocation3], 0
    %s7 = scalar_lea.sflag [#allocation3], 1
    %8 = vsyncpa %s7, 0
    loop: start=0, step=1, limit=18
    $region2: #{simple_view_encoder.9} parent=1 // loop_pre_header
      _
    $region3: #{simple_view_encoder.9} parent=1 // loop_header
      %s10 = sphi 0, %s14
      %p11 = scmp.ge.s32.totalorder %s10, 18
      %s20 = sphi 0, %s22
      %s23 = sphi 0, %s20
      %s24 = sphi 0, %s23
      %s40 = sphi 0, %s24
      %s46 = sphi 0, %s48
      %s49 = sphi 0, %s46
      %s50 = sphi 0, %s49
      %s66 = sphi 0, %s50
    $region4: #{simple_view_encoder.9} parent=1 // loop_header_branch
      %13 = sbr.rel (%p11) target = $region8
    $region5: #{simple_view_encoder.9} parent=1 // loop_body
      %s15 = ssub.s32 %s10, 1
      %s16 = ssub.s32 %s10, 2
      %s17 = sadd.s32 %s10, 1
      %s18 = ssub.s32 %s10, %s17
      %p19 = scmp.eq.s32.totalorder %s18, 0
      %s21 = sadd.s32 %s20, 1
      %s22 = scalar_select %p19, %s20, %s21
      %p25 = pneg %p19
      %p26 = scmp.eq.s32.totalorder %s10, 15
      %p27 = por %p25, %p26
      %p28 = scmp.ne.s32.totalorder %s20, %s23
      %p29 = scmp.eq.s32.totalorder %s10, 0
      %p30 = por %p28, %p29
      %p31 = scmp.ne.s32.totalorder %s20, %s23
      %p32 = scmp.eq.s32.totalorder %s15, 15
      %p33 = por %p31, %p32
      %p34 = scmp.ne.s32.totalorder %s23, %s24
      %p35 = scmp.eq.s32.totalorder %s15, 0
      %p36 = por %p34, %p35
      %p37 = scmp.ne.s32.totalorder %s23, %s24
      %p38 = scmp.eq.s32.totalorder %s16, 15
      %p39 = por %p37, %p38
      %p41 = scmp.ne.s32.totalorder %s24, %s40
      %p42 = scmp.eq.s32.totalorder %s16, 0
      %p43 = por %p41, %p42
      %s44 = ssub.s32 %s10, %s17
      %p45 = scmp.eq.s32.totalorder %s44, 0
      %s47 = sadd.s32 %s46, 1
      %s48 = scalar_select %p45, %s46, %s47
      %p51 = pneg %p45
      %p52 = scmp.eq.s32.totalorder %s10, 15
      %p53 = por %p51, %p52
      %p54 = scmp.ne.s32.totalorder %s46, %s49
      %p55 = scmp.eq.s32.totalorder %s10, 0
      %p56 = por %p54, %p55
      %p57 = scmp.ne.s32.totalorder %s46, %s49
      %p58 = scmp.eq.s32.totalorder %s15, 15
      %p59 = por %p57, %p58
      %p60 = scmp.ne.s32.totalorder %s49, %s50
      %p61 = scmp.eq.s32.totalorder %s15, 0
      %p62 = por %p60, %p61
      %p63 = scmp.ne.s32.totalorder %s49, %s50
      %p64 = scmp.eq.s32.totalorder %s16, 15
      %p65 = por %p63, %p64
      %p67 = scmp.ne.s32.totalorder %s50, %s66
      %p68 = scmp.eq.s32.totalorder %s16, 0
      %p69 = por %p67, %p68
      %p70 = scmp.le.s32.totalorder 1, %s10
      %p71 = scmp.lt.s32.totalorder %s10, 17
      %p72 = pnand %p70, %p71
      %p73 = pneg %p72
      // Predicated region
      $region9: #{simple_view_encoder.9} parent=5 // pred_check
        _
      $region10: #{simple_view_encoder.9} parent=5 // pred_check_branch
        %75 = sbr.rel (%p72) target = $region12
      $region11: #{simple_view_encoder.9} parent=5 // pred_region
        %s76 = ssub.s32 %s10, 1
      $region12: #{simple_view_encoder.9} parent=5 // pred_fallthru
        _
      %p77 = scmp.lt.s32.totalorder %s10, 16
      // Predicated region
      $region13: #{simple_view_encoder.9} parent=5 // pred_check
        %p78 = pneg %p77
      $region14: #{simple_view_encoder.9} parent=5 // pred_check_branch
        %80 = sbr.rel (%p78) target = $region16
      $region15: #{simple_view_encoder.9} parent=5 // pred_region
        // Predicated region
        $region17: #{simple_view_encoder.9} parent=15 // pred_check
          %p81 = pneg %p30
        $region18: #{simple_view_encoder.9} parent=15 // pred_check_branch
          %83 = sbr.rel (%p81) target = $region20
        $region19: #{simple_view_encoder.9} parent=15 // pred_region
          %p84 = scmp.lt.s32.totalorder %s10, 15
          %s85 = scalar_select %p84, %s10, 15
          %s86 = smul.addr %s85, 8
          %s87 = smul.addr %s86, 4
          %s88 = scalar_lea.vmem %s0, %s87
        $region20: #{simple_view_encoder.9} parent=15 // pred_fallthru
          _
      $region16: #{simple_view_encoder.9} parent=5 // pred_fallthru
        _
      %p89 = scmp.le.s32.totalorder 1, %s10
      %p90 = scmp.lt.s32.totalorder %s10, 17
      %p91 = pnand %p89, %p90
      %p92 = pneg %p91
      // Predicated region
      $region21: #{simple_view_encoder.9} parent=5 // pred_check
        _
      $region22: #{simple_view_encoder.9} parent=5 // pred_check_branch
        %94 = sbr.rel (%p91) target = $region24
      $region23: #{simple_view_encoder.9} parent=5 // pred_region
        %s95 = ssub.s32 %s10, 1
        %p96 = scmp.lt.s32.totalorder %s15, 15
        %s97 = scalar_select %p96, %s15, 15
        %s98 = smul.addr %s97, 8
        %s99 = smul.addr %s98, 4
        %s100 = scalar_lea.vmem %s0, %s99
        %p101 = pneg %p36
        %p102 = pneg %p33
        %p103 = pneg %p62
        %p104 = pneg %p59
        %s105 = sand.u32 %s49, 1
        %s106 = scalar_lea.sflag [#allocation3], %s105
        %s107 = sand.u32 %s49, 1
        %s108 = smul.addr %s107, 8
        %s109 = scalar_lea.vmem [#allocation2], %s108
        %p110 = scmp.lt.s32.totalorder %s15, 15
        %s111 = scalar_select %p110, %s15, 15
        %s112 = smul.addr %s111, 8
        %s113 = smul.addr %s112, 4
        %s114 = scalar_lea.vmem %s0, %s113
        %v115 = vld [vmem:[%s114] sm:$0x33]
        %v116 = vld [vmem:[%s114 + $0x8] sm:$0x33]
        %v119 = vcombine.high %v115, %v115
        %v120 = vcombine.high %v116, %v116
        %vm123 = vcmask 1041408
        %v124 = vsel %vm123, %v115, 0.0
        %v125 = vsel %vm123, %v116, 0.0
        %v126 = vadd.f32 %v124, %v125
        %v127 = vsel %vm123, %v119, 0.0
        %v128 = vsel %vm123, %v120, 0.0
        %v129 = vadd.f32 %v127, %v128
        %v130 = vsel %vm123, %v126, 0.0
        %v131 = vrot.slane %v130, 4
        %v132 = vadd.f32 %v130, %v131
        %v133 = vrot.slane %v132, 2
        %v134 = vadd.f32 %v132, %v133
        %v135 = vrot.slane %v134, 1
        %v136 = vadd.f32 %v134, %v135
        %v137 = vsel %vm123, %v129, 0.0
        %v138 = vrot.slane %v137, 4
        %v139 = vadd.f32 %v137, %v138
        %v140 = vrot.slane %v139, 2
        %v141 = vadd.f32 %v139, %v140
        %v142 = vrot.slane %v141, 1
        %v143 = vadd.f32 %v141, %v142
        %v144 = vmul.f32 %v136, 0.25
        %v145 = vmul.f32 %v143, 0.25
        %v148 = vcombine.low %v144, %v145
        %v150 = vunpack.c.l.s4 1966171168
        %v151 = vunpack.c.0.s8 %v150
        %v152 = vlaneseq
        %v153 = vshrl.u32 %v152, 7
        %v154 = vsub.s32 %v151, %v153
        %v155 = vrot.slane %v148, %v154
        %v157 = vunpack.c.l.s4 1966171168
        %v158 = vunpack.c.0.s8 %v157
        %v159 = vlaneseq
        %v160 = vshrl.u32 %v159, 7
        %v161 = vsub.s32 %v158, %v160
        %v162 = vrot.slane %v155, %v161
        %v164 = vlaneseq
        %vm165 = vcmp.ge.s32.totalorder %v164, 0
        %vm166 = vcmp.lt.s32.totalorder %v164, 256
        %vm167 = vmand %vm165, %vm166
        %168 = vst.msk [vmem:[%s109] ss:$4 sm:$0x3] %vm167, %v162
        %v169 = vld [vmem:[%s114] sm:$0xcc]
        %v170 = vld [vmem:[%s114 + $0x8] sm:$0xcc]
        %v173 = vcombine.high %v169, %v169
        %v174 = vcombine.high %v170, %v170
        %vm177 = vcmask 1043458
        %v178 = vsel %vm177, %v169, 0.0
        %v179 = vsel %vm177, %v170, 0.0
        %v180 = vadd.f32 %v178, %v179
        %v181 = vsel %vm177, %v173, 0.0
        %v182 = vsel %vm177, %v174, 0.0
        %v183 = vadd.f32 %v181, %v182
        %v186 = vrot.slane %v180, 2
        %v187 = vrot.slane %v183, 2
        %v190 = vsel %vm123, %v186, 0.0
        %v191 = vrot.slane %v190, 4
        %v192 = vadd.f32 %v190, %v191
        %v193 = vrot.slane %v192, 2
        %v194 = vadd.f32 %v192, %v193
        %v195 = vrot.slane %v194, 1
        %v196 = vadd.f32 %v194, %v195
        %v197 = vsel %vm123, %v187, 0.0
        %v198 = vrot.slane %v197, 4
        %v199 = vadd.f32 %v197, %v198
        %v200 = vrot.slane %v199, 2
        %v201 = vadd.f32 %v199, %v200
        %v202 = vrot.slane %v201, 1
        %v203 = vadd.f32 %v201, %v202
        %v204 = vmul.f32 %v196, 0.25
        %v205 = vmul.f32 %v203, 0.25
        %v208 = vcombine.low %v204, %v205
        %v210 = vunpack.c.l.s4 1966171168
        %v211 = vunpack.c.0.s8 %v210
        %v212 = vlaneseq
        %v213 = vshrl.u32 %v212, 7
        %v214 = vsub.s32 %v211, %v213
        %v215 = vrot.slane %v208, %v214
        %v217 = vunpack.c.l.s4 1966171168
        %v218 = vunpack.c.0.s8 %v217
        %v219 = vlaneseq
        %v220 = vshrl.u32 %v219, 7
        %v221 = vsub.s32 %v218, %v220
        %v222 = vrot.slane %v215, %v221
        %s224 = scalar_lea.vmem %s109, 1 [#allocation2]
        %225 = vst.msk [vmem:[%s224] ss:$4 sm:$0x3] %vm167, %v222
        %s226 = scalar_lea.vmem %s114, 16
        %v227 = vld [vmem:[%s226] sm:$0x33]
        %v228 = vld [vmem:[%s226 + $0x8] sm:$0x33]
        %v231 = vcombine.high %v227, %v227
        %v232 = vcombine.high %v228, %v228
        %v235 = vsel %vm123, %v227, 0.0
        %v236 = vsel %vm123, %v228, 0.0
        %v237 = vadd.f32 %v235, %v236
        %v238 = vsel %vm123, %v231, 0.0
        %v239 = vsel %vm123, %v232, 0.0
        %v240 = vadd.f32 %v238, %v239
        %v241 = vsel %vm123, %v237, 0.0
        %v242 = vrot.slane %v241, 4
        %v243 = vadd.f32 %v241, %v242
        %v244 = vrot.slane %v243, 2
        %v245 = vadd.f32 %v243, %v244
        %v246 = vrot.slane %v245, 1
        %v247 = vadd.f32 %v245, %v246
        %v248 = vsel %vm123, %v240, 0.0
        %v249 = vrot.slane %v248, 4
        %v250 = vadd.f32 %v248, %v249
        %v251 = vrot.slane %v250, 2
        %v252 = vadd.f32 %v250, %v251
        %v253 = vrot.slane %v252, 1
        %v254 = vadd.f32 %v252, %v253
        %v255 = vmul.f32 %v247, 0.25
        %v256 = vmul.f32 %v254, 0.25
        %v259 = vcombine.low %v255, %v256
        %v261 = vunpack.c.l.s4 1966171168
        %v262 = vunpack.c.0.s8 %v261
        %v263 = vlaneseq
        %v264 = vshrl.u32 %v263, 7
        %v265 = vsub.s32 %v262, %v264
        %v266 = vrot.slane %v259, %v265
        %v268 = vunpack.c.l.s4 1966171168
        %v269 = vunpack.c.0.s8 %v268
        %v270 = vlaneseq
        %v271 = vshrl.u32 %v270, 7
        %v272 = vsub.s32 %v269, %v271
        %v273 = vrot.slane %v266, %v272
        %s275 = scalar_lea.vmem %s109, 2 [#allocation2]
        %276 = vst.msk [vmem:[%s275] ss:$4 sm:$0x3] %vm167, %v273
        %v277 = vld [vmem:[%s226] sm:$0xcc]
        %v278 = vld [vmem:[%s226 + $0x8] sm:$0xcc]
        %v281 = vcombine.high %v277, %v277
        %v282 = vcombine.high %v278, %v278
        %v285 = vsel %vm177, %v277, 0.0
        %v286 = vsel %vm177, %v278, 0.0
        %v287 = vadd.f32 %v285, %v286
        %v288 = vsel %vm177, %v281, 0.0
        %v289 = vsel %vm177, %v282, 0.0
        %v290 = vadd.f32 %v288, %v289
        %v293 = vrot.slane %v287, 2
        %v294 = vrot.slane %v290, 2
        %v297 = vsel %vm123, %v293, 0.0
        %v298 = vrot.slane %v297, 4
        %v299 = vadd.f32 %v297, %v298
        %v300 = vrot.slane %v299, 2
        %v301 = vadd.f32 %v299, %v300
        %v302 = vrot.slane %v301, 1
        %v303 = vadd.f32 %v301, %v302
        %v304 = vsel %vm123, %v294, 0.0
        %v305 = vrot.slane %v304, 4
        %v306 = vadd.f32 %v304, %v305
        %v307 = vrot.slane %v306, 2
        %v308 = vadd.f32 %v306, %v307
        %v309 = vrot.slane %v308, 1
        %v310 = vadd.f32 %v308, %v309
        %v311 = vmul.f32 %v303, 0.25
        %v312 = vmul.f32 %v310, 0.25
        %v315 = vcombine.low %v311, %v312
        %v317 = vunpack.c.l.s4 1966171168
        %v318 = vunpack.c.0.s8 %v317
        %v319 = vlaneseq
        %v320 = vshrl.u32 %v319, 7
        %v321 = vsub.s32 %v318, %v320
        %v322 = vrot.slane %v315, %v321
        %v324 = vunpack.c.l.s4 1966171168
        %v325 = vunpack.c.0.s8 %v324
        %v326 = vlaneseq
        %v327 = vshrl.u32 %v326, 7
        %v328 = vsub.s32 %v325, %v327
        %v329 = vrot.slane %v322, %v328
        %s331 = scalar_lea.vmem %s109, 3 [#allocation2]
        %332 = vst.msk [vmem:[%s331] ss:$4 sm:$0x3] %vm167, %v329
        %s333 = sand.u32 %s49, 1
        %s334 = scalar_lea.sflag [#allocation3], %s333
        %s335 = sand.u32 %s49, 1
        %s336 = smul.addr %s335, 8
        %s337 = scalar_lea.vmem [#allocation2], %s336
        // Predicated region
        $region25: #{simple_view_encoder.9} parent=23 // pred_check
          %p338 = pneg %p59
        $region26: #{simple_view_encoder.9} parent=23 // pred_check_branch
          %340 = sbr.rel (%p338) target = $region28
        $region27: #{simple_view_encoder.9} parent=23 // pred_region
          %s342 = ssub.s32 128, 128
          %343 = vsyncadd %s334, %s342
          %s344 = smul.addr %s15, 2
          %s345 = smul.addr %s344, 64
          %s346 = scalar_lea.hbm %s1, %s345
          %s348 = sshll.u32 %s337, 4
          %s349 = int_to_ptr.vmem [resolvable:$true] %s348
          %351 = dma.vmem_to_hbm [thread:$0]  %s349, 128, %s346, %s334
        $region28: #{simple_view_encoder.9} parent=23 // pred_fallthru
          _
      $region24: #{simple_view_encoder.9} parent=5 // pred_fallthru
        _
      %p352 = scmp.le.s32.totalorder 2, %s10
      // Predicated region
      $region29: #{simple_view_encoder.9} parent=5 // pred_check
        %p353 = pneg %p352
      $region30: #{simple_view_encoder.9} parent=5 // pred_check_branch
        %355 = sbr.rel (%p353) target = $region32
      $region31: #{simple_view_encoder.9} parent=5 // pred_region
        %s356 = ssub.s32 %s10, 2
        // Predicated region
        $region33: #{simple_view_encoder.9} parent=31 // pred_check
          %p357 = pneg %p65
        $region34: #{simple_view_encoder.9} parent=31 // pred_check_branch
          %359 = sbr.rel (%p357) target = $region36
        $region35: #{simple_view_encoder.9} parent=31 // pred_region
          %s360 = sand.u32 %s50, 1
          %s361 = scalar_lea.sflag [#allocation3], %s360
          %s362 = sand.u32 %s50, 1
          %s363 = smul.addr %s362, 8
          %s364 = scalar_lea.vmem [#allocation2], %s363
          %365 = dma.done %s361, 128
        $region36: #{simple_view_encoder.9} parent=31 // pred_fallthru
          _
      $region32: #{simple_view_encoder.9} parent=5 // pred_fallthru
        _
    $region6: #{simple_view_encoder.9} parent=1 // loop_footer
      %s14 = sadd.s32 1, %s10
    $region7: #{simple_view_encoder.9} parent=1 // loop_footer_branch
      %9 = sbr.rel target = $region3
    $region8: #{simple_view_encoder.9} parent=1 // loop_exit
      _
    %366 = vsyncpa [#allocation3], 1
    %s367 = scalar_lea.sflag [#allocation3], 1
    %368 = vsyncpa %s367, 1

</llo_original>
